<compile_context>
chip_gen: v6e
topology: v6e:2x2x1
jax: 0.10.0
libtpu: 0.0.40
codegen_flags: <defaults>
</compile_context>

<pallas_src>
import jax
import jax.numpy as jnp
from jax import lax
from jax.experimental import pallas as pl
from jax.experimental.pallas import tpu as pltpu

EPS = 1e-5
# Set to jnp.bfloat16 on v6e/v7x for ~2x MXU throughput / half the operand
# footprint (keep f32 accumulation via preferred_element_type either way).
MXU_DTYPE = jnp.float32


# ---------------------------------------------------------------------------
# In-kernel helpers
# ---------------------------------------------------------------------------
def _conv3x3_im2col(src_ref, w_ref, H, W, C):
    """3x3 'same' conv on one padded sample as a single K=9*C MXU matmul.

    src_ref: (H+2, W+2, C) padded input (VMEM ref), w_ref: (9*C, Cout).
    Returns (H*W, Cout) float32.
    """
    taps = []
    for dy in range(3):
        for dx in range(3):
            taps.append(src_ref[dy:dy + H, dx:dx + W, :].reshape(H * W, C))
    patches = jnp.concatenate(taps, axis=-1)                 # (H*W, 9*C)
    return jnp.dot(patches.astype(MXU_DTYPE),
                   w_ref[...].astype(MXU_DTYPE),
                   preferred_element_type=jnp.float32)


def _emit_stats(y, st_ref):
    # Single-pass partial stats (sum, sum of squares) in f32.
    st_ref[0:1, :] = jnp.sum(y, axis=0, keepdims=True)
    st_ref[1:2, :] = jnp.sum(y * y, axis=0, keepdims=True)


# ---------------------------------------------------------------------------
# Kernels (grid over batch; one sample per grid step)
# ---------------------------------------------------------------------------
def _conv1_kernel(xp_ref, w_ref, y_ref, st_ref):
    """conv1 on a pre-padded sample + per-tile partial BN stats."""
    Hp, Wp, Cin = xp_ref.shape
    H, W = Hp - 2, Wp - 2
    y = _conv3x3_im2col(xp_ref, w_ref, H, W, Cin)            # (H*W, Cout) f32
    y_ref[...] = y
    _emit_stats(y, st_ref)


def _bn_relu_conv2_kernel(y1_ref, s_ref, t_ref, w_ref, y2_ref, st_ref, pad_ref):
    """BN1+ReLU (single fused affine) fused with conv2 + partial BN2 stats."""
    Hp, Wp, C = pad_ref.shape
    H, W = Hp - 2, Wp - 2
    # Fused BN+ReLU affine on the raw conv1 output tile.
    act = jnp.maximum(y1_ref[...] * s_ref[...] + t_ref[...], 0.0)   # (H*W, C)
    # Zero only the 1-element halo; write the interior exactly once.
    pad_ref[0:1, :, :] = jnp.zeros((1, Wp, C), jnp.float32)
    pad_ref[Hp - 1:Hp, :, :] = jnp.zeros((1, Wp, C), jnp.float32)
    pad_ref[:, 0:1, :] = jnp.zeros((Hp, 1, C), jnp.float32)
    pad_ref[:, Wp - 1:Wp, :] = jnp.zeros((Hp, 1, C), jnp.float32)
    pad_ref[1:H + 1, 1:W + 1, :] = act.reshape(H, W, C)
    # conv2 as one K=9*C matmul.
    y = _conv3x3_im2col(pad_ref, w_ref, H, W, C)             # (H*W, Cout) f32
    y2_ref[...] = y
    _emit_stats(y, st_ref)


def _bn_relu_kernel(y_ref, s_ref, t_ref, o_ref):
    """Final BN2+ReLU, lane-dense: blocks are (H, W*Cout) (128 lanes here)."""
    o_ref[...] = jnp.maximum(y_ref[...] * s_ref[...] + t_ref[...], 0.0)


# ---------------------------------------------------------------------------
# Host-side glue
# ---------------------------------------------------------------------------
def _affine_from_stats(stats, gamma, beta, count):
    """Reduce per-tile (sum, sumsq) -> training-mode BN folded affine."""
    total = jnp.sum(stats, axis=0)                   # (2, C)
    mean = total[0] / count
    var = jnp.maximum(total[1] / count - mean * mean, 0.0)  # biased variance
    scale = gamma * lax.rsqrt(var + EPS)
    shift = beta - mean * scale
    return scale, shift


def double_conv_pallas(x_nhwc, w1_mat, w2_mat, g1, b1, g2, b2):
    N, H, W, Cin = x_nhwc.shape
    Cout = w1_mat.shape[1]
    count = float(N * H * W)
    WC = W * Cout

    cp = pltpu.CompilerParams(
        dimension_semantics=("parallel",),
        vmem_limit_bytes=32 * 1024 * 1024,
    )

    # Pad the network input once, outside the kernel (no in-kernel full
    # zero + rewrite of a padded scratch for conv1).
    xpad = jnp.pad(x_nhwc, ((0, 0), (1, 1), (1, 1), (0, 0)))

    # ---- pass 1: conv1 tiles + partial stats -------------------------------
    y1, st1 = pl.pallas_call(
        _conv1_kernel,
        grid=(N,),
        in_specs=[
            pl.BlockSpec((None, H + 2, W + 2, Cin), lambda n: (n, 0, 0, 0)),
            pl.BlockSpec((9 * Cin, Cout), lambda n: (0, 0)),
        ],
        out_specs=(
            pl.BlockSpec((None, H * W, Cout), lambda n: (n, 0, 0)),
            pl.BlockSpec((None, 2, Cout), lambda n: (n, 0, 0)),
        ),
        out_shape=(
            jax.ShapeDtypeStruct((N, H * W, Cout), jnp.float32),
            jax.ShapeDtypeStruct((N, 2, Cout), jnp.float32),
        ),
        compiler_params=cp,
    )(xpad, w1_mat)

    s1, t1 = _affine_from_stats(st1, g1, b1, count)   # tiny (Cout,) finalize

    # ---- pass 2: BN1+ReLU fused into conv2 + partial stats -----------------
    y2, st2 = pl.pallas_call(
        _bn_relu_conv2_kernel,
        grid=(N,),
        in_specs=[
            pl.BlockSpec((None, H * W, Cout), lambda n: (n, 0, 0)),
            pl.BlockSpec((1, Cout), lambda n: (0, 0)),
            pl.BlockSpec((1, Cout), lambda n: (0, 0)),
            pl.BlockSpec((9 * Cout, Cout), lambda n: (0, 0)),
        ],
        out_specs=(
            pl.BlockSpec((None, H * W, Cout), lambda n: (n, 0, 0)),
            pl.BlockSpec((None, 2, Cout), lambda n: (n, 0, 0)),
        ),
        out_shape=(
            jax.ShapeDtypeStruct((N, H * W, Cout), jnp.float32),
            jax.ShapeDtypeStruct((N, 2, Cout), jnp.float32),
        ),
        scratch_shapes=[pltpu.VMEM((H + 2, W + 2, Cout), jnp.float32)],
        compiler_params=cp,
    )(y1, s1.reshape(1, Cout), t1.reshape(1, Cout), w2_mat)

    s2, t2 = _affine_from_stats(st2, g2, b2, count)

    # ---- pass 3: BN2+ReLU, lane-dense (W folded into the lane dim) ---------
    out = pl.pallas_call(
        _bn_relu_kernel,
        grid=(N,),
        in_specs=[
            pl.BlockSpec((None, H, WC), lambda n: (n, 0, 0)),
            pl.BlockSpec((1, WC), lambda n: (0, 0)),
            pl.BlockSpec((1, WC), lambda n: (0, 0)),
        ],
        out_specs=pl.BlockSpec((None, H, WC), lambda n: (n, 0, 0)),
        out_shape=jax.ShapeDtypeStruct((N, H, WC), jnp.float32),
        compiler_params=cp,
    )(y2.reshape(N, H, WC),                       # free: same bytes as (N,H*W,C)
      jnp.tile(s2, W).reshape(1, WC),
      jnp.tile(t2, W).reshape(1, WC))

    return out.reshape(N, H, W, Cout)


def convolution_forward(x_nchw, w1_oihw, w2_oihw, g1, b1, g2, b2):
    """Wrapper matching the PyTorch module's NCHW interface."""
    x_nhwc = jnp.transpose(x_nchw, (0, 2, 3, 1))
    # OIHW -> (HWI)O im2col weight matrices, row index = (dy*3+dx)*Cin + cin.
    w1_mat = jnp.transpose(w1_oihw, (2, 3, 1, 0)).reshape(-1, w1_oihw.shape[0])
    w2_mat = jnp.transpose(w2_oihw, (2, 3, 1, 0)).reshape(-1, w2_oihw.shape[0])
    out_nhwc = double_conv_pallas(x_nhwc, w1_mat, w2_mat, g1, b1, g2, b2)
    return jnp.transpose(out_nhwc, (0, 3, 1, 2))


# ---------------------------------------------------------------------------
# Pure-JAX reference (NCHW), matching torch training-mode semantics
# ---------------------------------------------------------------------------
def _reference_forward(x, w1, w2, g1, b1, g2, b2):
    def conv(x, w):
        return lax.conv_general_dilated(
            x, w, window_strides=(1, 1), padding=((1, 1), (1, 1)),
            dimension_numbers=("NCHW", "OIHW", "NCHW"))

    def bn_relu(y, g, b):
        mean = jnp.mean(y, axis=(0, 2, 3), keepdims=True)
        var = jnp.mean((y - mean) ** 2, axis=(0, 2, 3), keepdims=True)
        yhat = (y - mean) / jnp.sqrt(var + EPS)
        return jnp.maximum(yhat * g.reshape(1, -1, 1, 1) + b.reshape(1, -1, 1, 1), 0.0)

    y = bn_relu(conv(x, w1), g1, b1)
    return bn_relu(conv(y, w2), g2, b2)


if __name__ == "__main__":
    N, Cin, Cout, H, W = 2, 4, 8, 16, 16
    key = jax.random.PRNGKey(0)
    k = jax.random.split(key, 7)
    x = jax.random.normal(k[0], (N, Cin, H, W), jnp.float32)
    w1 = jax.random.normal(k[1], (Cout, Cin, 3, 3), jnp.float32) * 0.2
    w2 = jax.random.normal(k[2], (Cout, Cout, 3, 3), jnp.float32) * 0.2
    g1 = 1.0 + 0.1 * jax.random.normal(k[3], (Cout,), jnp.float32)
    b1 = 0.1 * jax.random.normal(k[4], (Cout,), jnp.float32)
    g2 = 1.0 + 0.1 * jax.random.normal(k[5], (Cout,), jnp.float32)
    b2 = 0.1 * jax.random.normal(k[6], (Cout,), jnp.float32)

    fwd = jax.jit(convolution_forward)
    out = fwd(x, w1, w2, g1, b1, g2, b2)
    jax.block_until_ready(out)

    ref = _reference_forward(x, w1, w2, g1, b1, g2, b2)
    assert out.shape == (N, Cout, H, W)
    err = float(jnp.max(jnp.abs(out - ref)))
    assert err < 1e-3, err
    print("KERNEL_OK")
</pallas_src>

<mosaic_0001>
module attributes {stable_mosaic.version = 11 : i64} {
  func.func @_conv1_kernel(%arg0: i32, %arg1: memref<1x18x18x4xf32, #tpu.memory_space<vmem>>, %arg2: memref<36x8xf32, #tpu.memory_space<vmem>>, %arg3: memref<1x256x8xf32, #tpu.memory_space<vmem>>, %arg4: memref<1x2x8xf32, #tpu.memory_space<vmem>>) attributes {dimension_semantics = [#tpu.dimension_semantics<parallel>], iteration_bounds = array<i64: 2>, scalar_prefetch = 0 : i64, scratch_operands = 0 : i64, tpu.core_type = #tpu.core_type<tc>, window_params = [{transform_indices = @transform_0, window_bounds = array<i64: 1, 18, 18, 4>}, {pipeline_mode = #tpu.pipeline_mode<synchronous>, transform_indices = @transform_1, window_bounds = array<i64: 36, 8>}, {transform_indices = @transform_2, window_bounds = array<i64: 1, 256, 8>}, {transform_indices = @transform_3, window_bounds = array<i64: 1, 2, 8>}]} {
    %c0 = arith.constant 0 : index
    %c0_0 = arith.constant 0 : index
    %c0_1 = arith.constant 0 : index
    %c0_2 = arith.constant 0 : index
    %0 = vector.load %arg1[%c0, %c0_0, %c0_1, %c0_2] : memref<1x18x18x4xf32, #tpu.memory_space<vmem>>, vector<1x16x16x4xf32>
    %1 = vector.shape_cast %0 : vector<1x16x16x4xf32> to vector<16x16x4xf32>
    %2 = vector.shape_cast %1 : vector<16x16x4xf32> to vector<256x4xf32>
    %c0_3 = arith.constant 0 : index
    %c0_4 = arith.constant 0 : index
    %c1 = arith.constant 1 : index
    %c0_5 = arith.constant 0 : index
    %3 = vector.load %arg1[%c0_3, %c0_4, %c1, %c0_5] : memref<1x18x18x4xf32, #tpu.memory_space<vmem>>, vector<1x16x16x4xf32>
    %4 = vector.shape_cast %3 : vector<1x16x16x4xf32> to vector<16x16x4xf32>
    %5 = vector.shape_cast %4 : vector<16x16x4xf32> to vector<256x4xf32>
    %c0_6 = arith.constant 0 : index
    %c0_7 = arith.constant 0 : index
    %c2 = arith.constant 2 : index
    %c0_8 = arith.constant 0 : index
    %6 = vector.load %arg1[%c0_6, %c0_7, %c2, %c0_8] : memref<1x18x18x4xf32, #tpu.memory_space<vmem>>, vector<1x16x16x4xf32>
    %7 = vector.shape_cast %6 : vector<1x16x16x4xf32> to vector<16x16x4xf32>
    %8 = vector.shape_cast %7 : vector<16x16x4xf32> to vector<256x4xf32>
    %c0_9 = arith.constant 0 : index
    %c1_10 = arith.constant 1 : index
    %c0_11 = arith.constant 0 : index
    %c0_12 = arith.constant 0 : index
    %9 = vector.load %arg1[%c0_9, %c1_10, %c0_11, %c0_12] : memref<1x18x18x4xf32, #tpu.memory_space<vmem>>, vector<1x16x16x4xf32>
    %10 = vector.shape_cast %9 : vector<1x16x16x4xf32> to vector<16x16x4xf32>
    %11 = vector.shape_cast %10 : vector<16x16x4xf32> to vector<256x4xf32>
    %c0_13 = arith.constant 0 : index
    %c1_14 = arith.constant 1 : index
    %c1_15 = arith.constant 1 : index
    %c0_16 = arith.constant 0 : index
    %12 = vector.load %arg1[%c0_13, %c1_14, %c1_15, %c0_16] : memref<1x18x18x4xf32, #tpu.memory_space<vmem>>, vector<1x16x16x4xf32>
    %13 = vector.shape_cast %12 : vector<1x16x16x4xf32> to vector<16x16x4xf32>
    %14 = vector.shape_cast %13 : vector<16x16x4xf32> to vector<256x4xf32>
    %c0_17 = arith.constant 0 : index
    %c1_18 = arith.constant 1 : index
    %c2_19 = arith.constant 2 : index
    %c0_20 = arith.constant 0 : index
    %15 = vector.load %arg1[%c0_17, %c1_18, %c2_19, %c0_20] : memref<1x18x18x4xf32, #tpu.memory_space<vmem>>, vector<1x16x16x4xf32>
    %16 = vector.shape_cast %15 : vector<1x16x16x4xf32> to vector<16x16x4xf32>
    %17 = vector.shape_cast %16 : vector<16x16x4xf32> to vector<256x4xf32>
    %c0_21 = arith.constant 0 : index
    %c2_22 = arith.constant 2 : index
    %c0_23 = arith.constant 0 : index
    %c0_24 = arith.constant 0 : index
    %18 = vector.load %arg1[%c0_21, %c2_22, %c0_23, %c0_24] : memref<1x18x18x4xf32, #tpu.memory_space<vmem>>, vector<1x16x16x4xf32>
    %19 = vector.shape_cast %18 : vector<1x16x16x4xf32> to vector<16x16x4xf32>
    %20 = vector.shape_cast %19 : vector<16x16x4xf32> to vector<256x4xf32>
    %c0_25 = arith.constant 0 : index
    %c2_26 = arith.constant 2 : index
    %c1_27 = arith.constant 1 : index
    %c0_28 = arith.constant 0 : index
    %21 = vector.load %arg1[%c0_25, %c2_26, %c1_27, %c0_28] : memref<1x18x18x4xf32, #tpu.memory_space<vmem>>, vector<1x16x16x4xf32>
    %22 = vector.shape_cast %21 : vector<1x16x16x4xf32> to vector<16x16x4xf32>
    %23 = vector.shape_cast %22 : vector<16x16x4xf32> to vector<256x4xf32>
    %c0_29 = arith.constant 0 : index
    %c2_30 = arith.constant 2 : index
    %c2_31 = arith.constant 2 : index
    %c0_32 = arith.constant 0 : index
    %24 = vector.load %arg1[%c0_29, %c2_30, %c2_31, %c0_32] : memref<1x18x18x4xf32, #tpu.memory_space<vmem>>, vector<1x16x16x4xf32>
    %25 = vector.shape_cast %24 : vector<1x16x16x4xf32> to vector<16x16x4xf32>
    %26 = vector.shape_cast %25 : vector<16x16x4xf32> to vector<256x4xf32>
    %27 = tpu.concatenate %2, %5, %8, %11, %14, %17, %20, %23, %26 in 1 : vector<256x4xf32>, vector<256x4xf32>, vector<256x4xf32>, vector<256x4xf32>, vector<256x4xf32>, vector<256x4xf32>, vector<256x4xf32>, vector<256x4xf32>, vector<256x4xf32> -> vector<256x36xf32>
    %c0_33 = arith.constant 0 : index
    %c0_34 = arith.constant 0 : index
    %28 = vector.load %arg2[%c0_33, %c0_34] : memref<36x8xf32, #tpu.memory_space<vmem>>, vector<36x8xf32>
    %cst = arith.constant dense<0.000000e+00> : vector<256x8xf32>
    %29 = tpu.matmul %27, %28, %cst {dimension_numbers = #tpu.dot_dimension_numbers<[1], [0], [0], [1], [0, 0, 1, 1], [], []>} : vector<256x36xf32>, vector<36x8xf32>, vector<256x8xf32> -> vector<256x8xf32>
    %c0_35 = arith.constant 0 : index
    %c0_36 = arith.constant 0 : index
    %c0_37 = arith.constant 0 : index
    %30 = vector.load %arg3[%c0_35, %c0_36, %c0_37] : memref<1x256x8xf32, #tpu.memory_space<vmem>>, vector<1x256x8xf32>
    %31 = vector.shape_cast %30 : vector<1x256x8xf32> to vector<256x8xf32>
    %32 = vector.shape_cast %29 : vector<256x8xf32> to vector<1x256x8xf32>
    tpu.vector_store %arg3[%c0_35, %c0_36, %c0_37], %32 {strides = array<i32>} : memref<1x256x8xf32, #tpu.memory_space<vmem>>, vector<1x256x8xf32>,
    %cst_38 = arith.constant dense<0.000000e+00> : vector<8xf32>
    %33 = vector.multi_reduction <add>, %29, %cst_38 [0] : vector<256x8xf32> to vector<8xf32>
    %34 = vector.shape_cast %33 : vector<8xf32> to vector<1x8xf32>
    %c0_39 = arith.constant 0 : index
    %c0_40 = arith.constant 0 : index
    %c0_41 = arith.constant 0 : index
    %35 = vector.load %arg4[%c0_39, %c0_40, %c0_41] : memref<1x2x8xf32, #tpu.memory_space<vmem>>, vector<1x1x8xf32>
    %36 = vector.shape_cast %35 : vector<1x1x8xf32> to vector<1x8xf32>
    %37 = vector.shape_cast %34 : vector<1x8xf32> to vector<1x1x8xf32>
    tpu.vector_store %arg4[%c0_39, %c0_40, %c0_41], %37 {strides = array<i32>} : memref<1x2x8xf32, #tpu.memory_space<vmem>>, vector<1x1x8xf32>,
    %38 = arith.mulf %29, %29 : vector<256x8xf32>
    %cst_42 = arith.constant dense<0.000000e+00> : vector<8xf32>
    %39 = vector.multi_reduction <add>, %38, %cst_42 [0] : vector<256x8xf32> to vector<8xf32>
    %40 = vector.shape_cast %39 : vector<8xf32> to vector<1x8xf32>
    %c0_43 = arith.constant 0 : index
    %c1_44 = arith.constant 1 : index
    %c0_45 = arith.constant 0 : index
    %41 = vector.load %arg4[%c0_43, %c1_44, %c0_45] : memref<1x2x8xf32, #tpu.memory_space<vmem>>, vector<1x1x8xf32>
    %42 = vector.shape_cast %41 : vector<1x1x8xf32> to vector<1x8xf32>
    %43 = vector.shape_cast %40 : vector<1x8xf32> to vector<1x1x8xf32>
    tpu.vector_store %arg4[%c0_43, %c1_44, %c0_45], %43 {strides = array<i32>} : memref<1x2x8xf32, #tpu.memory_space<vmem>>, vector<1x1x8xf32>,
    return
  }
  func.func @transform_0(%arg0: i32) -> (i32, i32, i32, i32) {
    %c0_i32 = arith.constant 0 : i32
    %c0_i32_0 = arith.constant 0 : i32
    %c0_i32_1 = arith.constant 0 : i32
    %c0_i32_2 = arith.constant 0 : i32
    return %arg0, %c0_i32, %c0_i32_0, %c0_i32_1 : i32, i32, i32, i32
  }
  func.func @transform_1(%arg0: i32) -> (i32, i32) {
    %c0_i32 = arith.constant 0 : i32
    %c0_i32_0 = arith.constant 0 : i32
    %c0_i32_1 = arith.constant 0 : i32
    return %c0_i32, %c0_i32_0 : i32, i32
  }
  func.func @transform_2(%arg0: i32) -> (i32, i32, i32) {
    %c0_i32 = arith.constant 0 : i32
    %c0_i32_0 = arith.constant 0 : i32
    %c0_i32_1 = arith.constant 0 : i32
    return %arg0, %c0_i32, %c0_i32_0 : i32, i32, i32
  }
  func.func @transform_3(%arg0: i32) -> (i32, i32, i32) {
    %c0_i32 = arith.constant 0 : i32
    %c0_i32_0 = arith.constant 0 : i32
    %c0_i32_1 = arith.constant 0 : i32
    return %arg0, %c0_i32, %c0_i32_0 : i32, i32, i32
  }
}

module attributes {stable_mosaic.version = 11 : i64} {
  func.func @_bn_relu_conv2_kernel(%arg0: i32, %arg1: memref<1x256x8xf32, #tpu.memory_space<vmem>>, %arg2: memref<1x8xf32, #tpu.memory_space<vmem>>, %arg3: memref<1x8xf32, #tpu.memory_space<vmem>>, %arg4: memref<72x8xf32, #tpu.memory_space<vmem>>, %arg5: memref<1x256x8xf32, #tpu.memory_space<vmem>>, %arg6: memref<1x2x8xf32, #tpu.memory_space<vmem>>, %arg7: memref<18x18x8xf32, #tpu.memory_space<vmem>>) attributes {dimension_semantics = [#tpu.dimension_semantics<parallel>], iteration_bounds = array<i64: 2>, scalar_prefetch = 0 : i64, scratch_operands = 1 : i64, tpu.core_type = #tpu.core_type<tc>, window_params = [{transform_indices = @transform_0, window_bounds = array<i64: 1, 256, 8>}, {pipeline_mode = #tpu.pipeline_mode<synchronous>, transform_indices = @transform_1, window_bounds = array<i64: 1, 8>}, {pipeline_mode = #tpu.pipeline_mode<synchronous>, transform_indices = @transform_2, window_bounds = array<i64: 1, 8>}, {pipeline_mode = #tpu.pipeline_mode<synchronous>, transform_indices = @transform_3, window_bounds = array<i64: 72, 8>}, {transform_indices = @transform_4, window_bounds = array<i64: 1, 256, 8>}, {transform_indices = @transform_5, window_bounds = array<i64: 1, 2, 8>}]} {
    %c0 = arith.constant 0 : index
    %c0_0 = arith.constant 0 : index
    %c0_1 = arith.constant 0 : index
    %0 = vector.load %arg1[%c0, %c0_0, %c0_1] : memref<1x256x8xf32, #tpu.memory_space<vmem>>, vector<1x256x8xf32>
    %1 = vector.shape_cast %0 : vector<1x256x8xf32> to vector<256x8xf32>
    %c0_2 = arith.constant 0 : index
    %c0_3 = arith.constant 0 : index
    %2 = vector.load %arg2[%c0_2, %c0_3] : memref<1x8xf32, #tpu.memory_space<vmem>>, vector<1x8xf32>
    %3 = vector.broadcast %2 : vector<1x8xf32> to vector<256x8xf32>
    %4 = arith.mulf %1, %3 : vector<256x8xf32>
    %c0_4 = arith.constant 0 : index
    %c0_5 = arith.constant 0 : index
    %5 = vector.load %arg3[%c0_4, %c0_5] : memref<1x8xf32, #tpu.memory_space<vmem>>, vector<1x8xf32>
    %6 = vector.broadcast %5 : vector<1x8xf32> to vector<256x8xf32>
    %7 = arith.addf %4, %6 : vector<256x8xf32>
    %cst = arith.constant 0.000000e+00 : f32
    %8 = vector.broadcast %cst : f32 to vector<256x8xf32>
    %9 = arith.maximumf %7, %8 : vector<256x8xf32>
    %cst_6 = arith.constant 0.000000e+00 : f32
    %10 = vector.broadcast %cst_6 : f32 to vector<1x18x8xf32>
    %c0_7 = arith.constant 0 : index
    %c0_8 = arith.constant 0 : index
    %c0_9 = arith.constant 0 : index
    %11 = vector.load %arg7[%c0_7, %c0_8, %c0_9] : memref<18x18x8xf32, #tpu.memory_space<vmem>>, vector<1x18x8xf32>
    tpu.vector_store %arg7[%c0_7, %c0_8, %c0_9], %10 {strides = array<i32>} : memref<18x18x8xf32, #tpu.memory_space<vmem>>, vector<1x18x8xf32>,
    %cst_10 = arith.constant 0.000000e+00 : f32
    %12 = vector.broadcast %cst_10 : f32 to vector<1x18x8xf32>
    %c17 = arith.constant 17 : index
    %c0_11 = arith.constant 0 : index
    %c0_12 = arith.constant 0 : index
    %13 = vector.load %arg7[%c17, %c0_11, %c0_12] : memref<18x18x8xf32, #tpu.memory_space<vmem>>, vector<1x18x8xf32>
    tpu.vector_store %arg7[%c17, %c0_11, %c0_12], %12 {strides = array<i32>} : memref<18x18x8xf32, #tpu.memory_space<vmem>>, vector<1x18x8xf32>,
    %cst_13 = arith.constant 0.000000e+00 : f32
    %14 = vector.broadcast %cst_13 : f32 to vector<18x1x8xf32>
    %c0_14 = arith.constant 0 : index
    %c0_15 = arith.constant 0 : index
    %c0_16 = arith.constant 0 : index
    %15 = vector.load %arg7[%c0_14, %c0_15, %c0_16] : memref<18x18x8xf32, #tpu.memory_space<vmem>>, vector<18x1x8xf32>
    tpu.vector_store %arg7[%c0_14, %c0_15, %c0_16], %14 {strides = array<i32>} : memref<18x18x8xf32, #tpu.memory_space<vmem>>, vector<18x1x8xf32>,
    %cst_17 = arith.constant 0.000000e+00 : f32
    %16 = vector.broadcast %cst_17 : f32 to vector<18x1x8xf32>
    %c0_18 = arith.constant 0 : index
    %c17_19 = arith.constant 17 : index
    %c0_20 = arith.constant 0 : index
    %17 = vector.load %arg7[%c0_18, %c17_19, %c0_20] : memref<18x18x8xf32, #tpu.memory_space<vmem>>, vector<18x1x8xf32>
    tpu.vector_store %arg7[%c0_18, %c17_19, %c0_20], %16 {strides = array<i32>} : memref<18x18x8xf32, #tpu.memory_space<vmem>>, vector<18x1x8xf32>,
    %18 = vector.shape_cast %9 : vector<256x8xf32> to vector<16x16x8xf32>
    %c1 = arith.constant 1 : index
    %c1_21 = arith.constant 1 : index
    %c0_22 = arith.constant 0 : index
    %19 = vector.load %arg7[%c1, %c1_21, %c0_22] : memref<18x18x8xf32, #tpu.memory_space<vmem>>, vector<16x16x8xf32>
    tpu.vector_store %arg7[%c1, %c1_21, %c0_22], %18 {strides = array<i32>} : memref<18x18x8xf32, #tpu.memory_space<vmem>>, vector<16x16x8xf32>,
    %c0_23 = arith.constant 0 : index
    %c0_24 = arith.constant 0 : index
    %c0_25 = arith.constant 0 : index
    %20 = vector.load %arg7[%c0_23, %c0_24, %c0_25] : memref<18x18x8xf32, #tpu.memory_space<vmem>>, vector<16x16x8xf32>
    %21 = vector.shape_cast %20 : vector<16x16x8xf32> to vector<256x8xf32>
    %c0_26 = arith.constant 0 : index
    %c1_27 = arith.constant 1 : index
    %c0_28 = arith.constant 0 : index
    %22 = vector.load %arg7[%c0_26, %c1_27, %c0_28] : memref<18x18x8xf32, #tpu.memory_space<vmem>>, vector<16x16x8xf32>
    %23 = vector.shape_cast %22 : vector<16x16x8xf32> to vector<256x8xf32>
    %c0_29 = arith.constant 0 : index
    %c2 = arith.constant 2 : index
    %c0_30 = arith.constant 0 : index
    %24 = vector.load %arg7[%c0_29, %c2, %c0_30] : memref<18x18x8xf32, #tpu.memory_space<vmem>>, vector<16x16x8xf32>
    %25 = vector.shape_cast %24 : vector<16x16x8xf32> to vector<256x8xf32>
    %c1_31 = arith.constant 1 : index
    %c0_32 = arith.constant 0 : index
    %c0_33 = arith.constant 0 : index
    %26 = vector.load %arg7[%c1_31, %c0_32, %c0_33] : memref<18x18x8xf32, #tpu.memory_space<vmem>>, vector<16x16x8xf32>
    %27 = vector.shape_cast %26 : vector<16x16x8xf32> to vector<256x8xf32>
    %c1_34 = arith.constant 1 : index
    %c1_35 = arith.constant 1 : index
    %c0_36 = arith.constant 0 : index
    %28 = vector.load %arg7[%c1_34, %c1_35, %c0_36] : memref<18x18x8xf32, #tpu.memory_space<vmem>>, vector<16x16x8xf32>
    %29 = vector.shape_cast %28 : vector<16x16x8xf32> to vector<256x8xf32>
    %c1_37 = arith.constant 1 : index
    %c2_38 = arith.constant 2 : index
    %c0_39 = arith.constant 0 : index
    %30 = vector.load %arg7[%c1_37, %c2_38, %c0_39] : memref<18x18x8xf32, #tpu.memory_space<vmem>>, vector<16x16x8xf32>
    %31 = vector.shape_cast %30 : vector<16x16x8xf32> to vector<256x8xf32>
    %c2_40 = arith.constant 2 : index
    %c0_41 = arith.constant 0 : index
    %c0_42 = arith.constant 0 : index
    %32 = vector.load %arg7[%c2_40, %c0_41, %c0_42] : memref<18x18x8xf32, #tpu.memory_space<vmem>>, vector<16x16x8xf32>
    %33 = vector.shape_cast %32 : vector<16x16x8xf32> to vector<256x8xf32>
    %c2_43 = arith.constant 2 : index
    %c1_44 = arith.constant 1 : index
    %c0_45 = arith.constant 0 : index
    %34 = vector.load %arg7[%c2_43, %c1_44, %c0_45] : memref<18x18x8xf32, #tpu.memory_space<vmem>>, vector<16x16x8xf32>
    %35 = vector.shape_cast %34 : vector<16x16x8xf32> to vector<256x8xf32>
    %c2_46 = arith.constant 2 : index
    %c2_47 = arith.constant 2 : index
    %c0_48 = arith.constant 0 : index
    %36 = vector.load %arg7[%c2_46, %c2_47, %c0_48] : memref<18x18x8xf32, #tpu.memory_space<vmem>>, vector<16x16x8xf32>
    %37 = vector.shape_cast %36 : vector<16x16x8xf32> to vector<256x8xf32>
    %38 = tpu.concatenate %21, %23, %25, %27, %29, %31, %33, %35, %37 in 1 : vector<256x8xf32>, vector<256x8xf32>, vector<256x8xf32>, vector<256x8xf32>, vector<256x8xf32>, vector<256x8xf32>, vector<256x8xf32>, vector<256x8xf32>, vector<256x8xf32> -> vector<256x72xf32>
    %c0_49 = arith.constant 0 : index
    %c0_50 = arith.constant 0 : index
    %39 = vector.load %arg4[%c0_49, %c0_50] : memref<72x8xf32, #tpu.memory_space<vmem>>, vector<72x8xf32>
    %cst_51 = arith.constant dense<0.000000e+00> : vector<256x8xf32>
    %40 = tpu.matmul %38, %39, %cst_51 {dimension_numbers = #tpu.dot_dimension_numbers<[1], [0], [0], [1], [0, 0, 1, 1], [], []>} : vector<256x72xf32>, vector<72x8xf32>, vector<256x8xf32> -> vector<256x8xf32>
    %c0_52 = arith.constant 0 : index
    %c0_53 = arith.constant 0 : index
    %c0_54 = arith.constant 0 : index
    %41 = vector.load %arg5[%c0_52, %c0_53, %c0_54] : memref<1x256x8xf32, #tpu.memory_space<vmem>>, vector<1x256x8xf32>
    %42 = vector.shape_cast %41 : vector<1x256x8xf32> to vector<256x8xf32>
    %43 = vector.shape_cast %40 : vector<256x8xf32> to vector<1x256x8xf32>
    tpu.vector_store %arg5[%c0_52, %c0_53, %c0_54], %43 {strides = array<i32>} : memref<1x256x8xf32, #tpu.memory_space<vmem>>, vector<1x256x8xf32>,
    %cst_55 = arith.constant dense<0.000000e+00> : vector<8xf32>
    %44 = vector.multi_reduction <add>, %40, %cst_55 [0] : vector<256x8xf32> to vector<8xf32>
    %45 = vector.shape_cast %44 : vector<8xf32> to vector<1x8xf32>
    %c0_56 = arith.constant 0 : index
    %c0_57 = arith.constant 0 : index
    %c0_58 = arith.constant 0 : index
    %46 = vector.load %arg6[%c0_56, %c0_57, %c0_58] : memref<1x2x8xf32, #tpu.memory_space<vmem>>, vector<1x1x8xf32>
    %47 = vector.shape_cast %46 : vector<1x1x8xf32> to vector<1x8xf32>
    %48 = vector.shape_cast %45 : vector<1x8xf32> to vector<1x1x8xf32>
    tpu.vector_store %arg6[%c0_56, %c0_57, %c0_58], %48 {strides = array<i32>} : memref<1x2x8xf32, #tpu.memory_space<vmem>>, vector<1x1x8xf32>,
    %49 = arith.mulf %40, %40 : vector<256x8xf32>
    %cst_59 = arith.constant dense<0.000000e+00> : vector<8xf32>
    %50 = vector.multi_reduction <add>, %49, %cst_59 [0] : vector<256x8xf32> to vector<8xf32>
    %51 = vector.shape_cast %50 : vector<8xf32> to vector<1x8xf32>
    %c0_60 = arith.constant 0 : index
    %c1_61 = arith.constant 1 : index
    %c0_62 = arith.constant 0 : index
    %52 = vector.load %arg6[%c0_60, %c1_61, %c0_62] : memref<1x2x8xf32, #tpu.memory_space<vmem>>, vector<1x1x8xf32>
    %53 = vector.shape_cast %52 : vector<1x1x8xf32> to vector<1x8xf32>
    %54 = vector.shape_cast %51 : vector<1x8xf32> to vector<1x1x8xf32>
    tpu.vector_store %arg6[%c0_60, %c1_61, %c0_62], %54 {strides = array<i32>} : memref<1x2x8xf32, #tpu.memory_space<vmem>>, vector<1x1x8xf32>,
    return
  }
  func.func @transform_0(%arg0: i32) -> (i32, i32, i32) {
    %c0_i32 = arith.constant 0 : i32
    %c0_i32_0 = arith.constant 0 : i32
    %c0_i32_1 = arith.constant 0 : i32
    return %arg0, %c0_i32, %c0_i32_0 : i32, i32, i32
  }
  func.func @transform_1(%arg0: i32) -> (i32, i32) {
    %c0_i32 = arith.constant 0 : i32
    %c0_i32_0 = arith.constant 0 : i32
    %c0_i32_1 = arith.constant 0 : i32
    return %c0_i32, %c0_i32_0 : i32, i32
  }
  func.func @transform_2(%arg0: i32) -> (i32, i32) {
    %c0_i32 = arith.constant 0 : i32
    %c0_i32_0 = arith.constant 0 : i32
    %c0_i32_1 = arith.constant 0 : i32
    return %c0_i32, %c0_i32_0 : i32, i32
  }
  func.func @transform_3(%arg0: i32) -> (i32, i32) {
    %c0_i32 = arith.constant 0 : i32
    %c0_i32_0 = arith.constant 0 : i32
    %c0_i32_1 = arith.constant 0 : i32
    return %c0_i32, %c0_i32_0 : i32, i32
  }
  func.func @transform_4(%arg0: i32) -> (i32, i32, i32) {
    %c0_i32 = arith.constant 0 : i32
    %c0_i32_0 = arith.constant 0 : i32
    %c0_i32_1 = arith.constant 0 : i32
    return %arg0, %c0_i32, %c0_i32_0 : i32, i32, i32
  }
  func.func @transform_5(%arg0: i32) -> (i32, i32, i32) {
    %c0_i32 = arith.constant 0 : i32
    %c0_i32_0 = arith.constant 0 : i32
    %c0_i32_1 = arith.constant 0 : i32
    return %arg0, %c0_i32, %c0_i32_0 : i32, i32, i32
  }
}

module attributes {stable_mosaic.version = 11 : i64} {
  func.func @_bn_relu_kernel(%arg0: i32, %arg1: memref<1x16x128xf32, #tpu.memory_space<vmem>>, %arg2: memref<1x128xf32, #tpu.memory_space<vmem>>, %arg3: memref<1x128xf32, #tpu.memory_space<vmem>>, %arg4: memref<1x16x128xf32, #tpu.memory_space<vmem>>) attributes {dimension_semantics = [#tpu.dimension_semantics<parallel>], iteration_bounds = array<i64: 2>, scalar_prefetch = 0 : i64, scratch_operands = 0 : i64, tpu.core_type = #tpu.core_type<tc>, window_params = [{transform_indices = @transform_0, window_bounds = array<i64: 1, 16, 128>}, {pipeline_mode = #tpu.pipeline_mode<synchronous>, transform_indices = @transform_1, window_bounds = array<i64: 1, 128>}, {pipeline_mode = #tpu.pipeline_mode<synchronous>, transform_indices = @transform_2, window_bounds = array<i64: 1, 128>}, {transform_indices = @transform_3, window_bounds = array<i64: 1, 16, 128>}]} {
    %c0 = arith.constant 0 : index
    %c0_0 = arith.constant 0 : index
    %c0_1 = arith.constant 0 : index
    %0 = vector.load %arg1[%c0, %c0_0, %c0_1] : memref<1x16x128xf32, #tpu.memory_space<vmem>>, vector<1x16x128xf32>
    %1 = vector.shape_cast %0 : vector<1x16x128xf32> to vector<16x128xf32>
    %c0_2 = arith.constant 0 : index
    %c0_3 = arith.constant 0 : index
    %2 = vector.load %arg2[%c0_2, %c0_3] : memref<1x128xf32, #tpu.memory_space<vmem>>, vector<1x128xf32>
    %3 = vector.broadcast %2 : vector<1x128xf32> to vector<16x128xf32>
    %4 = arith.mulf %1, %3 : vector<16x128xf32>
    %c0_4 = arith.constant 0 : index
    %c0_5 = arith.constant 0 : index
    %5 = vector.load %arg3[%c0_4, %c0_5] : memref<1x128xf32, #tpu.memory_space<vmem>>, vector<1x128xf32>
    %6 = vector.broadcast %5 : vector<1x128xf32> to vector<16x128xf32>
    %7 = arith.addf %4, %6 : vector<16x128xf32>
    %cst = arith.constant 0.000000e+00 : f32
    %8 = vector.broadcast %cst : f32 to vector<16x128xf32>
    %9 = arith.maximumf %7, %8 : vector<16x128xf32>
    %c0_6 = arith.constant 0 : index
    %c0_7 = arith.constant 0 : index
    %c0_8 = arith.constant 0 : index
    %10 = vector.load %arg4[%c0_6, %c0_7, %c0_8] : memref<1x16x128xf32, #tpu.memory_space<vmem>>, vector<1x16x128xf32>
    %11 = vector.shape_cast %10 : vector<1x16x128xf32> to vector<16x128xf32>
    %12 = vector.shape_cast %9 : vector<16x128xf32> to vector<1x16x128xf32>
    tpu.vector_store %arg4[%c0_6, %c0_7, %c0_8], %12 {strides = array<i32>} : memref<1x16x128xf32, #tpu.memory_space<vmem>>, vector<1x16x128xf32>,
    return
  }
  func.func @transform_0(%arg0: i32) -> (i32, i32, i32) {
    %c0_i32 = arith.constant 0 : i32
    %c0_i32_0 = arith.constant 0 : i32
    %c0_i32_1 = arith.constant 0 : i32
    return %arg0, %c0_i32, %c0_i32_0 : i32, i32, i32
  }
  func.func @transform_1(%arg0: i32) -> (i32, i32) {
    %c0_i32 = arith.constant 0 : i32
    %c0_i32_0 = arith.constant 0 : i32
    %c0_i32_1 = arith.constant 0 : i32
    return %c0_i32, %c0_i32_0 : i32, i32
  }
  func.func @transform_2(%arg0: i32) -> (i32, i32) {
    %c0_i32 = arith.constant 0 : i32
    %c0_i32_0 = arith.constant 0 : i32
    %c0_i32_1 = arith.constant 0 : i32
    return %c0_i32, %c0_i32_0 : i32, i32
  }
  func.func @transform_3(%arg0: i32) -> (i32, i32, i32) {
    %c0_i32 = arith.constant 0 : i32
    %c0_i32_0 = arith.constant 0 : i32
    %c0_i32_1 = arith.constant 0 : i32
    return %arg0, %c0_i32, %c0_i32_0 : i32, i32, i32
  }
}

</mosaic_0001>

<llo_original>
// kernel: tile.13
$region0: #{tile.13}
  #allocation0 [shape = 's32[1]{0}', space=sflag, size = 0x4, scoped, tag = 'scoped memory for tile.13']
  %s0 = inlined_call_operand.vmem [shape: f32[8], index: 0, kind: input, shape index: {}]
  %s1 = inlined_call_operand.vmem [shape: f32[16,8], index: 1, kind: output, shape index: {}]
  // Predicated region
  $region2: #{tile.13} parent=0 // pred_check
    _
  $region3: #{tile.13} parent=0 // pred_check_branch
    %3 = sbr.rel (0) target = $region5
  $region4: #{tile.13} parent=0 // pred_region
    _
  $region5: #{tile.13} parent=0 // pred_fallthru
    _
  %v4 = vld [vmem:[%s0] ss:$0 sm:$0xff]
  %5 = vst [vmem:[%s1] sm:$0xff] %v4
  %s6 = scalar_lea.vmem %s1, 8
  %7 = vst [vmem:[%s6] sm:$0xff] %v4

// kernel: tile.14
$region0: #{tile.14}
  %s0 = inlined_call_operand.vmem [shape: f32[16,8], index: 0, kind: input, shape index: {}]
  %s1 = inlined_call_operand.vmem [shape: f32[1,128], index: 1, kind: output, shape index: {}]
  $region1: #{tile.14} parent=0
    #allocation0 [shape = 'u8[4096]{0}', space=vmem, size = 0x1000, scoped, tag = 'scoped mem for output reshape']
    %v2 = vld [vmem:[%s0] sm:$0x1]
    %vm3 = vcmask 64512
    %4 = vst.msk [vmem:[#allocation0] sm:$0x1] %vm3, %v2
    %s5 = scalar_lea.vmem %s0, 15
    %v6 = vld [vmem:[%s5] sm:$0x1]
    %7 = vrot.lane.b32.xlu0 %v6, 120
    %v8 = vpop.permute.xlu0 %7
    %vm9 = vcmask 1048512
    %10 = vst.msk [vmem:[#allocation0] sm:$0x1] %vm9, %v8
    %s11 = scalar_lea.vmem %s0, 14
    %v12 = vld [vmem:[%s11] sm:$0x1]
    %13 = vrot.lane.b32.xlu0 %v12, 112
    %v14 = vpop.permute.xlu0 %13
    %vm15 = vcmask 982912
    %16 = vst.msk [vmem:[#allocation0] sm:$0x1] %vm15, %v14
    %s17 = scalar_lea.vmem %s0, 13
    %v18 = vld [vmem:[%s17] sm:$0x1]
    %19 = vrot.lane.b32.xlu0 %v18, 104
    %v20 = vpop.permute.xlu0 %19
    %vm21 = vcmask 917312
    %22 = vst.msk [vmem:[#allocation0] sm:$0x1] %vm21, %v20
    %s23 = scalar_lea.vmem %s0, 12
    %v24 = vld [vmem:[%s23] sm:$0x1]
    %25 = vrot.lane.b32.xlu0 %v24, 96
    %v26 = vpop.permute.xlu0 %25
    %vm27 = vcmask 851712
    %28 = vst.msk [vmem:[#allocation0] sm:$0x1] %vm27, %v26
    %s29 = scalar_lea.vmem %s0, 11
    %v30 = vld [vmem:[%s29] sm:$0x1]
    %31 = vrot.lane.b32.xlu0 %v30, 88
    %v32 = vpop.permute.xlu0 %31
    %vm33 = vcmask 786112
    %34 = vst.msk [vmem:[#allocation0] sm:$0x1] %vm33, %v32
    %s35 = scalar_lea.vmem %s0, 10
    %v36 = vld [vmem:[%s35] sm:$0x1]
    %37 = vrot.lane.b32.xlu0 %v36, 80
    %v38 = vpop.permute.xlu0 %37
    %vm39 = vcmask 720512
    %40 = vst.msk [vmem:[#allocation0] sm:$0x1] %vm39, %v38
    %s41 = scalar_lea.vmem %s0, 9
    %v42 = vld [vmem:[%s41] sm:$0x1]
    %43 = vrot.lane.b32.xlu0 %v42, 72
    %v44 = vpop.permute.xlu0 %43
    %vm45 = vcmask 654912
    %46 = vst.msk [vmem:[#allocation0] sm:$0x1] %vm45, %v44
    %s47 = scalar_lea.vmem %s0, 8
    %v48 = vld [vmem:[%s47] sm:$0x1]
    %49 = vrot.lane.b32.xlu0 %v48, 64
    %v50 = vpop.permute.xlu0 %49
    %vm51 = vcmask 589312
    %52 = vst.msk [vmem:[#allocation0] sm:$0x1] %vm51, %v50
    %s53 = scalar_lea.vmem %s0, 7
    %v54 = vld [vmem:[%s53] sm:$0x1]
    %55 = vrot.lane.b32.xlu0 %v54, 56
    %v56 = vpop.permute.xlu0 %55
    %vm57 = vcmask 523712
    %58 = vst.msk [vmem:[#allocation0] sm:$0x1] %vm57, %v56
    %s59 = scalar_lea.vmem %s0, 6
    %v60 = vld [vmem:[%s59] sm:$0x1]
    %61 = vrot.lane.b32.xlu0 %v60, 48
    %v62 = vpop.permute.xlu0 %61
    %vm63 = vcmask 458112
    %64 = vst.msk [vmem:[#allocation0] sm:$0x1] %vm63, %v62
    %s65 = scalar_lea.vmem %s0, 5
    %v66 = vld [vmem:[%s65] sm:$0x1]
    %67 = vrot.lane.b32.xlu0 %v66, 40
    %v68 = vpop.permute.xlu0 %67
    %vm69 = vcmask 392512
    %70 = vst.msk [vmem:[#allocation0] sm:$0x1] %vm69, %v68
    %s71 = scalar_lea.vmem %s0, 4
    %v72 = vld [vmem:[%s71] sm:$0x1]
    %73 = vrot.lane.b32.xlu0 %v72, 32
    %v74 = vpop.permute.xlu0 %73
    %vm75 = vcmask 326912
    %76 = vst.msk [vmem:[#allocation0] sm:$0x1] %vm75, %v74
    %s77 = scalar_lea.vmem %s0, 3
    %v78 = vld [vmem:[%s77] sm:$0x1]
    %79 = vrot.lane.b32.xlu0 %v78, 24
    %v80 = vpop.permute.xlu0 %79
    %vm81 = vcmask 261312
    %82 = vst.msk [vmem:[#allocation0] sm:$0x1] %vm81, %v80
    %s83 = scalar_lea.vmem %s0, 2
    %v84 = vld [vmem:[%s83] sm:$0x1]
    %85 = vrot.lane.b32.xlu0 %v84, 16
    %v86 = vpop.permute.xlu0 %85
    %vm87 = vcmask 195712
    %88 = vst.msk [vmem:[#allocation0] sm:$0x1] %vm87, %v86
    %s89 = scalar_lea.vmem %s0, 1
    %v90 = vld [vmem:[%s89] sm:$0x1]
    %91 = vrot.lane.b32.xlu0 %v90, 8
    %v92 = vpop.permute.xlu0 %91
    %vm93 = vcmask 130112
    %94 = vst.msk [vmem:[#allocation0] sm:$0x1] %vm93, %v92
    %s96 = sshll.u32 1, 1
    %s97 = ssub.s32 %s96, 1
    %v99 = vld [vmem:[#allocation0] sm:%s97]
    %s100 = sshll.u32 1, 1
    %s101 = ssub.s32 %s100, 1
    %102 = vst [vmem:[%s1] sm:%s101] %v99

// kernel: convolution_forward.5
$region0: #{convolution_forward.5}
  #allocation0 [shape = 'u32[]', space=smem, size = 0x4, offset = 0x4, fixed_abs, tag = 'smem constant byte address 0x4 - core index']
  #allocation1 [shape = 'u32[144,128]{1,0:T(1,128)}', space=vmem, size = 0x12000, scoped, tag = 'internal scratch']
  %s0 = inlined_call_operand.vmem [shape: f32[2,16,128], index: 0, kind: input, shape index: {}]
  %s1 = inlined_call_operand.vmem [shape: f32[1,128], index: 1, kind: input, shape index: {}]
  %s2 = inlined_call_operand.vmem [shape: f32[1,128], index: 2, kind: input, shape index: {}]
  %s3 = inlined_call_operand.vmem [shape: f32[2,16,128], index: 3, kind: output, shape index: {}]
  %s4 = sld [smem:[#allocation0]]
  $region45: #{convolution_forward.5} parent=0
    _
  %s6 = ssub.s32 1, %s4
  %s7 = scalar_select 0, %s6, %s4
  loop: start=0, step=1, limit=4
  $region2: #{convolution_forward.5} parent=0 // loop_pre_header
    _
  $region3: #{convolution_forward.5} parent=0 // loop_header
    %s9 = sphi 0, %s13
    %p10 = scmp.ge.s32.totalorder %s9, 4
    %s19 = sphi 0, %s21
    %s22 = sphi 0, %s19
    %s23 = sphi 0, %s22
    %s39 = sphi 0, %s23
    %s43 = sphi 0, %s43
    %s45 = sphi 0, %s43
    %s46 = sphi 0, %s45
    %s60 = sphi 0, %s46
    %s64 = sphi 0, %s64
    %s66 = sphi 0, %s64
    %s67 = sphi 0, %s66
    %s81 = sphi 0, %s67
    %s87 = sphi 0, %s89
    %s90 = sphi 0, %s87
    %s91 = sphi 0, %s90
    %s107 = sphi 0, %s91
  $region4: #{convolution_forward.5} parent=0 // loop_header_branch
    %12 = sbr.rel (%p10) target = $region8
  $region5: #{convolution_forward.5} parent=0 // loop_body
    %s14 = ssub.s32 %s9, 1
    %s15 = ssub.s32 %s9, 2
    %s16 = sadd.s32 %s9, 1
    %s17 = ssub.s32 %s9, %s16
    %p18 = scmp.eq.s32.totalorder %s17, 0
    %s20 = sadd.s32 %s19, 1
    %s21 = scalar_select %p18, %s19, %s20
    %p24 = pneg %p18
    %p25 = scmp.eq.s32.totalorder %s9, 1
    %p26 = por %p24, %p25
    %p27 = scmp.ne.s32.totalorder %s19, %s22
    %p28 = scmp.eq.s32.totalorder %s9, 0
    %p29 = por %p27, %p28
    %p30 = scmp.ne.s32.totalorder %s19, %s22
    %p31 = scmp.eq.s32.totalorder %s14, 1
    %p32 = por %p30, %p31
    %p33 = scmp.ne.s32.totalorder %s22, %s23
    %p34 = scmp.eq.s32.totalorder %s14, 0
    %p35 = por %p33, %p34
    %p36 = scmp.ne.s32.totalorder %s22, %s23
    %p37 = scmp.eq.s32.totalorder %s15, 1
    %p38 = por %p36, %p37
    %p40 = scmp.ne.s32.totalorder %s23, %s39
    %p41 = scmp.eq.s32.totalorder %s15, 0
    %p42 = por %p40, %p41
    %s44 = sadd.s32 %s43, 1
    %p47 = scmp.eq.s32.totalorder %s9, 1
    %p48 = scmp.ne.s32.totalorder %s43, %s45
    %p49 = scmp.eq.s32.totalorder %s9, 0
    %p50 = por %p48, %p49
    %p51 = scmp.ne.s32.totalorder %s43, %s45
    %p52 = scmp.eq.s32.totalorder %s14, 1
    %p53 = por %p51, %p52
    %p54 = scmp.ne.s32.totalorder %s45, %s46
    %p55 = scmp.eq.s32.totalorder %s14, 0
    %p56 = por %p54, %p55
    %p57 = scmp.ne.s32.totalorder %s45, %s46
    %p58 = scmp.eq.s32.totalorder %s15, 1
    %p59 = por %p57, %p58
    %p61 = scmp.ne.s32.totalorder %s46, %s60
    %p62 = scmp.eq.s32.totalorder %s15, 0
    %p63 = por %p61, %p62
    %s65 = sadd.s32 %s64, 1
    %p68 = scmp.eq.s32.totalorder %s9, 1
    %p69 = scmp.ne.s32.totalorder %s64, %s66
    %p70 = scmp.eq.s32.totalorder %s9, 0
    %p71 = por %p69, %p70
    %p72 = scmp.ne.s32.totalorder %s64, %s66
    %p73 = scmp.eq.s32.totalorder %s14, 1
    %p74 = por %p72, %p73
    %p75 = scmp.ne.s32.totalorder %s66, %s67
    %p76 = scmp.eq.s32.totalorder %s14, 0
    %p77 = por %p75, %p76
    %p78 = scmp.ne.s32.totalorder %s66, %s67
    %p79 = scmp.eq.s32.totalorder %s15, 1
    %p80 = por %p78, %p79
    %p82 = scmp.ne.s32.totalorder %s67, %s81
    %p83 = scmp.eq.s32.totalorder %s15, 0
    %p84 = por %p82, %p83
    %s85 = ssub.s32 %s9, %s16
    %p86 = scmp.eq.s32.totalorder %s85, 0
    %s88 = sadd.s32 %s87, 1
    %s89 = scalar_select %p86, %s87, %s88
    %p92 = pneg %p86
    %p93 = scmp.eq.s32.totalorder %s9, 1
    %p94 = por %p92, %p93
    %p95 = scmp.ne.s32.totalorder %s87, %s90
    %p96 = scmp.eq.s32.totalorder %s9, 0
    %p97 = por %p95, %p96
    %p98 = scmp.ne.s32.totalorder %s87, %s90
    %p99 = scmp.eq.s32.totalorder %s14, 1
    %p100 = por %p98, %p99
    %p101 = scmp.ne.s32.totalorder %s90, %s91
    %p102 = scmp.eq.s32.totalorder %s14, 0
    %p103 = por %p101, %p102
    %p104 = scmp.ne.s32.totalorder %s90, %s91
    %p105 = scmp.eq.s32.totalorder %s15, 1
    %p106 = por %p104, %p105
    %p108 = scmp.ne.s32.totalorder %s91, %s107
    %p109 = scmp.eq.s32.totalorder %s15, 0
    %p110 = por %p108, %p109
    %p111 = scmp.le.s32.totalorder 1, %s9
    %p112 = scmp.lt.s32.totalorder %s9, 3
    %p113 = pnand %p111, %p112
    %p114 = pneg %p113
    // Predicated region
    $region9: #{convolution_forward.5} parent=5 // pred_check
      _
    $region10: #{convolution_forward.5} parent=5 // pred_check_branch
      %116 = sbr.rel (%p113) target = $region12
    $region11: #{convolution_forward.5} parent=5 // pred_region
      %s117 = ssub.s32 %s9, 1
      // Predicated region
      $region13: #{convolution_forward.5} parent=11 // pred_check
        %p118 = pneg %p56
      $region14: #{convolution_forward.5} parent=11 // pred_check_branch
        %120 = sbr.rel (%p118) target = $region16
      $region15: #{convolution_forward.5} parent=11 // pred_region
        _
      $region16: #{convolution_forward.5} parent=11 // pred_fallthru
        _
      // Predicated region
      $region17: #{convolution_forward.5} parent=11 // pred_check
        %p121 = pneg %p77
      $region18: #{convolution_forward.5} parent=11 // pred_check_branch
        %123 = sbr.rel (%p121) target = $region20
      $region19: #{convolution_forward.5} parent=11 // pred_region
        _
      $region20: #{convolution_forward.5} parent=11 // pred_fallthru
        _
    $region12: #{convolution_forward.5} parent=5 // pred_fallthru
      _
    %p124 = scmp.lt.s32.totalorder %s9, 2
    // Predicated region
    $region21: #{convolution_forward.5} parent=5 // pred_check
      %p125 = pneg %p124
    $region22: #{convolution_forward.5} parent=5 // pred_check_branch
      %127 = sbr.rel (%p125) target = $region24
    $region23: #{convolution_forward.5} parent=5 // pred_region
      // Predicated region
      $region25: #{convolution_forward.5} parent=23 // pred_check
        %p128 = pneg %p29
      $region26: #{convolution_forward.5} parent=23 // pred_check_branch
        %130 = sbr.rel (%p128) target = $region28
      $region27: #{convolution_forward.5} parent=23 // pred_region
        %p131 = scmp.lt.s32.totalorder %s9, 1
        %s132 = scalar_select %p131, %s9, 1
        %s133 = smul.addr %s132, 2
        %s134 = smul.addr %s133, 8
        %s135 = scalar_lea.vmem %s0, %s134
      $region28: #{convolution_forward.5} parent=23 // pred_fallthru
        _
    $region24: #{convolution_forward.5} parent=5 // pred_fallthru
      _
    %p136 = scmp.le.s32.totalorder 1, %s9
    %p137 = scmp.lt.s32.totalorder %s9, 3
    %p138 = pnand %p136, %p137
    %p139 = pneg %p138
    // Predicated region
    $region29: #{convolution_forward.5} parent=5 // pred_check
      _
    $region30: #{convolution_forward.5} parent=5 // pred_check_branch
      %141 = sbr.rel (%p138) target = $region32
    $region31: #{convolution_forward.5} parent=5 // pred_region
      %s142 = ssub.s32 %s9, 1
      %p143 = scmp.lt.s32.totalorder %s14, 1
      %s144 = scalar_select %p143, %s14, 1
      %s145 = smul.addr %s144, 2
      %s146 = smul.addr %s145, 8
      %s147 = scalar_lea.vmem %s0, %s146
      %p148 = pneg %p35
      %p149 = pneg %p32
      %p150 = pneg %p56
      %p151 = pneg %p53
      %p152 = pneg %p77
      %p153 = pneg %p74
      %p154 = pneg %p103
      %p155 = pneg %p100
      %p156 = scmp.lt.s32.totalorder %s14, 1
      %s157 = scalar_select %p156, %s14, 1
      %s158 = smul.addr %s157, 2
      %s159 = smul.addr %s158, 8
      %s160 = scalar_lea.vmem %s3, %s159
      %p161 = scmp.lt.s32.totalorder %s14, 1
      %s162 = scalar_select %p161, %s14, 1
      %s163 = smul.addr %s162, 2
      %s164 = smul.addr %s163, 8
      %s165 = scalar_lea.vmem %s0, %s164
      %p166 = scmp.lt.s32.totalorder %s14, 1
      %s167 = scalar_select %p166, %s14, 1
      %s168 = smul.addr %s167, 2
      %s169 = smul.addr %s168, 8
      %s170 = scalar_lea.vmem %s3, %s169
      %v171 = vld [vmem:[%s165] sm:$0xff]
      %v172 = vld [vmem:[%s165 + $0x8] sm:$0xff]
      %v173 = vld [vmem:[%s1] sm:$0x1]
      %v175 = vlaneseq
      %v176 = vshrl.u32 %v175, 7
      %v177 = vsub.s32 0, %v176
      %v178 = vrot.slane %v173, %v177
      %v180 = vmul.f32 %v171, %v178
      %v181 = vmul.f32 %v172, %v178
      %v182 = vld [vmem:[%s2] sm:$0x1]
      %v184 = vlaneseq
      %v185 = vshrl.u32 %v184, 7
      %v186 = vsub.s32 0, %v185
      %v187 = vrot.slane %v182, %v186
      %v189 = vadd.f32 %v180, %v187
      %v190 = vadd.f32 %v181, %v187
      %v191 = vmax.f32 %v189, 0.0
      %v192 = vmax.f32 %v190, 0.0
      %193 = vst [vmem:[%s170] sm:$0xff] %v191
      %194 = vst [vmem:[%s170 + $0x8] sm:$0xff] %v192
      %p195 = scmp.lt.s32.totalorder %s14, 1
      %s196 = scalar_select %p195, %s14, 1
      %s197 = smul.addr %s196, 2
      %s198 = smul.addr %s197, 8
      %s199 = scalar_lea.vmem %s3, %s198
      // Predicated region
      $region33: #{convolution_forward.5} parent=31 // pred_check
        %p200 = pneg %p100
      $region34: #{convolution_forward.5} parent=31 // pred_check_branch
        %202 = sbr.rel (%p200) target = $region36
      $region35: #{convolution_forward.5} parent=31 // pred_region
        _
      $region36: #{convolution_forward.5} parent=31 // pred_fallthru
        _
    $region32: #{convolution_forward.5} parent=5 // pred_fallthru
      _
    %p203 = scmp.le.s32.totalorder 2, %s9
    // Predicated region
    $region37: #{convolution_forward.5} parent=5 // pred_check
      %p204 = pneg %p203
    $region38: #{convolution_forward.5} parent=5 // pred_check_branch
      %206 = sbr.rel (%p204) target = $region40
    $region39: #{convolution_forward.5} parent=5 // pred_region
      %s207 = ssub.s32 %s9, 2
      // Predicated region
      $region41: #{convolution_forward.5} parent=39 // pred_check
        %p208 = pneg %p106
      $region42: #{convolution_forward.5} parent=39 // pred_check_branch
        %210 = sbr.rel (%p208) target = $region44
      $region43: #{convolution_forward.5} parent=39 // pred_region
        %p211 = scmp.lt.s32.totalorder %s15, 1
        %s212 = scalar_select %p211, %s15, 1
        %s213 = smul.addr %s212, 2
        %s214 = smul.addr %s213, 8
        %s215 = scalar_lea.vmem %s3, %s214
      $region44: #{convolution_forward.5} parent=39 // pred_fallthru
        _
    $region40: #{convolution_forward.5} parent=5 // pred_fallthru
      _
  $region6: #{convolution_forward.5} parent=0 // loop_footer
    %s13 = sadd.s32 1, %s9
  $region7: #{convolution_forward.5} parent=0 // loop_footer_branch
    %8 = sbr.rel target = $region3
  $region8: #{convolution_forward.5} parent=0 // loop_exit
    _

// kernel: convolution_forward.3
$region0: #{convolution_forward.3}
  #allocation0 [shape = 'u32[]', space=smem, size = 0x4, offset = 0x4, fixed_abs, tag = 'smem constant byte address 0x4 - core index']
  #allocation1 [shape = 'u32[144,128]{1,0:T(1,128)}', space=vmem, size = 0x12000, scoped, tag = 'internal scratch']
  %s0 = inlined_call_operand.vmem [shape: f32[2,18,18,4], index: 0, kind: input, shape index: {}]
  %s1 = inlined_call_operand.vmem [shape: f32[36,8], index: 1, kind: input, shape index: {}]
  %s2 = inlined_call_operand.vmem [shape: f32[2,256,8], index: 2, kind: output, shape index: {0}]
  %s3 = inlined_call_operand.vmem [shape: f32[2,2,8], index: 3, kind: output, shape index: {1}]
  %4 = xla_tuple %s2, %s3
  %s5 = sld [smem:[#allocation0]]
  $region49: #{convolution_forward.3} parent=0
    _
  %s7 = ssub.s32 1, %s5
  %s8 = scalar_select 0, %s7, %s5
  loop: start=0, step=1, limit=4
  $region2: #{convolution_forward.3} parent=0 // loop_pre_header
    _
  $region3: #{convolution_forward.3} parent=0 // loop_header
    %s10 = sphi 0, %s14
    %p11 = scmp.ge.s32.totalorder %s10, 4
    %s20 = sphi 0, %s22
    %s23 = sphi 0, %s20
    %s24 = sphi 0, %s23
    %s40 = sphi 0, %s24
    %s44 = sphi 0, %s44
    %s46 = sphi 0, %s44
    %s47 = sphi 0, %s46
    %s61 = sphi 0, %s47
    %s67 = sphi 0, %s69
    %s70 = sphi 0, %s67
    %s71 = sphi 0, %s70
    %s87 = sphi 0, %s71
    %s93 = sphi 0, %s95
    %s96 = sphi 0, %s93
    %s97 = sphi 0, %s96
    %s113 = sphi 0, %s97
  $region4: #{convolution_forward.3} parent=0 // loop_header_branch
    %13 = sbr.rel (%p11) target = $region8
  $region5: #{convolution_forward.3} parent=0 // loop_body
    %s15 = ssub.s32 %s10, 1
    %s16 = ssub.s32 %s10, 2
    %s17 = sadd.s32 %s10, 1
    %s18 = ssub.s32 %s10, %s17
    %p19 = scmp.eq.s32.totalorder %s18, 0
    %s21 = sadd.s32 %s20, 1
    %s22 = scalar_select %p19, %s20, %s21
    %p25 = pneg %p19
    %p26 = scmp.eq.s32.totalorder %s10, 1
    %p27 = por %p25, %p26
    %p28 = scmp.ne.s32.totalorder %s20, %s23
    %p29 = scmp.eq.s32.totalorder %s10, 0
    %p30 = por %p28, %p29
    %p31 = scmp.ne.s32.totalorder %s20, %s23
    %p32 = scmp.eq.s32.totalorder %s15, 1
    %p33 = por %p31, %p32
    %p34 = scmp.ne.s32.totalorder %s23, %s24
    %p35 = scmp.eq.s32.totalorder %s15, 0
    %p36 = por %p34, %p35
    %p37 = scmp.ne.s32.totalorder %s23, %s24
    %p38 = scmp.eq.s32.totalorder %s16, 1
    %p39 = por %p37, %p38
    %p41 = scmp.ne.s32.totalorder %s24, %s40
    %p42 = scmp.eq.s32.totalorder %s16, 0
    %p43 = por %p41, %p42
    %s45 = sadd.s32 %s44, 1
    %p48 = scmp.eq.s32.totalorder %s10, 1
    %p49 = scmp.ne.s32.totalorder %s44, %s46
    %p50 = scmp.eq.s32.totalorder %s10, 0
    %p51 = por %p49, %p50
    %p52 = scmp.ne.s32.totalorder %s44, %s46
    %p53 = scmp.eq.s32.totalorder %s15, 1
    %p54 = por %p52, %p53
    %p55 = scmp.ne.s32.totalorder %s46, %s47
    %p56 = scmp.eq.s32.totalorder %s15, 0
    %p57 = por %p55, %p56
    %p58 = scmp.ne.s32.totalorder %s46, %s47
    %p59 = scmp.eq.s32.totalorder %s16, 1
    %p60 = por %p58, %p59
    %p62 = scmp.ne.s32.totalorder %s47, %s61
    %p63 = scmp.eq.s32.totalorder %s16, 0
    %p64 = por %p62, %p63
    %s65 = ssub.s32 %s10, %s17
    %p66 = scmp.eq.s32.totalorder %s65, 0
    %s68 = sadd.s32 %s67, 1
    %s69 = scalar_select %p66, %s67, %s68
    %p72 = pneg %p66
    %p73 = scmp.eq.s32.totalorder %s10, 1
    %p74 = por %p72, %p73
    %p75 = scmp.ne.s32.totalorder %s67, %s70
    %p76 = scmp.eq.s32.totalorder %s10, 0
    %p77 = por %p75, %p76
    %p78 = scmp.ne.s32.totalorder %s67, %s70
    %p79 = scmp.eq.s32.totalorder %s15, 1
    %p80 = por %p78, %p79
    %p81 = scmp.ne.s32.totalorder %s70, %s71
    %p82 = scmp.eq.s32.totalorder %s15, 0
    %p83 = por %p81, %p82
    %p84 = scmp.ne.s32.totalorder %s70, %s71
    %p85 = scmp.eq.s32.totalorder %s16, 1
    %p86 = por %p84, %p85
    %p88 = scmp.ne.s32.totalorder %s71, %s87
    %p89 = scmp.eq.s32.totalorder %s16, 0
    %p90 = por %p88, %p89
    %s91 = ssub.s32 %s10, %s17
    %p92 = scmp.eq.s32.totalorder %s91, 0
    %s94 = sadd.s32 %s93, 1
    %s95 = scalar_select %p92, %s93, %s94
    %p98 = pneg %p92
    %p99 = scmp.eq.s32.totalorder %s10, 1
    %p100 = por %p98, %p99
    %p101 = scmp.ne.s32.totalorder %s93, %s96
    %p102 = scmp.eq.s32.totalorder %s10, 0
    %p103 = por %p101, %p102
    %p104 = scmp.ne.s32.totalorder %s93, %s96
    %p105 = scmp.eq.s32.totalorder %s15, 1
    %p106 = por %p104, %p105
    %p107 = scmp.ne.s32.totalorder %s96, %s97
    %p108 = scmp.eq.s32.totalorder %s15, 0
    %p109 = por %p107, %p108
    %p110 = scmp.ne.s32.totalorder %s96, %s97
    %p111 = scmp.eq.s32.totalorder %s16, 1
    %p112 = por %p110, %p111
    %p114 = scmp.ne.s32.totalorder %s97, %s113
    %p115 = scmp.eq.s32.totalorder %s16, 0
    %p116 = por %p114, %p115
    %p117 = scmp.le.s32.totalorder 1, %s10
    %p118 = scmp.lt.s32.totalorder %s10, 3
    %p119 = pnand %p117, %p118
    %p120 = pneg %p119
    // Predicated region
    $region9: #{convolution_forward.3} parent=5 // pred_check
      _
    $region10: #{convolution_forward.3} parent=5 // pred_check_branch
      %122 = sbr.rel (%p119) target = $region12
    $region11: #{convolution_forward.3} parent=5 // pred_region
      %s123 = ssub.s32 %s10, 1
      // Predicated region
      $region13: #{convolution_forward.3} parent=11 // pred_check
        %p124 = pneg %p57
      $region14: #{convolution_forward.3} parent=11 // pred_check_branch
        %126 = sbr.rel (%p124) target = $region16
      $region15: #{convolution_forward.3} parent=11 // pred_region
        _
      $region16: #{convolution_forward.3} parent=11 // pred_fallthru
        _
    $region12: #{convolution_forward.3} parent=5 // pred_fallthru
      _
    %p127 = scmp.lt.s32.totalorder %s10, 2
    // Predicated region
    $region17: #{convolution_forward.3} parent=5 // pred_check
      %p128 = pneg %p127
    $region18: #{convolution_forward.3} parent=5 // pred_check_branch
      %130 = sbr.rel (%p128) target = $region20
    $region19: #{convolution_forward.3} parent=5 // pred_region
      // Predicated region
      $region21: #{convolution_forward.3} parent=19 // pred_check
        %p131 = pneg %p30
      $region22: #{convolution_forward.3} parent=19 // pred_check_branch
        %133 = sbr.rel (%p131) target = $region24
      $region23: #{convolution_forward.3} parent=19 // pred_region
        %p134 = scmp.lt.s32.totalorder %s10, 1
        %s135 = scalar_select %p134, %s10, 1
        %s136 = smul.addr %s135, 54
        %s137 = smul.addr %s136, 8
        %s138 = scalar_lea.vmem %s0, %s137
      $region24: #{convolution_forward.3} parent=19 // pred_fallthru
        _
    $region20: #{convolution_forward.3} parent=5 // pred_fallthru
      _
    %p139 = scmp.le.s32.totalorder 1, %s10
    %p140 = scmp.lt.s32.totalorder %s10, 3
    %p141 = pnand %p139, %p140
    %p142 = pneg %p141
    // Predicated region
    $region25: #{convolution_forward.3} parent=5 // pred_check
      _
    $region26: #{convolution_forward.3} parent=5 // pred_check_branch
      %144 = sbr.rel (%p141) target = $region28
    $region27: #{convolution_forward.3} parent=5 // pred_region
      %s145 = ssub.s32 %s10, 1
      %p146 = scmp.lt.s32.totalorder %s15, 1
      %s147 = scalar_select %p146, %s15, 1
      %s148 = smul.addr %s147, 54
      %s149 = smul.addr %s148, 8
      %s150 = scalar_lea.vmem %s0, %s149
      %p151 = pneg %p36
      %p152 = pneg %p33
      %p153 = pneg %p57
      %p154 = pneg %p54
      %p155 = pneg %p83
      %p156 = pneg %p80
      %p157 = scmp.lt.s32.totalorder %s15, 1
      %s158 = scalar_select %p157, %s15, 1
      %s159 = smul.addr %s158, 32
      %s160 = smul.addr %s159, 8
      %s161 = scalar_lea.vmem %s2, %s160
      %p162 = pneg %p109
      %p163 = pneg %p106
      %p164 = scmp.lt.s32.totalorder %s15, 1
      %s165 = scalar_select %p164, %s15, 1
      %s166 = smul.addr %s165, 2
      %s167 = scalar_lea.vmem %s3, %s166
      %p168 = scmp.lt.s32.totalorder %s15, 1
      %s169 = scalar_select %p168, %s15, 1
      %s170 = smul.addr %s169, 54
      %s171 = smul.addr %s170, 8
      %s172 = scalar_lea.vmem %s0, %s171
      %p173 = scmp.lt.s32.totalorder %s15, 1
      %s174 = scalar_select %p173, %s15, 1
      %s175 = smul.addr %s174, 32
      %s176 = smul.addr %s175, 8
      %s177 = scalar_lea.vmem %s2, %s176
      %p178 = scmp.lt.s32.totalorder %s15, 1
      %s179 = scalar_select %p178, %s15, 1
      %s180 = smul.addr %s179, 2
      %s181 = scalar_lea.vmem %s3, %s180
      %v182 = vld [vmem:[%s172] sm:$0xff]
      %v183 = vld [vmem:[%s172 + $0x8] sm:$0xff]
      %v184 = vld [vmem:[%s172 + $0x18] sm:$0xff]
      %v185 = vld [vmem:[%s172 + $0x20] sm:$0xff]
      %v186 = vld [vmem:[%s172 + $0x30] sm:$0xff]
      %v187 = vld [vmem:[%s172 + $0x38] sm:$0xff]
      %v188 = vld [vmem:[%s172 + $0x48] sm:$0xff]
      %v189 = vld [vmem:[%s172 + $0x50] sm:$0xff]
      %v190 = vld [vmem:[%s172 + $0x60] sm:$0xff]
      %v191 = vld [vmem:[%s172 + $0x68] sm:$0xff]
      %v192 = vld [vmem:[%s172 + $0x78] sm:$0xff]
      %v193 = vld [vmem:[%s172 + $0x80] sm:$0xff]
      %v194 = vld [vmem:[%s172 + $0x90] sm:$0xff]
      %v195 = vld [vmem:[%s172 + $0x98] sm:$0xff]
      %v196 = vld [vmem:[%s172 + $0xa8] sm:$0xff]
      %v197 = vld [vmem:[%s172 + $0xb0] sm:$0xff]
      %v198 = vld [vmem:[%s172 + $0xc0] sm:$0xff]
      %v199 = vld [vmem:[%s172 + $0xc8] sm:$0xff]
      %v200 = vld [vmem:[%s172 + $0xd8] sm:$0xff]
      %v201 = vld [vmem:[%s172 + $0xe0] sm:$0xff]
      %v202 = vld [vmem:[%s172 + $0xf0] sm:$0xff]
      %v203 = vld [vmem:[%s172 + $0xf8] sm:$0xff]
      %v204 = vld [vmem:[%s172 + $0x108] sm:$0xff]
      %v205 = vld [vmem:[%s172 + $0x110] sm:$0xff]
      %v206 = vld [vmem:[%s172 + $0x120] sm:$0xff]
      %v207 = vld [vmem:[%s172 + $0x128] sm:$0xff]
      %v208 = vld [vmem:[%s172 + $0x138] sm:$0xff]
      %v209 = vld [vmem:[%s172 + $0x140] sm:$0xff]
      %v210 = vld [vmem:[%s172 + $0x150] sm:$0xff]
      %v211 = vld [vmem:[%s172 + $0x158] sm:$0xff]
      %v212 = vld [vmem:[%s172 + $0x168] sm:$0xff]
      %v213 = vld [vmem:[%s172 + $0x170] sm:$0xff]
      %v214 = vld [vmem:[%s172 + $0x1] sm:$0xff]
      %v215 = vld [vmem:[%s172 + $0x9] sm:$0xff]
      %v216 = vld [vmem:[%s172 + $0x19] sm:$0xff]
      %v217 = vld [vmem:[%s172 + $0x21] sm:$0xff]
      %v218 = vld [vmem:[%s172 + $0x31] sm:$0xff]
      %v219 = vld [vmem:[%s172 + $0x39] sm:$0xff]
      %v220 = vld [vmem:[%s172 + $0x49] sm:$0xff]
      %v221 = vld [vmem:[%s172 + $0x51] sm:$0xff]
      %v222 = vld [vmem:[%s172 + $0x61] sm:$0xff]
      %v223 = vld [vmem:[%s172 + $0x69] sm:$0xff]
      %v224 = vld [vmem:[%s172 + $0x79] sm:$0xff]
      %v225 = vld [vmem:[%s172 + $0x81] sm:$0xff]
      %v226 = vld [vmem:[%s172 + $0x91] sm:$0xff]
      %v227 = vld [vmem:[%s172 + $0x99] sm:$0xff]
      %v228 = vld [vmem:[%s172 + $0xa9] sm:$0xff]
      %v229 = vld [vmem:[%s172 + $0xb1] sm:$0xff]
      %v230 = vld [vmem:[%s172 + $0xc1] sm:$0xff]
      %v231 = vld [vmem:[%s172 + $0xc9] sm:$0xff]
      %v232 = vld [vmem:[%s172 + $0xd9] sm:$0xff]
      %v233 = vld [vmem:[%s172 + $0xe1] sm:$0xff]
      %v234 = vld [vmem:[%s172 + $0xf1] sm:$0xff]
      %v235 = vld [vmem:[%s172 + $0xf9] sm:$0xff]
      %v236 = vld [vmem:[%s172 + $0x109] sm:$0xff]
      %v237 = vld [vmem:[%s172 + $0x111] sm:$0xff]
      %v238 = vld [vmem:[%s172 + $0x121] sm:$0xff]
      %v239 = vld [vmem:[%s172 + $0x129] sm:$0xff]
      %v240 = vld [vmem:[%s172 + $0x139] sm:$0xff]
      %v241 = vld [vmem:[%s172 + $0x141] sm:$0xff]
      %v242 = vld [vmem:[%s172 + $0x151] sm:$0xff]
      %v243 = vld [vmem:[%s172 + $0x159] sm:$0xff]
      %v244 = vld [vmem:[%s172 + $0x169] sm:$0xff]
      %v245 = vld [vmem:[%s172 + $0x171] sm:$0xff]
      %v246 = vld [vmem:[%s172 + $0x2] sm:$0xff]
      %v247 = vld [vmem:[%s172 + $0xa] sm:$0xff]
      %v248 = vld [vmem:[%s172 + $0x1a] sm:$0xff]
      %v249 = vld [vmem:[%s172 + $0x22] sm:$0xff]
      %v250 = vld [vmem:[%s172 + $0x32] sm:$0xff]
      %v251 = vld [vmem:[%s172 + $0x3a] sm:$0xff]
      %v252 = vld [vmem:[%s172 + $0x4a] sm:$0xff]
      %v253 = vld [vmem:[%s172 + $0x52] sm:$0xff]
      %v254 = vld [vmem:[%s172 + $0x62] sm:$0xff]
      %v255 = vld [vmem:[%s172 + $0x6a] sm:$0xff]
      %v256 = vld [vmem:[%s172 + $0x7a] sm:$0xff]
      %v257 = vld [vmem:[%s172 + $0x82] sm:$0xff]
      %v258 = vld [vmem:[%s172 + $0x92] sm:$0xff]
      %v259 = vld [vmem:[%s172 + $0x9a] sm:$0xff]
      %v260 = vld [vmem:[%s172 + $0xaa] sm:$0xff]
      %v261 = vld [vmem:[%s172 + $0xb2] sm:$0xff]
      %v262 = vld [vmem:[%s172 + $0xc2] sm:$0xff]
      %v263 = vld [vmem:[%s172 + $0xca] sm:$0xff]
      %v264 = vld [vmem:[%s172 + $0xda] sm:$0xff]
      %v265 = vld [vmem:[%s172 + $0xe2] sm:$0xff]
      %v266 = vld [vmem:[%s172 + $0xf2] sm:$0xff]
      %v267 = vld [vmem:[%s172 + $0xfa] sm:$0xff]
      %v268 = vld [vmem:[%s172 + $0x10a] sm:$0xff]
      %v269 = vld [vmem:[%s172 + $0x112] sm:$0xff]
      %v270 = vld [vmem:[%s172 + $0x122] sm:$0xff]
      %v271 = vld [vmem:[%s172 + $0x12a] sm:$0xff]
      %v272 = vld [vmem:[%s172 + $0x13a] sm:$0xff]
      %v273 = vld [vmem:[%s172 + $0x142] sm:$0xff]
      %v274 = vld [vmem:[%s172 + $0x152] sm:$0xff]
      %v275 = vld [vmem:[%s172 + $0x15a] sm:$0xff]
      %v276 = vld [vmem:[%s172 + $0x16a] sm:$0xff]
      %v277 = vld [vmem:[%s172 + $0x172] sm:$0xff]
      %s278 = scalar_lea.vmem %s172, 24
      %v279 = vld [vmem:[%s278] sm:$0xff]
      %v280 = vld [vmem:[%s278 + $0x8] sm:$0xff]
      %v281 = vld [vmem:[%s278 + $0x18] sm:$0xff]
      %v282 = vld [vmem:[%s278 + $0x20] sm:$0xff]
      %v283 = vld [vmem:[%s278 + $0x30] sm:$0xff]
      %v284 = vld [vmem:[%s278 + $0x38] sm:$0xff]
      %v285 = vld [vmem:[%s278 + $0x48] sm:$0xff]
      %v286 = vld [vmem:[%s278 + $0x50] sm:$0xff]
      %v287 = vld [vmem:[%s278 + $0x60] sm:$0xff]
      %v288 = vld [vmem:[%s278 + $0x68] sm:$0xff]
      %v289 = vld [vmem:[%s278 + $0x78] sm:$0xff]
      %v290 = vld [vmem:[%s278 + $0x80] sm:$0xff]
      %v291 = vld [vmem:[%s278 + $0x90] sm:$0xff]
      %v292 = vld [vmem:[%s278 + $0x98] sm:$0xff]
      %v293 = vld [vmem:[%s278 + $0xa8] sm:$0xff]
      %v294 = vld [vmem:[%s278 + $0xb0] sm:$0xff]
      %v295 = vld [vmem:[%s278 + $0xc0] sm:$0xff]
      %v296 = vld [vmem:[%s278 + $0xc8] sm:$0xff]
      %v297 = vld [vmem:[%s278 + $0xd8] sm:$0xff]
      %v298 = vld [vmem:[%s278 + $0xe0] sm:$0xff]
      %v299 = vld [vmem:[%s278 + $0xf0] sm:$0xff]
      %v300 = vld [vmem:[%s278 + $0xf8] sm:$0xff]
      %v301 = vld [vmem:[%s278 + $0x108] sm:$0xff]
      %v302 = vld [vmem:[%s278 + $0x110] sm:$0xff]
      %v303 = vld [vmem:[%s278 + $0x120] sm:$0xff]
      %v304 = vld [vmem:[%s278 + $0x128] sm:$0xff]
      %v305 = vld [vmem:[%s278 + $0x138] sm:$0xff]
      %v306 = vld [vmem:[%s278 + $0x140] sm:$0xff]
      %v307 = vld [vmem:[%s278 + $0x150] sm:$0xff]
      %v308 = vld [vmem:[%s278 + $0x158] sm:$0xff]
      %v309 = vld [vmem:[%s278 + $0x168] sm:$0xff]
      %v310 = vld [vmem:[%s278 + $0x170] sm:$0xff]
      %v311 = vld [vmem:[%s278 + $0x1] sm:$0xff]
      %v312 = vld [vmem:[%s278 + $0x9] sm:$0xff]
      %v313 = vld [vmem:[%s278 + $0x19] sm:$0xff]
      %v314 = vld [vmem:[%s278 + $0x21] sm:$0xff]
      %v315 = vld [vmem:[%s278 + $0x31] sm:$0xff]
      %v316 = vld [vmem:[%s278 + $0x39] sm:$0xff]
      %v317 = vld [vmem:[%s278 + $0x49] sm:$0xff]
      %v318 = vld [vmem:[%s278 + $0x51] sm:$0xff]
      %v319 = vld [vmem:[%s278 + $0x61] sm:$0xff]
      %v320 = vld [vmem:[%s278 + $0x69] sm:$0xff]
      %v321 = vld [vmem:[%s278 + $0x79] sm:$0xff]
      %v322 = vld [vmem:[%s278 + $0x81] sm:$0xff]
      %v323 = vld [vmem:[%s278 + $0x91] sm:$0xff]
      %v324 = vld [vmem:[%s278 + $0x99] sm:$0xff]
      %v325 = vld [vmem:[%s278 + $0xa9] sm:$0xff]
      %v326 = vld [vmem:[%s278 + $0xb1] sm:$0xff]
      %v327 = vld [vmem:[%s278 + $0xc1] sm:$0xff]
      %v328 = vld [vmem:[%s278 + $0xc9] sm:$0xff]
      %v329 = vld [vmem:[%s278 + $0xd9] sm:$0xff]
      %v330 = vld [vmem:[%s278 + $0xe1] sm:$0xff]
      %v331 = vld [vmem:[%s278 + $0xf1] sm:$0xff]
      %v332 = vld [vmem:[%s278 + $0xf9] sm:$0xff]
      %v333 = vld [vmem:[%s278 + $0x109] sm:$0xff]
      %v334 = vld [vmem:[%s278 + $0x111] sm:$0xff]
      %v335 = vld [vmem:[%s278 + $0x121] sm:$0xff]
      %v336 = vld [vmem:[%s278 + $0x129] sm:$0xff]
      %v337 = vld [vmem:[%s278 + $0x139] sm:$0xff]
      %v338 = vld [vmem:[%s278 + $0x141] sm:$0xff]
      %v339 = vld [vmem:[%s278 + $0x151] sm:$0xff]
      %v340 = vld [vmem:[%s278 + $0x159] sm:$0xff]
      %v341 = vld [vmem:[%s278 + $0x169] sm:$0xff]
      %v342 = vld [vmem:[%s278 + $0x171] sm:$0xff]
      %v343 = vld [vmem:[%s278 + $0x2] sm:$0xff]
      %v344 = vld [vmem:[%s278 + $0xa] sm:$0xff]
      %v345 = vld [vmem:[%s278 + $0x1a] sm:$0xff]
      %v346 = vld [vmem:[%s278 + $0x22] sm:$0xff]
      %v347 = vld [vmem:[%s278 + $0x32] sm:$0xff]
      %v348 = vld [vmem:[%s278 + $0x3a] sm:$0xff]
      %v349 = vld [vmem:[%s278 + $0x4a] sm:$0xff]
      %v350 = vld [vmem:[%s278 + $0x52] sm:$0xff]
      %v351 = vld [vmem:[%s278 + $0x62] sm:$0xff]
      %v352 = vld [vmem:[%s278 + $0x6a] sm:$0xff]
      %v353 = vld [vmem:[%s278 + $0x7a] sm:$0xff]
      %v354 = vld [vmem:[%s278 + $0x82] sm:$0xff]
      %v355 = vld [vmem:[%s278 + $0x92] sm:$0xff]
      %v356 = vld [vmem:[%s278 + $0x9a] sm:$0xff]
      %v357 = vld [vmem:[%s278 + $0xaa] sm:$0xff]
      %v358 = vld [vmem:[%s278 + $0xb2] sm:$0xff]
      %v359 = vld [vmem:[%s278 + $0xc2] sm:$0xff]
      %v360 = vld [vmem:[%s278 + $0xca] sm:$0xff]
      %v361 = vld [vmem:[%s278 + $0xda] sm:$0xff]
      %v362 = vld [vmem:[%s278 + $0xe2] sm:$0xff]
      %v363 = vld [vmem:[%s278 + $0xf2] sm:$0xff]
      %v364 = vld [vmem:[%s278 + $0xfa] sm:$0xff]
      %v365 = vld [vmem:[%s278 + $0x10a] sm:$0xff]
      %v366 = vld [vmem:[%s278 + $0x112] sm:$0xff]
      %v367 = vld [vmem:[%s278 + $0x122] sm:$0xff]
      %v368 = vld [vmem:[%s278 + $0x12a] sm:$0xff]
      %v369 = vld [vmem:[%s278 + $0x13a] sm:$0xff]
      %v370 = vld [vmem:[%s278 + $0x142] sm:$0xff]
      %v371 = vld [vmem:[%s278 + $0x152] sm:$0xff]
      %v372 = vld [vmem:[%s278 + $0x15a] sm:$0xff]
      %v373 = vld [vmem:[%s278 + $0x16a] sm:$0xff]
      %v374 = vld [vmem:[%s278 + $0x172] sm:$0xff]
      %s375 = scalar_lea.vmem %s172, 48
      %v376 = vld [vmem:[%s375] sm:$0xff]
      %v377 = vld [vmem:[%s375 + $0x8] sm:$0xff]
      %v378 = vld [vmem:[%s375 + $0x18] sm:$0xff]
      %v379 = vld [vmem:[%s375 + $0x20] sm:$0xff]
      %v380 = vld [vmem:[%s375 + $0x30] sm:$0xff]
      %v381 = vld [vmem:[%s375 + $0x38] sm:$0xff]
      %v382 = vld [vmem:[%s375 + $0x48] sm:$0xff]
      %v383 = vld [vmem:[%s375 + $0x50] sm:$0xff]
      %v384 = vld [vmem:[%s375 + $0x60] sm:$0xff]
      %v385 = vld [vmem:[%s375 + $0x68] sm:$0xff]
      %v386 = vld [vmem:[%s375 + $0x78] sm:$0xff]
      %v387 = vld [vmem:[%s375 + $0x80] sm:$0xff]
      %v388 = vld [vmem:[%s375 + $0x90] sm:$0xff]
      %v389 = vld [vmem:[%s375 + $0x98] sm:$0xff]
      %v390 = vld [vmem:[%s375 + $0xa8] sm:$0xff]
      %v391 = vld [vmem:[%s375 + $0xb0] sm:$0xff]
      %v392 = vld [vmem:[%s375 + $0xc0] sm:$0xff]
      %v393 = vld [vmem:[%s375 + $0xc8] sm:$0xff]
      %v394 = vld [vmem:[%s375 + $0xd8] sm:$0xff]
      %v395 = vld [vmem:[%s375 + $0xe0] sm:$0xff]
      %v396 = vld [vmem:[%s375 + $0xf0] sm:$0xff]
      %v397 = vld [vmem:[%s375 + $0xf8] sm:$0xff]
      %v398 = vld [vmem:[%s375 + $0x108] sm:$0xff]
      %v399 = vld [vmem:[%s375 + $0x110] sm:$0xff]
      %v400 = vld [vmem:[%s375 + $0x120] sm:$0xff]
      %v401 = vld [vmem:[%s375 + $0x128] sm:$0xff]
      %v402 = vld [vmem:[%s375 + $0x138] sm:$0xff]
      %v403 = vld [vmem:[%s375 + $0x140] sm:$0xff]
      %v404 = vld [vmem:[%s375 + $0x150] sm:$0xff]
      %v405 = vld [vmem:[%s375 + $0x158] sm:$0xff]
      %v406 = vld [vmem:[%s375 + $0x168] sm:$0xff]
      %v407 = vld [vmem:[%s375 + $0x170] sm:$0xff]
      %v408 = vld [vmem:[%s375 + $0x1] sm:$0xff]
      %v409 = vld [vmem:[%s375 + $0x9] sm:$0xff]
      %v410 = vld [vmem:[%s375 + $0x19] sm:$0xff]
      %v411 = vld [vmem:[%s375 + $0x21] sm:$0xff]
      %v412 = vld [vmem:[%s375 + $0x31] sm:$0xff]
      %v413 = vld [vmem:[%s375 + $0x39] sm:$0xff]
      %v414 = vld [vmem:[%s375 + $0x49] sm:$0xff]
      %v415 = vld [vmem:[%s375 + $0x51] sm:$0xff]
      %v416 = vld [vmem:[%s375 + $0x61] sm:$0xff]
      %v417 = vld [vmem:[%s375 + $0x69] sm:$0xff]
      %v418 = vld [vmem:[%s375 + $0x79] sm:$0xff]
      %v419 = vld [vmem:[%s375 + $0x81] sm:$0xff]
      %v420 = vld [vmem:[%s375 + $0x91] sm:$0xff]
      %v421 = vld [vmem:[%s375 + $0x99] sm:$0xff]
      %v422 = vld [vmem:[%s375 + $0xa9] sm:$0xff]
      %v423 = vld [vmem:[%s375 + $0xb1] sm:$0xff]
      %v424 = vld [vmem:[%s375 + $0xc1] sm:$0xff]
      %v425 = vld [vmem:[%s375 + $0xc9] sm:$0xff]
      %v426 = vld [vmem:[%s375 + $0xd9] sm:$0xff]
      %v427 = vld [vmem:[%s375 + $0xe1] sm:$0xff]
      %v428 = vld [vmem:[%s375 + $0xf1] sm:$0xff]
      %v429 = vld [vmem:[%s375 + $0xf9] sm:$0xff]
      %v430 = vld [vmem:[%s375 + $0x109] sm:$0xff]
      %v431 = vld [vmem:[%s375 + $0x111] sm:$0xff]
      %v432 = vld [vmem:[%s375 + $0x121] sm:$0xff]
      %v433 = vld [vmem:[%s375 + $0x129] sm:$0xff]
      %v434 = vld [vmem:[%s375 + $0x139] sm:$0xff]
      %v435 = vld [vmem:[%s375 + $0x141] sm:$0xff]
      %v436 = vld [vmem:[%s375 + $0x151] sm:$0xff]
      %v437 = vld [vmem:[%s375 + $0x159] sm:$0xff]
      %v438 = vld [vmem:[%s375 + $0x169] sm:$0xff]
      %v439 = vld [vmem:[%s375 + $0x171] sm:$0xff]
      %v440 = vld [vmem:[%s375 + $0x2] sm:$0xff]
      %v441 = vld [vmem:[%s375 + $0xa] sm:$0xff]
      %v442 = vld [vmem:[%s375 + $0x1a] sm:$0xff]
      %v443 = vld [vmem:[%s375 + $0x22] sm:$0xff]
      %v444 = vld [vmem:[%s375 + $0x32] sm:$0xff]
      %v445 = vld [vmem:[%s375 + $0x3a] sm:$0xff]
      %v446 = vld [vmem:[%s375 + $0x4a] sm:$0xff]
      %v447 = vld [vmem:[%s375 + $0x52] sm:$0xff]
      %v448 = vld [vmem:[%s375 + $0x62] sm:$0xff]
      %v449 = vld [vmem:[%s375 + $0x6a] sm:$0xff]
      %v450 = vld [vmem:[%s375 + $0x7a] sm:$0xff]
      %v451 = vld [vmem:[%s375 + $0x82] sm:$0xff]
      %v452 = vld [vmem:[%s375 + $0x92] sm:$0xff]
      %v453 = vld [vmem:[%s375 + $0x9a] sm:$0xff]
      %v454 = vld [vmem:[%s375 + $0xaa] sm:$0xff]
      %v455 = vld [vmem:[%s375 + $0xb2] sm:$0xff]
      %v456 = vld [vmem:[%s375 + $0xc2] sm:$0xff]
      %v457 = vld [vmem:[%s375 + $0xca] sm:$0xff]
      %v458 = vld [vmem:[%s375 + $0xda] sm:$0xff]
      %v459 = vld [vmem:[%s375 + $0xe2] sm:$0xff]
      %v460 = vld [vmem:[%s375 + $0xf2] sm:$0xff]
      %v461 = vld [vmem:[%s375 + $0xfa] sm:$0xff]
      %v462 = vld [vmem:[%s375 + $0x10a] sm:$0xff]
      %v463 = vld [vmem:[%s375 + $0x112] sm:$0xff]
      %v464 = vld [vmem:[%s375 + $0x122] sm:$0xff]
      %v465 = vld [vmem:[%s375 + $0x12a] sm:$0xff]
      %v466 = vld [vmem:[%s375 + $0x13a] sm:$0xff]
      %v467 = vld [vmem:[%s375 + $0x142] sm:$0xff]
      %v468 = vld [vmem:[%s375 + $0x152] sm:$0xff]
      %v469 = vld [vmem:[%s375 + $0x15a] sm:$0xff]
      %v470 = vld [vmem:[%s375 + $0x16a] sm:$0xff]
      %v471 = vld [vmem:[%s375 + $0x172] sm:$0xff]
      %504 = vrot.lane.b32.xlu0 %v214, 4
      %v505 = vpop.permute.xlu0 %504
      %506 = vrot.lane.b32.xlu0 %v215, 4
      %v507 = vpop.permute.xlu0 %506
      %508 = vrot.lane.b32.xlu0 %v216, 4
      %v509 = vpop.permute.xlu0 %508
      %510 = vrot.lane.b32.xlu0 %v217, 4
      %v511 = vpop.permute.xlu0 %510
      %512 = vrot.lane.b32.xlu0 %v218, 4
      %v513 = vpop.permute.xlu0 %512
      %514 = vrot.lane.b32.xlu0 %v219, 4
      %v515 = vpop.permute.xlu0 %514
      %516 = vrot.lane.b32.xlu0 %v220, 4
      %v517 = vpop.permute.xlu0 %516
      %518 = vrot.lane.b32.xlu0 %v221, 4
      %v519 = vpop.permute.xlu0 %518
      %520 = vrot.lane.b32.xlu0 %v222, 4
      %v521 = vpop.permute.xlu0 %520
      %522 = vrot.lane.b32.xlu0 %v223, 4
      %v523 = vpop.permute.xlu0 %522
      %524 = vrot.lane.b32.xlu0 %v224, 4
      %v525 = vpop.permute.xlu0 %524
      %526 = vrot.lane.b32.xlu0 %v225, 4
      %v527 = vpop.permute.xlu0 %526
      %528 = vrot.lane.b32.xlu0 %v226, 4
      %v529 = vpop.permute.xlu0 %528
      %530 = vrot.lane.b32.xlu0 %v227, 4
      %v531 = vpop.permute.xlu0 %530
      %532 = vrot.lane.b32.xlu0 %v228, 4
      %v533 = vpop.permute.xlu0 %532
      %534 = vrot.lane.b32.xlu0 %v229, 4
      %v535 = vpop.permute.xlu0 %534
      %536 = vrot.lane.b32.xlu0 %v230, 4
      %v537 = vpop.permute.xlu0 %536
      %538 = vrot.lane.b32.xlu0 %v231, 4
      %v539 = vpop.permute.xlu0 %538
      %540 = vrot.lane.b32.xlu0 %v232, 4
      %v541 = vpop.permute.xlu0 %540
      %542 = vrot.lane.b32.xlu0 %v233, 4
      %v543 = vpop.permute.xlu0 %542
      %544 = vrot.lane.b32.xlu0 %v234, 4
      %v545 = vpop.permute.xlu0 %544
      %546 = vrot.lane.b32.xlu0 %v235, 4
      %v547 = vpop.permute.xlu0 %546
      %548 = vrot.lane.b32.xlu0 %v236, 4
      %v549 = vpop.permute.xlu0 %548
      %550 = vrot.lane.b32.xlu0 %v237, 4
      %v551 = vpop.permute.xlu0 %550
      %552 = vrot.lane.b32.xlu0 %v238, 4
      %v553 = vpop.permute.xlu0 %552
      %554 = vrot.lane.b32.xlu0 %v239, 4
      %v555 = vpop.permute.xlu0 %554
      %556 = vrot.lane.b32.xlu0 %v240, 4
      %v557 = vpop.permute.xlu0 %556
      %558 = vrot.lane.b32.xlu0 %v241, 4
      %v559 = vpop.permute.xlu0 %558
      %560 = vrot.lane.b32.xlu0 %v242, 4
      %v561 = vpop.permute.xlu0 %560
      %562 = vrot.lane.b32.xlu0 %v243, 4
      %v563 = vpop.permute.xlu0 %562
      %564 = vrot.lane.b32.xlu0 %v244, 4
      %v565 = vpop.permute.xlu0 %564
      %566 = vrot.lane.b32.xlu0 %v245, 4
      %v567 = vpop.permute.xlu0 %566
      %632 = vrot.lane.b32.xlu0 %v246, 8
      %v633 = vpop.permute.xlu0 %632
      %634 = vrot.lane.b32.xlu0 %v247, 8
      %v635 = vpop.permute.xlu0 %634
      %636 = vrot.lane.b32.xlu0 %v248, 8
      %v637 = vpop.permute.xlu0 %636
      %638 = vrot.lane.b32.xlu0 %v249, 8
      %v639 = vpop.permute.xlu0 %638
      %640 = vrot.lane.b32.xlu0 %v250, 8
      %v641 = vpop.permute.xlu0 %640
      %642 = vrot.lane.b32.xlu0 %v251, 8
      %v643 = vpop.permute.xlu0 %642
      %644 = vrot.lane.b32.xlu0 %v252, 8
      %v645 = vpop.permute.xlu0 %644
      %646 = vrot.lane.b32.xlu0 %v253, 8
      %v647 = vpop.permute.xlu0 %646
      %648 = vrot.lane.b32.xlu0 %v254, 8
      %v649 = vpop.permute.xlu0 %648
      %650 = vrot.lane.b32.xlu0 %v255, 8
      %v651 = vpop.permute.xlu0 %650
      %652 = vrot.lane.b32.xlu0 %v256, 8
      %v653 = vpop.permute.xlu0 %652
      %654 = vrot.lane.b32.xlu0 %v257, 8
      %v655 = vpop.permute.xlu0 %654
      %656 = vrot.lane.b32.xlu0 %v258, 8
      %v657 = vpop.permute.xlu0 %656
      %658 = vrot.lane.b32.xlu0 %v259, 8
      %v659 = vpop.permute.xlu0 %658
      %660 = vrot.lane.b32.xlu0 %v260, 8
      %v661 = vpop.permute.xlu0 %660
      %662 = vrot.lane.b32.xlu0 %v261, 8
      %v663 = vpop.permute.xlu0 %662
      %664 = vrot.lane.b32.xlu0 %v262, 8
      %v665 = vpop.permute.xlu0 %664
      %666 = vrot.lane.b32.xlu0 %v263, 8
      %v667 = vpop.permute.xlu0 %666
      %668 = vrot.lane.b32.xlu0 %v264, 8
      %v669 = vpop.permute.xlu0 %668
      %670 = vrot.lane.b32.xlu0 %v265, 8
      %v671 = vpop.permute.xlu0 %670
      %672 = vrot.lane.b32.xlu0 %v266, 8
      %v673 = vpop.permute.xlu0 %672
      %674 = vrot.lane.b32.xlu0 %v267, 8
      %v675 = vpop.permute.xlu0 %674
      %676 = vrot.lane.b32.xlu0 %v268, 8
      %v677 = vpop.permute.xlu0 %676
      %678 = vrot.lane.b32.xlu0 %v269, 8
      %v679 = vpop.permute.xlu0 %678
      %680 = vrot.lane.b32.xlu0 %v270, 8
      %v681 = vpop.permute.xlu0 %680
      %682 = vrot.lane.b32.xlu0 %v271, 8
      %v683 = vpop.permute.xlu0 %682
      %684 = vrot.lane.b32.xlu0 %v272, 8
      %v685 = vpop.permute.xlu0 %684
      %686 = vrot.lane.b32.xlu0 %v273, 8
      %v687 = vpop.permute.xlu0 %686
      %688 = vrot.lane.b32.xlu0 %v274, 8
      %v689 = vpop.permute.xlu0 %688
      %690 = vrot.lane.b32.xlu0 %v275, 8
      %v691 = vpop.permute.xlu0 %690
      %692 = vrot.lane.b32.xlu0 %v276, 8
      %v693 = vpop.permute.xlu0 %692
      %694 = vrot.lane.b32.xlu0 %v277, 8
      %v695 = vpop.permute.xlu0 %694
      %760 = vrot.lane.b32.xlu0 %v279, 12
      %v761 = vpop.permute.xlu0 %760
      %762 = vrot.lane.b32.xlu0 %v280, 12
      %v763 = vpop.permute.xlu0 %762
      %764 = vrot.lane.b32.xlu0 %v281, 12
      %v765 = vpop.permute.xlu0 %764
      %766 = vrot.lane.b32.xlu0 %v282, 12
      %v767 = vpop.permute.xlu0 %766
      %768 = vrot.lane.b32.xlu0 %v283, 12
      %v769 = vpop.permute.xlu0 %768
      %770 = vrot.lane.b32.xlu0 %v284, 12
      %v771 = vpop.permute.xlu0 %770
      %772 = vrot.lane.b32.xlu0 %v285, 12
      %v773 = vpop.permute.xlu0 %772
      %774 = vrot.lane.b32.xlu0 %v286, 12
      %v775 = vpop.permute.xlu0 %774
      %776 = vrot.lane.b32.xlu0 %v287, 12
      %v777 = vpop.permute.xlu0 %776
      %778 = vrot.lane.b32.xlu0 %v288, 12
      %v779 = vpop.permute.xlu0 %778
      %780 = vrot.lane.b32.xlu0 %v289, 12
      %v781 = vpop.permute.xlu0 %780
      %782 = vrot.lane.b32.xlu0 %v290, 12
      %v783 = vpop.permute.xlu0 %782
      %784 = vrot.lane.b32.xlu0 %v291, 12
      %v785 = vpop.permute.xlu0 %784
      %786 = vrot.lane.b32.xlu0 %v292, 12
      %v787 = vpop.permute.xlu0 %786
      %788 = vrot.lane.b32.xlu0 %v293, 12
      %v789 = vpop.permute.xlu0 %788
      %790 = vrot.lane.b32.xlu0 %v294, 12
      %v791 = vpop.permute.xlu0 %790
      %792 = vrot.lane.b32.xlu0 %v295, 12
      %v793 = vpop.permute.xlu0 %792
      %794 = vrot.lane.b32.xlu0 %v296, 12
      %v795 = vpop.permute.xlu0 %794
      %796 = vrot.lane.b32.xlu0 %v297, 12
      %v797 = vpop.permute.xlu0 %796
      %798 = vrot.lane.b32.xlu0 %v298, 12
      %v799 = vpop.permute.xlu0 %798
      %800 = vrot.lane.b32.xlu0 %v299, 12
      %v801 = vpop.permute.xlu0 %800
      %802 = vrot.lane.b32.xlu0 %v300, 12
      %v803 = vpop.permute.xlu0 %802
      %804 = vrot.lane.b32.xlu0 %v301, 12
      %v805 = vpop.permute.xlu0 %804
      %806 = vrot.lane.b32.xlu0 %v302, 12
      %v807 = vpop.permute.xlu0 %806
      %808 = vrot.lane.b32.xlu0 %v303, 12
      %v809 = vpop.permute.xlu0 %808
      %810 = vrot.lane.b32.xlu0 %v304, 12
      %v811 = vpop.permute.xlu0 %810
      %812 = vrot.lane.b32.xlu0 %v305, 12
      %v813 = vpop.permute.xlu0 %812
      %814 = vrot.lane.b32.xlu0 %v306, 12
      %v815 = vpop.permute.xlu0 %814
      %816 = vrot.lane.b32.xlu0 %v307, 12
      %v817 = vpop.permute.xlu0 %816
      %818 = vrot.lane.b32.xlu0 %v308, 12
      %v819 = vpop.permute.xlu0 %818
      %820 = vrot.lane.b32.xlu0 %v309, 12
      %v821 = vpop.permute.xlu0 %820
      %822 = vrot.lane.b32.xlu0 %v310, 12
      %v823 = vpop.permute.xlu0 %822
      %888 = vrot.lane.b32.xlu0 %v311, 16
      %v889 = vpop.permute.xlu0 %888
      %890 = vrot.lane.b32.xlu0 %v312, 16
      %v891 = vpop.permute.xlu0 %890
      %892 = vrot.lane.b32.xlu0 %v313, 16
      %v893 = vpop.permute.xlu0 %892
      %894 = vrot.lane.b32.xlu0 %v314, 16
      %v895 = vpop.permute.xlu0 %894
      %896 = vrot.lane.b32.xlu0 %v315, 16
      %v897 = vpop.permute.xlu0 %896
      %898 = vrot.lane.b32.xlu0 %v316, 16
      %v899 = vpop.permute.xlu0 %898
      %900 = vrot.lane.b32.xlu0 %v317, 16
      %v901 = vpop.permute.xlu0 %900
      %902 = vrot.lane.b32.xlu0 %v318, 16
      %v903 = vpop.permute.xlu0 %902
      %904 = vrot.lane.b32.xlu0 %v319, 16
      %v905 = vpop.permute.xlu0 %904
      %906 = vrot.lane.b32.xlu0 %v320, 16
      %v907 = vpop.permute.xlu0 %906
      %908 = vrot.lane.b32.xlu0 %v321, 16
      %v909 = vpop.permute.xlu0 %908
      %910 = vrot.lane.b32.xlu0 %v322, 16
      %v911 = vpop.permute.xlu0 %910
      %912 = vrot.lane.b32.xlu0 %v323, 16
      %v913 = vpop.permute.xlu0 %912
      %914 = vrot.lane.b32.xlu0 %v324, 16
      %v915 = vpop.permute.xlu0 %914
      %916 = vrot.lane.b32.xlu0 %v325, 16
      %v917 = vpop.permute.xlu0 %916
      %918 = vrot.lane.b32.xlu0 %v326, 16
      %v919 = vpop.permute.xlu0 %918
      %920 = vrot.lane.b32.xlu0 %v327, 16
      %v921 = vpop.permute.xlu0 %920
      %922 = vrot.lane.b32.xlu0 %v328, 16
      %v923 = vpop.permute.xlu0 %922
      %924 = vrot.lane.b32.xlu0 %v329, 16
      %v925 = vpop.permute.xlu0 %924
      %926 = vrot.lane.b32.xlu0 %v330, 16
      %v927 = vpop.permute.xlu0 %926
      %928 = vrot.lane.b32.xlu0 %v331, 16
      %v929 = vpop.permute.xlu0 %928
      %930 = vrot.lane.b32.xlu0 %v332, 16
      %v931 = vpop.permute.xlu0 %930
      %932 = vrot.lane.b32.xlu0 %v333, 16
      %v933 = vpop.permute.xlu0 %932
      %934 = vrot.lane.b32.xlu0 %v334, 16
      %v935 = vpop.permute.xlu0 %934
      %936 = vrot.lane.b32.xlu0 %v335, 16
      %v937 = vpop.permute.xlu0 %936
      %938 = vrot.lane.b32.xlu0 %v336, 16
      %v939 = vpop.permute.xlu0 %938
      %940 = vrot.lane.b32.xlu0 %v337, 16
      %v941 = vpop.permute.xlu0 %940
      %942 = vrot.lane.b32.xlu0 %v338, 16
      %v943 = vpop.permute.xlu0 %942
      %944 = vrot.lane.b32.xlu0 %v339, 16
      %v945 = vpop.permute.xlu0 %944
      %946 = vrot.lane.b32.xlu0 %v340, 16
      %v947 = vpop.permute.xlu0 %946
      %948 = vrot.lane.b32.xlu0 %v341, 16
      %v949 = vpop.permute.xlu0 %948
      %950 = vrot.lane.b32.xlu0 %v342, 16
      %v951 = vpop.permute.xlu0 %950
      %1016 = vrot.lane.b32.xlu0 %v343, 20
      %v1017 = vpop.permute.xlu0 %1016
      %1018 = vrot.lane.b32.xlu0 %v344, 20
      %v1019 = vpop.permute.xlu0 %1018
      %1020 = vrot.lane.b32.xlu0 %v345, 20
      %v1021 = vpop.permute.xlu0 %1020
      %1022 = vrot.lane.b32.xlu0 %v346, 20
      %v1023 = vpop.permute.xlu0 %1022
      %1024 = vrot.lane.b32.xlu0 %v347, 20
      %v1025 = vpop.permute.xlu0 %1024
      %1026 = vrot.lane.b32.xlu0 %v348, 20
      %v1027 = vpop.permute.xlu0 %1026
      %1028 = vrot.lane.b32.xlu0 %v349, 20
      %v1029 = vpop.permute.xlu0 %1028
      %1030 = vrot.lane.b32.xlu0 %v350, 20
      %v1031 = vpop.permute.xlu0 %1030
      %1032 = vrot.lane.b32.xlu0 %v351, 20
      %v1033 = vpop.permute.xlu0 %1032
      %1034 = vrot.lane.b32.xlu0 %v352, 20
      %v1035 = vpop.permute.xlu0 %1034
      %1036 = vrot.lane.b32.xlu0 %v353, 20
      %v1037 = vpop.permute.xlu0 %1036
      %1038 = vrot.lane.b32.xlu0 %v354, 20
      %v1039 = vpop.permute.xlu0 %1038
      %1040 = vrot.lane.b32.xlu0 %v355, 20
      %v1041 = vpop.permute.xlu0 %1040
      %1042 = vrot.lane.b32.xlu0 %v356, 20
      %v1043 = vpop.permute.xlu0 %1042
      %1044 = vrot.lane.b32.xlu0 %v357, 20
      %v1045 = vpop.permute.xlu0 %1044
      %1046 = vrot.lane.b32.xlu0 %v358, 20
      %v1047 = vpop.permute.xlu0 %1046
      %1048 = vrot.lane.b32.xlu0 %v359, 20
      %v1049 = vpop.permute.xlu0 %1048
      %1050 = vrot.lane.b32.xlu0 %v360, 20
      %v1051 = vpop.permute.xlu0 %1050
      %1052 = vrot.lane.b32.xlu0 %v361, 20
      %v1053 = vpop.permute.xlu0 %1052
      %1054 = vrot.lane.b32.xlu0 %v362, 20
      %v1055 = vpop.permute.xlu0 %1054
      %1056 = vrot.lane.b32.xlu0 %v363, 20
      %v1057 = vpop.permute.xlu0 %1056
      %1058 = vrot.lane.b32.xlu0 %v364, 20
      %v1059 = vpop.permute.xlu0 %1058
      %1060 = vrot.lane.b32.xlu0 %v365, 20
      %v1061 = vpop.permute.xlu0 %1060
      %1062 = vrot.lane.b32.xlu0 %v366, 20
      %v1063 = vpop.permute.xlu0 %1062
      %1064 = vrot.lane.b32.xlu0 %v367, 20
      %v1065 = vpop.permute.xlu0 %1064
      %1066 = vrot.lane.b32.xlu0 %v368, 20
      %v1067 = vpop.permute.xlu0 %1066
      %1068 = vrot.lane.b32.xlu0 %v369, 20
      %v1069 = vpop.permute.xlu0 %1068
      %1070 = vrot.lane.b32.xlu0 %v370, 20
      %v1071 = vpop.permute.xlu0 %1070
      %1072 = vrot.lane.b32.xlu0 %v371, 20
      %v1073 = vpop.permute.xlu0 %1072
      %1074 = vrot.lane.b32.xlu0 %v372, 20
      %v1075 = vpop.permute.xlu0 %1074
      %1076 = vrot.lane.b32.xlu0 %v373, 20
      %v1077 = vpop.permute.xlu0 %1076
      %1078 = vrot.lane.b32.xlu0 %v374, 20
      %v1079 = vpop.permute.xlu0 %1078
      %1144 = vrot.lane.b32.xlu0 %v376, 24
      %v1145 = vpop.permute.xlu0 %1144
      %1146 = vrot.lane.b32.xlu0 %v377, 24
      %v1147 = vpop.permute.xlu0 %1146
      %1148 = vrot.lane.b32.xlu0 %v378, 24
      %v1149 = vpop.permute.xlu0 %1148
      %1150 = vrot.lane.b32.xlu0 %v379, 24
      %v1151 = vpop.permute.xlu0 %1150
      %1152 = vrot.lane.b32.xlu0 %v380, 24
      %v1153 = vpop.permute.xlu0 %1152
      %1154 = vrot.lane.b32.xlu0 %v381, 24
      %v1155 = vpop.permute.xlu0 %1154
      %1156 = vrot.lane.b32.xlu0 %v382, 24
      %v1157 = vpop.permute.xlu0 %1156
      %1158 = vrot.lane.b32.xlu0 %v383, 24
      %v1159 = vpop.permute.xlu0 %1158
      %1160 = vrot.lane.b32.xlu0 %v384, 24
      %v1161 = vpop.permute.xlu0 %1160
      %1162 = vrot.lane.b32.xlu0 %v385, 24
      %v1163 = vpop.permute.xlu0 %1162
      %1164 = vrot.lane.b32.xlu0 %v386, 24
      %v1165 = vpop.permute.xlu0 %1164
      %1166 = vrot.lane.b32.xlu0 %v387, 24
      %v1167 = vpop.permute.xlu0 %1166
      %1168 = vrot.lane.b32.xlu0 %v388, 24
      %v1169 = vpop.permute.xlu0 %1168
      %1170 = vrot.lane.b32.xlu0 %v389, 24
      %v1171 = vpop.permute.xlu0 %1170
      %1172 = vrot.lane.b32.xlu0 %v390, 24
      %v1173 = vpop.permute.xlu0 %1172
      %1174 = vrot.lane.b32.xlu0 %v391, 24
      %v1175 = vpop.permute.xlu0 %1174
      %1176 = vrot.lane.b32.xlu0 %v392, 24
      %v1177 = vpop.permute.xlu0 %1176
      %1178 = vrot.lane.b32.xlu0 %v393, 24
      %v1179 = vpop.permute.xlu0 %1178
      %1180 = vrot.lane.b32.xlu0 %v394, 24
      %v1181 = vpop.permute.xlu0 %1180
      %1182 = vrot.lane.b32.xlu0 %v395, 24
      %v1183 = vpop.permute.xlu0 %1182
      %1184 = vrot.lane.b32.xlu0 %v396, 24
      %v1185 = vpop.permute.xlu0 %1184
      %1186 = vrot.lane.b32.xlu0 %v397, 24
      %v1187 = vpop.permute.xlu0 %1186
      %1188 = vrot.lane.b32.xlu0 %v398, 24
      %v1189 = vpop.permute.xlu0 %1188
      %1190 = vrot.lane.b32.xlu0 %v399, 24
      %v1191 = vpop.permute.xlu0 %1190
      %1192 = vrot.lane.b32.xlu0 %v400, 24
      %v1193 = vpop.permute.xlu0 %1192
      %1194 = vrot.lane.b32.xlu0 %v401, 24
      %v1195 = vpop.permute.xlu0 %1194
      %1196 = vrot.lane.b32.xlu0 %v402, 24
      %v1197 = vpop.permute.xlu0 %1196
      %1198 = vrot.lane.b32.xlu0 %v403, 24
      %v1199 = vpop.permute.xlu0 %1198
      %1200 = vrot.lane.b32.xlu0 %v404, 24
      %v1201 = vpop.permute.xlu0 %1200
      %1202 = vrot.lane.b32.xlu0 %v405, 24
      %v1203 = vpop.permute.xlu0 %1202
      %1204 = vrot.lane.b32.xlu0 %v406, 24
      %v1205 = vpop.permute.xlu0 %1204
      %1206 = vrot.lane.b32.xlu0 %v407, 24
      %v1207 = vpop.permute.xlu0 %1206
      %1272 = vrot.lane.b32.xlu0 %v408, 28
      %v1273 = vpop.permute.xlu0 %1272
      %1274 = vrot.lane.b32.xlu0 %v409, 28
      %v1275 = vpop.permute.xlu0 %1274
      %1276 = vrot.lane.b32.xlu0 %v410, 28
      %v1277 = vpop.permute.xlu0 %1276
      %1278 = vrot.lane.b32.xlu0 %v411, 28
      %v1279 = vpop.permute.xlu0 %1278
      %1280 = vrot.lane.b32.xlu0 %v412, 28
      %v1281 = vpop.permute.xlu0 %1280
      %1282 = vrot.lane.b32.xlu0 %v413, 28
      %v1283 = vpop.permute.xlu0 %1282
      %1284 = vrot.lane.b32.xlu0 %v414, 28
      %v1285 = vpop.permute.xlu0 %1284
      %1286 = vrot.lane.b32.xlu0 %v415, 28
      %v1287 = vpop.permute.xlu0 %1286
      %1288 = vrot.lane.b32.xlu0 %v416, 28
      %v1289 = vpop.permute.xlu0 %1288
      %1290 = vrot.lane.b32.xlu0 %v417, 28
      %v1291 = vpop.permute.xlu0 %1290
      %1292 = vrot.lane.b32.xlu0 %v418, 28
      %v1293 = vpop.permute.xlu0 %1292
      %1294 = vrot.lane.b32.xlu0 %v419, 28
      %v1295 = vpop.permute.xlu0 %1294
      %1296 = vrot.lane.b32.xlu0 %v420, 28
      %v1297 = vpop.permute.xlu0 %1296
      %1298 = vrot.lane.b32.xlu0 %v421, 28
      %v1299 = vpop.permute.xlu0 %1298
      %1300 = vrot.lane.b32.xlu0 %v422, 28
      %v1301 = vpop.permute.xlu0 %1300
      %1302 = vrot.lane.b32.xlu0 %v423, 28
      %v1303 = vpop.permute.xlu0 %1302
      %1304 = vrot.lane.b32.xlu0 %v424, 28
      %v1305 = vpop.permute.xlu0 %1304
      %1306 = vrot.lane.b32.xlu0 %v425, 28
      %v1307 = vpop.permute.xlu0 %1306
      %1308 = vrot.lane.b32.xlu0 %v426, 28
      %v1309 = vpop.permute.xlu0 %1308
      %1310 = vrot.lane.b32.xlu0 %v427, 28
      %v1311 = vpop.permute.xlu0 %1310
      %1312 = vrot.lane.b32.xlu0 %v428, 28
      %v1313 = vpop.permute.xlu0 %1312
      %1314 = vrot.lane.b32.xlu0 %v429, 28
      %v1315 = vpop.permute.xlu0 %1314
      %1316 = vrot.lane.b32.xlu0 %v430, 28
      %v1317 = vpop.permute.xlu0 %1316
      %1318 = vrot.lane.b32.xlu0 %v431, 28
      %v1319 = vpop.permute.xlu0 %1318
      %1320 = vrot.lane.b32.xlu0 %v432, 28
      %v1321 = vpop.permute.xlu0 %1320
      %1322 = vrot.lane.b32.xlu0 %v433, 28
      %v1323 = vpop.permute.xlu0 %1322
      %1324 = vrot.lane.b32.xlu0 %v434, 28
      %v1325 = vpop.permute.xlu0 %1324
      %1326 = vrot.lane.b32.xlu0 %v435, 28
      %v1327 = vpop.permute.xlu0 %1326
      %1328 = vrot.lane.b32.xlu0 %v436, 28
      %v1329 = vpop.permute.xlu0 %1328
      %1330 = vrot.lane.b32.xlu0 %v437, 28
      %v1331 = vpop.permute.xlu0 %1330
      %1332 = vrot.lane.b32.xlu0 %v438, 28
      %v1333 = vpop.permute.xlu0 %1332
      %1334 = vrot.lane.b32.xlu0 %v439, 28
      %v1335 = vpop.permute.xlu0 %1334
      %1400 = vrot.lane.b32.xlu0 %v440, 32
      %v1401 = vpop.permute.xlu0 %1400
      %1402 = vrot.lane.b32.xlu0 %v441, 32
      %v1403 = vpop.permute.xlu0 %1402
      %1404 = vrot.lane.b32.xlu0 %v442, 32
      %v1405 = vpop.permute.xlu0 %1404
      %1406 = vrot.lane.b32.xlu0 %v443, 32
      %v1407 = vpop.permute.xlu0 %1406
      %1408 = vrot.lane.b32.xlu0 %v444, 32
      %v1409 = vpop.permute.xlu0 %1408
      %1410 = vrot.lane.b32.xlu0 %v445, 32
      %v1411 = vpop.permute.xlu0 %1410
      %1412 = vrot.lane.b32.xlu0 %v446, 32
      %v1413 = vpop.permute.xlu0 %1412
      %1414 = vrot.lane.b32.xlu0 %v447, 32
      %v1415 = vpop.permute.xlu0 %1414
      %1416 = vrot.lane.b32.xlu0 %v448, 32
      %v1417 = vpop.permute.xlu0 %1416
      %1418 = vrot.lane.b32.xlu0 %v449, 32
      %v1419 = vpop.permute.xlu0 %1418
      %1420 = vrot.lane.b32.xlu0 %v450, 32
      %v1421 = vpop.permute.xlu0 %1420
      %1422 = vrot.lane.b32.xlu0 %v451, 32
      %v1423 = vpop.permute.xlu0 %1422
      %1424 = vrot.lane.b32.xlu0 %v452, 32
      %v1425 = vpop.permute.xlu0 %1424
      %1426 = vrot.lane.b32.xlu0 %v453, 32
      %v1427 = vpop.permute.xlu0 %1426
      %1428 = vrot.lane.b32.xlu0 %v454, 32
      %v1429 = vpop.permute.xlu0 %1428
      %1430 = vrot.lane.b32.xlu0 %v455, 32
      %v1431 = vpop.permute.xlu0 %1430
      %1432 = vrot.lane.b32.xlu0 %v456, 32
      %v1433 = vpop.permute.xlu0 %1432
      %1434 = vrot.lane.b32.xlu0 %v457, 32
      %v1435 = vpop.permute.xlu0 %1434
      %1436 = vrot.lane.b32.xlu0 %v458, 32
      %v1437 = vpop.permute.xlu0 %1436
      %1438 = vrot.lane.b32.xlu0 %v459, 32
      %v1439 = vpop.permute.xlu0 %1438
      %1440 = vrot.lane.b32.xlu0 %v460, 32
      %v1441 = vpop.permute.xlu0 %1440
      %1442 = vrot.lane.b32.xlu0 %v461, 32
      %v1443 = vpop.permute.xlu0 %1442
      %1444 = vrot.lane.b32.xlu0 %v462, 32
      %v1445 = vpop.permute.xlu0 %1444
      %1446 = vrot.lane.b32.xlu0 %v463, 32
      %v1447 = vpop.permute.xlu0 %1446
      %1448 = vrot.lane.b32.xlu0 %v464, 32
      %v1449 = vpop.permute.xlu0 %1448
      %1450 = vrot.lane.b32.xlu0 %v465, 32
      %v1451 = vpop.permute.xlu0 %1450
      %1452 = vrot.lane.b32.xlu0 %v466, 32
      %v1453 = vpop.permute.xlu0 %1452
      %1454 = vrot.lane.b32.xlu0 %v467, 32
      %v1455 = vpop.permute.xlu0 %1454
      %1456 = vrot.lane.b32.xlu0 %v468, 32
      %v1457 = vpop.permute.xlu0 %1456
      %1458 = vrot.lane.b32.xlu0 %v469, 32
      %v1459 = vpop.permute.xlu0 %1458
      %1460 = vrot.lane.b32.xlu0 %v470, 32
      %v1461 = vpop.permute.xlu0 %1460
      %1462 = vrot.lane.b32.xlu0 %v471, 32
      %v1463 = vpop.permute.xlu0 %1462
      %vm1496 = vcmask 31744
      %v1497 = vsel %vm1496, %v182, %v505
      %v1498 = vsel %vm1496, %v183, %v507
      %v1499 = vsel %vm1496, %v184, %v509
      %v1500 = vsel %vm1496, %v185, %v511
      %v1501 = vsel %vm1496, %v186, %v513
      %v1502 = vsel %vm1496, %v187, %v515
      %v1503 = vsel %vm1496, %v188, %v517
      %v1504 = vsel %vm1496, %v189, %v519
      %v1505 = vsel %vm1496, %v190, %v521
      %v1506 = vsel %vm1496, %v191, %v523
      %v1507 = vsel %vm1496, %v192, %v525
      %v1508 = vsel %vm1496, %v193, %v527
      %v1509 = vsel %vm1496, %v194, %v529
      %v1510 = vsel %vm1496, %v195, %v531
      %v1511 = vsel %vm1496, %v196, %v533
      %v1512 = vsel %vm1496, %v197, %v535
      %v1513 = vsel %vm1496, %v198, %v537
      %v1514 = vsel %vm1496, %v199, %v539
      %v1515 = vsel %vm1496, %v200, %v541
      %v1516 = vsel %vm1496, %v201, %v543
      %v1517 = vsel %vm1496, %v202, %v545
      %v1518 = vsel %vm1496, %v203, %v547
      %v1519 = vsel %vm1496, %v204, %v549
      %v1520 = vsel %vm1496, %v205, %v551
      %v1521 = vsel %vm1496, %v206, %v553
      %v1522 = vsel %vm1496, %v207, %v555
      %v1523 = vsel %vm1496, %v208, %v557
      %v1524 = vsel %vm1496, %v209, %v559
      %v1525 = vsel %vm1496, %v210, %v561
      %v1526 = vsel %vm1496, %v211, %v563
      %v1527 = vsel %vm1496, %v212, %v565
      %v1528 = vsel %vm1496, %v213, %v567
      %vm1529 = vcmask 64512
      %v1530 = vsel %vm1529, %v1497, %v633
      %v1531 = vsel %vm1529, %v1498, %v635
      %v1532 = vsel %vm1529, %v1499, %v637
      %v1533 = vsel %vm1529, %v1500, %v639
      %v1534 = vsel %vm1529, %v1501, %v641
      %v1535 = vsel %vm1529, %v1502, %v643
      %v1536 = vsel %vm1529, %v1503, %v645
      %v1537 = vsel %vm1529, %v1504, %v647
      %v1538 = vsel %vm1529, %v1505, %v649
      %v1539 = vsel %vm1529, %v1506, %v651
      %v1540 = vsel %vm1529, %v1507, %v653
      %v1541 = vsel %vm1529, %v1508, %v655
      %v1542 = vsel %vm1529, %v1509, %v657
      %v1543 = vsel %vm1529, %v1510, %v659
      %v1544 = vsel %vm1529, %v1511, %v661
      %v1545 = vsel %vm1529, %v1512, %v663
      %v1546 = vsel %vm1529, %v1513, %v665
      %v1547 = vsel %vm1529, %v1514, %v667
      %v1548 = vsel %vm1529, %v1515, %v669
      %v1549 = vsel %vm1529, %v1516, %v671
      %v1550 = vsel %vm1529, %v1517, %v673
      %v1551 = vsel %vm1529, %v1518, %v675
      %v1552 = vsel %vm1529, %v1519, %v677
      %v1553 = vsel %vm1529, %v1520, %v679
      %v1554 = vsel %vm1529, %v1521, %v681
      %v1555 = vsel %vm1529, %v1522, %v683
      %v1556 = vsel %vm1529, %v1523, %v685
      %v1557 = vsel %vm1529, %v1524, %v687
      %v1558 = vsel %vm1529, %v1525, %v689
      %v1559 = vsel %vm1529, %v1526, %v691
      %v1560 = vsel %vm1529, %v1527, %v693
      %v1561 = vsel %vm1529, %v1528, %v695
      %vm1562 = vcmask 97280
      %v1563 = vsel %vm1562, %v1530, %v761
      %v1564 = vsel %vm1562, %v1531, %v763
      %v1565 = vsel %vm1562, %v1532, %v765
      %v1566 = vsel %vm1562, %v1533, %v767
      %v1567 = vsel %vm1562, %v1534, %v769
      %v1568 = vsel %vm1562, %v1535, %v771
      %v1569 = vsel %vm1562, %v1536, %v773
      %v1570 = vsel %vm1562, %v1537, %v775
      %v1571 = vsel %vm1562, %v1538, %v777
      %v1572 = vsel %vm1562, %v1539, %v779
      %v1573 = vsel %vm1562, %v1540, %v781
      %v1574 = vsel %vm1562, %v1541, %v783
      %v1575 = vsel %vm1562, %v1542, %v785
      %v1576 = vsel %vm1562, %v1543, %v787
      %v1577 = vsel %vm1562, %v1544, %v789
      %v1578 = vsel %vm1562, %v1545, %v791
      %v1579 = vsel %vm1562, %v1546, %v793
      %v1580 = vsel %vm1562, %v1547, %v795
      %v1581 = vsel %vm1562, %v1548, %v797
      %v1582 = vsel %vm1562, %v1549, %v799
      %v1583 = vsel %vm1562, %v1550, %v801
      %v1584 = vsel %vm1562, %v1551, %v803
      %v1585 = vsel %vm1562, %v1552, %v805
      %v1586 = vsel %vm1562, %v1553, %v807
      %v1587 = vsel %vm1562, %v1554, %v809
      %v1588 = vsel %vm1562, %v1555, %v811
      %v1589 = vsel %vm1562, %v1556, %v813
      %v1590 = vsel %vm1562, %v1557, %v815
      %v1591 = vsel %vm1562, %v1558, %v817
      %v1592 = vsel %vm1562, %v1559, %v819
      %v1593 = vsel %vm1562, %v1560, %v821
      %v1594 = vsel %vm1562, %v1561, %v823
      %vm1595 = vcmask 130048
      %v1596 = vsel %vm1595, %v1563, %v889
      %v1597 = vsel %vm1595, %v1564, %v891
      %v1598 = vsel %vm1595, %v1565, %v893
      %v1599 = vsel %vm1595, %v1566, %v895
      %v1600 = vsel %vm1595, %v1567, %v897
      %v1601 = vsel %vm1595, %v1568, %v899
      %v1602 = vsel %vm1595, %v1569, %v901
      %v1603 = vsel %vm1595, %v1570, %v903
      %v1604 = vsel %vm1595, %v1571, %v905
      %v1605 = vsel %vm1595, %v1572, %v907
      %v1606 = vsel %vm1595, %v1573, %v909
      %v1607 = vsel %vm1595, %v1574, %v911
      %v1608 = vsel %vm1595, %v1575, %v913
      %v1609 = vsel %vm1595, %v1576, %v915
      %v1610 = vsel %vm1595, %v1577, %v917
      %v1611 = vsel %vm1595, %v1578, %v919
      %v1612 = vsel %vm1595, %v1579, %v921
      %v1613 = vsel %vm1595, %v1580, %v923
      %v1614 = vsel %vm1595, %v1581, %v925
      %v1615 = vsel %vm1595, %v1582, %v927
      %v1616 = vsel %vm1595, %v1583, %v929
      %v1617 = vsel %vm1595, %v1584, %v931
      %v1618 = vsel %vm1595, %v1585, %v933
      %v1619 = vsel %vm1595, %v1586, %v935
      %v1620 = vsel %vm1595, %v1587, %v937
      %v1621 = vsel %vm1595, %v1588, %v939
      %v1622 = vsel %vm1595, %v1589, %v941
      %v1623 = vsel %vm1595, %v1590, %v943
      %v1624 = vsel %vm1595, %v1591, %v945
      %v1625 = vsel %vm1595, %v1592, %v947
      %v1626 = vsel %vm1595, %v1593, %v949
      %v1627 = vsel %vm1595, %v1594, %v951
      %vm1628 = vcmask 162816
      %v1629 = vsel %vm1628, %v1596, %v1017
      %v1630 = vsel %vm1628, %v1597, %v1019
      %v1631 = vsel %vm1628, %v1598, %v1021
      %v1632 = vsel %vm1628, %v1599, %v1023
      %v1633 = vsel %vm1628, %v1600, %v1025
      %v1634 = vsel %vm1628, %v1601, %v1027
      %v1635 = vsel %vm1628, %v1602, %v1029
      %v1636 = vsel %vm1628, %v1603, %v1031
      %v1637 = vsel %vm1628, %v1604, %v1033
      %v1638 = vsel %vm1628, %v1605, %v1035
      %v1639 = vsel %vm1628, %v1606, %v1037
      %v1640 = vsel %vm1628, %v1607, %v1039
      %v1641 = vsel %vm1628, %v1608, %v1041
      %v1642 = vsel %vm1628, %v1609, %v1043
      %v1643 = vsel %vm1628, %v1610, %v1045
      %v1644 = vsel %vm1628, %v1611, %v1047
      %v1645 = vsel %vm1628, %v1612, %v1049
      %v1646 = vsel %vm1628, %v1613, %v1051
      %v1647 = vsel %vm1628, %v1614, %v1053
      %v1648 = vsel %vm1628, %v1615, %v1055
      %v1649 = vsel %vm1628, %v1616, %v1057
      %v1650 = vsel %vm1628, %v1617, %v1059
      %v1651 = vsel %vm1628, %v1618, %v1061
      %v1652 = vsel %vm1628, %v1619, %v1063
      %v1653 = vsel %vm1628, %v1620, %v1065
      %v1654 = vsel %vm1628, %v1621, %v1067
      %v1655 = vsel %vm1628, %v1622, %v1069
      %v1656 = vsel %vm1628, %v1623, %v1071
      %v1657 = vsel %vm1628, %v1624, %v1073
      %v1658 = vsel %vm1628, %v1625, %v1075
      %v1659 = vsel %vm1628, %v1626, %v1077
      %v1660 = vsel %vm1628, %v1627, %v1079
      %vm1661 = vcmask 195584
      %v1662 = vsel %vm1661, %v1629, %v1145
      %v1663 = vsel %vm1661, %v1630, %v1147
      %v1664 = vsel %vm1661, %v1631, %v1149
      %v1665 = vsel %vm1661, %v1632, %v1151
      %v1666 = vsel %vm1661, %v1633, %v1153
      %v1667 = vsel %vm1661, %v1634, %v1155
      %v1668 = vsel %vm1661, %v1635, %v1157
      %v1669 = vsel %vm1661, %v1636, %v1159
      %v1670 = vsel %vm1661, %v1637, %v1161
      %v1671 = vsel %vm1661, %v1638, %v1163
      %v1672 = vsel %vm1661, %v1639, %v1165
      %v1673 = vsel %vm1661, %v1640, %v1167
      %v1674 = vsel %vm1661, %v1641, %v1169
      %v1675 = vsel %vm1661, %v1642, %v1171
      %v1676 = vsel %vm1661, %v1643, %v1173
      %v1677 = vsel %vm1661, %v1644, %v1175
      %v1678 = vsel %vm1661, %v1645, %v1177
      %v1679 = vsel %vm1661, %v1646, %v1179
      %v1680 = vsel %vm1661, %v1647, %v1181
      %v1681 = vsel %vm1661, %v1648, %v1183
      %v1682 = vsel %vm1661, %v1649, %v1185
      %v1683 = vsel %vm1661, %v1650, %v1187
      %v1684 = vsel %vm1661, %v1651, %v1189
      %v1685 = vsel %vm1661, %v1652, %v1191
      %v1686 = vsel %vm1661, %v1653, %v1193
      %v1687 = vsel %vm1661, %v1654, %v1195
      %v1688 = vsel %vm1661, %v1655, %v1197
      %v1689 = vsel %vm1661, %v1656, %v1199
      %v1690 = vsel %vm1661, %v1657, %v1201
      %v1691 = vsel %vm1661, %v1658, %v1203
      %v1692 = vsel %vm1661, %v1659, %v1205
      %v1693 = vsel %vm1661, %v1660, %v1207
      %vm1694 = vcmask 228352
      %v1695 = vsel %vm1694, %v1662, %v1273
      %v1696 = vsel %vm1694, %v1663, %v1275
      %v1697 = vsel %vm1694, %v1664, %v1277
      %v1698 = vsel %vm1694, %v1665, %v1279
      %v1699 = vsel %vm1694, %v1666, %v1281
      %v1700 = vsel %vm1694, %v1667, %v1283
      %v1701 = vsel %vm1694, %v1668, %v1285
      %v1702 = vsel %vm1694, %v1669, %v1287
      %v1703 = vsel %vm1694, %v1670, %v1289
      %v1704 = vsel %vm1694, %v1671, %v1291
      %v1705 = vsel %vm1694, %v1672, %v1293
      %v1706 = vsel %vm1694, %v1673, %v1295
      %v1707 = vsel %vm1694, %v1674, %v1297
      %v1708 = vsel %vm1694, %v1675, %v1299
      %v1709 = vsel %vm1694, %v1676, %v1301
      %v1710 = vsel %vm1694, %v1677, %v1303
      %v1711 = vsel %vm1694, %v1678, %v1305
      %v1712 = vsel %vm1694, %v1679, %v1307
      %v1713 = vsel %vm1694, %v1680, %v1309
      %v1714 = vsel %vm1694, %v1681, %v1311
      %v1715 = vsel %vm1694, %v1682, %v1313
      %v1716 = vsel %vm1694, %v1683, %v1315
      %v1717 = vsel %vm1694, %v1684, %v1317
      %v1718 = vsel %vm1694, %v1685, %v1319
      %v1719 = vsel %vm1694, %v1686, %v1321
      %v1720 = vsel %vm1694, %v1687, %v1323
      %v1721 = vsel %vm1694, %v1688, %v1325
      %v1722 = vsel %vm1694, %v1689, %v1327
      %v1723 = vsel %vm1694, %v1690, %v1329
      %v1724 = vsel %vm1694, %v1691, %v1331
      %v1725 = vsel %vm1694, %v1692, %v1333
      %v1726 = vsel %vm1694, %v1693, %v1335
      %vm1727 = vcmask 261120
      %v1728 = vsel %vm1727, %v1695, %v1401
      %v1729 = vsel %vm1727, %v1696, %v1403
      %v1730 = vsel %vm1727, %v1697, %v1405
      %v1731 = vsel %vm1727, %v1698, %v1407
      %v1732 = vsel %vm1727, %v1699, %v1409
      %v1733 = vsel %vm1727, %v1700, %v1411
      %v1734 = vsel %vm1727, %v1701, %v1413
      %v1735 = vsel %vm1727, %v1702, %v1415
      %v1736 = vsel %vm1727, %v1703, %v1417
      %v1737 = vsel %vm1727, %v1704, %v1419
      %v1738 = vsel %vm1727, %v1705, %v1421
      %v1739 = vsel %vm1727, %v1706, %v1423
      %v1740 = vsel %vm1727, %v1707, %v1425
      %v1741 = vsel %vm1727, %v1708, %v1427
      %v1742 = vsel %vm1727, %v1709, %v1429
      %v1743 = vsel %vm1727, %v1710, %v1431
      %v1744 = vsel %vm1727, %v1711, %v1433
      %v1745 = vsel %vm1727, %v1712, %v1435
      %v1746 = vsel %vm1727, %v1713, %v1437
      %v1747 = vsel %vm1727, %v1714, %v1439
      %v1748 = vsel %vm1727, %v1715, %v1441
      %v1749 = vsel %vm1727, %v1716, %v1443
      %v1750 = vsel %vm1727, %v1717, %v1445
      %v1751 = vsel %vm1727, %v1718, %v1447
      %v1752 = vsel %vm1727, %v1719, %v1449
      %v1753 = vsel %vm1727, %v1720, %v1451
      %v1754 = vsel %vm1727, %v1721, %v1453
      %v1755 = vsel %vm1727, %v1722, %v1455
      %v1756 = vsel %vm1727, %v1723, %v1457
      %v1757 = vsel %vm1727, %v1724, %v1459
      %v1758 = vsel %vm1727, %v1725, %v1461
      %v1759 = vsel %vm1727, %v1726, %v1463
      %v1760 = vld [vmem:[%s1] sm:$0xff]
      %v1761 = vld [vmem:[%s1 + $0x8] sm:$0xff]
      %v1762 = vld [vmem:[%s1 + $0x10] sm:$0xff]
      %v1763 = vld [vmem:[%s1 + $0x18] sm:$0xff]
      %v1764 = vld [vmem:[%s1 + $0x20] sm:$0xf]
      %vm1765 = vcmask 293888
      %v1767 = vsel %vm1765, %v1728, 0
      %v1770 = vsel %vm1765, %v1729, 0
      %v1773 = vsel %vm1765, %v1730, 0
      %v1776 = vsel %vm1765, %v1731, 0
      %v1779 = vsel %vm1765, %v1732, 0
      %v1782 = vsel %vm1765, %v1733, 0
      %v1785 = vsel %vm1765, %v1734, 0
      %v1788 = vsel %vm1765, %v1735, 0
      %v1791 = vsel %vm1765, %v1736, 0
      %v1794 = vsel %vm1765, %v1737, 0
      %v1797 = vsel %vm1765, %v1738, 0
      %v1800 = vsel %vm1765, %v1739, 0
      %v1803 = vsel %vm1765, %v1740, 0
      %v1806 = vsel %vm1765, %v1741, 0
      %v1809 = vsel %vm1765, %v1742, 0
      %v1812 = vsel %vm1765, %v1743, 0
      %v1815 = vsel %vm1765, %v1744, 0
      %v1818 = vsel %vm1765, %v1745, 0
      %v1821 = vsel %vm1765, %v1746, 0
      %v1824 = vsel %vm1765, %v1747, 0
      %v1827 = vsel %vm1765, %v1748, 0
      %v1830 = vsel %vm1765, %v1749, 0
      %v1833 = vsel %vm1765, %v1750, 0
      %v1836 = vsel %vm1765, %v1751, 0
      %v1839 = vsel %vm1765, %v1752, 0
      %v1842 = vsel %vm1765, %v1753, 0
      %v1845 = vsel %vm1765, %v1754, 0
      %v1848 = vsel %vm1765, %v1755, 0
      %v1851 = vsel %vm1765, %v1756, 0
      %v1854 = vsel %vm1765, %v1757, 0
      %v1857 = vsel %vm1765, %v1758, 0
      %v1860 = vsel %vm1765, %v1759, 0
      %vm1862 = vcmask 1043456
      %v1864 = vsel %vm1862, %v1764, 0
      %1866 = vmatprep.subr.mxu0 0.0
      %1867 = vmatpush1.msra.mxu0 0.0
      %1868 = vmatprep.subr.mxu0 0.0
      %1869 = vmatpush1.msra.mxu0 0.0
      %1870 = vmatprep.subr.mxu0 0.0
      %1871 = vmatpush1.msra.mxu0 0.0
      %1872 = vmatprep.subr.mxu0 0.0
      %1873 = vmatpush1.msra.mxu0 0.0
      %1874 = vmatprep.subr.mxu0 0.0
      %1875 = vmatpush1.msra.mxu0 0.0
      %1876 = vmatprep.subr.mxu0 0.0
      %1877 = vmatpush1.msra.mxu0 0.0
      %1878 = vmatprep.subr.mxu0 0.0
      %1879 = vmatpush1.msra.mxu0 0.0
      %1880 = vmatprep.subr.mxu0 0.0
      %1881 = vmatpush1.msra.mxu0 0.0
      %1882 = vmatprep.subr.mxu0 0.0
      %1883 = vmatpush1.msra.mxu0 0.0
      %1884 = vmatprep.subr.mxu0 0.0
      %1885 = vmatpush1.msra.mxu0 0.0
      %1886 = vmatprep.subr.mxu0 0.0
      %1887 = vmatpush1.msra.mxu0 0.0
      %1888 = vmatprep.subr.mxu0 0.0
      %1889 = vmatpush1.msra.mxu0 %v1864
      %1890 = vmatprep.subr.mxu0 0.0
      %1891 = vmatpush1.msra.mxu0 %v1763
      %1892 = vmatprep.subr.mxu0 0.0
      %1893 = vmatpush1.msra.mxu0 %v1762
      %1894 = vmatprep.subr.mxu0 0.0
      %1895 = vmatpush1.msra.mxu0 %v1761
      %1896 = vmatprep.subr.mxu0 0.0
      %1897 = vmatpush1.msra.mxu0 %v1760
      %1898 = vmatprep.subr.mxu0 0.0
      %1899 = vmatpush2.msra.mxu0 0.0
      %1900 = vmatprep.subr.mxu0 0.0
      %1901 = vmatpush2.msra.mxu0 0.0
      %1902 = vmatprep.subr.mxu0 0.0
      %1903 = vmatpush2.msra.mxu0 0.0
      %1904 = vmatprep.subr.mxu0 0.0
      %1905 = vmatpush2.msra.mxu0 0.0
      %1906 = vmatprep.subr.mxu0 0.0
      %1907 = vmatpush2.msra.mxu0 0.0
      %1908 = vmatprep.subr.mxu0 0.0
      %1909 = vmatpush2.msra.mxu0 0.0
      %1910 = vmatprep.subr.mxu0 0.0
      %1911 = vmatpush2.msra.mxu0 0.0
      %1912 = vmatprep.subr.mxu0 0.0
      %1913 = vmatpush2.msra.mxu0 0.0
      %1914 = vmatprep.subr.mxu0 0.0
      %1915 = vmatpush2.msra.mxu0 0.0
      %1916 = vmatprep.subr.mxu0 0.0
      %1917 = vmatpush2.msra.mxu0 0.0
      %1918 = vmatprep.subr.mxu0 0.0
      %1919 = vmatpush2.msra.mxu0 0.0
      %1920 = vmatprep.subr.mxu0 0.0
      %1921 = vmatpush2.msra.mxu0 0.0
      %1922 = vmatprep.subr.mxu0 0.0
      %1923 = vmatpush2.msra.mxu0 0.0
      %1924 = vmatprep.subr.mxu0 0.0
      %1925 = vmatpush2.msra.mxu0 0.0
      %1926 = vmatprep.subr.mxu0 0.0
      %1927 = vmatpush2.msra.mxu0 0.0
      %1928 = vmatprep.subr.mxu0 0.0
      %1929 = vmatpush2.msra.mxu0 0.0
      %1930 = vmatprep.mubr.f32.mxu0 0.0
      %1931 = vmatmul.mubr.f32.gmra.mxu0 %v1767
      %v1932 = vpop.f32.mrf.mxu0
      %v1933 = vadd.f32 0.0, %v1932
      %v1934 = vpop.f32.mrf.mxu0
      %1935 = vmatprep.mubr.f32.mxu0 0.0
      %1936 = vmatmul.mubr.f32.gmra.mxu0 %v1770
      %v1937 = vpop.f32.mrf.mxu0
      %v1938 = vadd.f32 0.0, %v1937
      %v1939 = vpop.f32.mrf.mxu0
      %1940 = vmatprep.mubr.f32.mxu0 0.0
      %1941 = vmatmul.mubr.f32.gmra.mxu0 %v1773
      %v1942 = vpop.f32.mrf.mxu0
      %v1943 = vadd.f32 0.0, %v1942
      %v1944 = vpop.f32.mrf.mxu0
      %1945 = vmatprep.mubr.f32.mxu0 0.0
      %1946 = vmatmul.mubr.f32.gmra.mxu0 %v1776
      %v1947 = vpop.f32.mrf.mxu0
      %v1948 = vadd.f32 0.0, %v1947
      %v1949 = vpop.f32.mrf.mxu0
      %1950 = vmatprep.mubr.f32.mxu0 0.0
      %1951 = vmatmul.mubr.f32.gmra.mxu0 %v1779
      %v1952 = vpop.f32.mrf.mxu0
      %v1953 = vadd.f32 0.0, %v1952
      %v1954 = vpop.f32.mrf.mxu0
      %1955 = vmatprep.mubr.f32.mxu0 0.0
      %1956 = vmatmul.mubr.f32.gmra.mxu0 %v1782
      %v1957 = vpop.f32.mrf.mxu0
      %v1958 = vadd.f32 0.0, %v1957
      %v1959 = vpop.f32.mrf.mxu0
      %1960 = vmatprep.mubr.f32.mxu0 0.0
      %1961 = vmatmul.mubr.f32.gmra.mxu0 %v1785
      %v1962 = vpop.f32.mrf.mxu0
      %v1963 = vadd.f32 0.0, %v1962
      %v1964 = vpop.f32.mrf.mxu0
      %1965 = vmatprep.mubr.f32.mxu0 0.0
      %1966 = vmatmul.mubr.f32.gmra.mxu0 %v1788
      %v1967 = vpop.f32.mrf.mxu0
      %v1968 = vadd.f32 0.0, %v1967
      %v1969 = vpop.f32.mrf.mxu0
      %1970 = vmatprep.mubr.f32.mxu0 0.0
      %1971 = vmatmul.mubr.f32.gmra.mxu0 %v1791
      %v1972 = vpop.f32.mrf.mxu0
      %v1973 = vadd.f32 0.0, %v1972
      %v1974 = vpop.f32.mrf.mxu0
      %1975 = vmatprep.mubr.f32.mxu0 0.0
      %1976 = vmatmul.mubr.f32.gmra.mxu0 %v1794
      %v1977 = vpop.f32.mrf.mxu0
      %v1978 = vadd.f32 0.0, %v1977
      %v1979 = vpop.f32.mrf.mxu0
      %1980 = vmatprep.mubr.f32.mxu0 0.0
      %1981 = vmatmul.mubr.f32.gmra.mxu0 %v1797
      %v1982 = vpop.f32.mrf.mxu0
      %v1983 = vadd.f32 0.0, %v1982
      %v1984 = vpop.f32.mrf.mxu0
      %1985 = vmatprep.mubr.f32.mxu0 0.0
      %1986 = vmatmul.mubr.f32.gmra.mxu0 %v1800
      %v1987 = vpop.f32.mrf.mxu0
      %v1988 = vadd.f32 0.0, %v1987
      %v1989 = vpop.f32.mrf.mxu0
      %1990 = vmatprep.mubr.f32.mxu0 0.0
      %1991 = vmatmul.mubr.f32.gmra.mxu0 %v1803
      %v1992 = vpop.f32.mrf.mxu0
      %v1993 = vadd.f32 0.0, %v1992
      %v1994 = vpop.f32.mrf.mxu0
      %1995 = vmatprep.mubr.f32.mxu0 0.0
      %1996 = vmatmul.mubr.f32.gmra.mxu0 %v1806
      %v1997 = vpop.f32.mrf.mxu0
      %v1998 = vadd.f32 0.0, %v1997
      %v1999 = vpop.f32.mrf.mxu0
      %2000 = vmatprep.mubr.f32.mxu0 0.0
      %2001 = vmatmul.mubr.f32.gmra.mxu0 %v1809
      %v2002 = vpop.f32.mrf.mxu0
      %v2003 = vadd.f32 0.0, %v2002
      %v2004 = vpop.f32.mrf.mxu0
      %2005 = vmatprep.mubr.f32.mxu0 0.0
      %2006 = vmatmul.mubr.f32.gmra.mxu0 %v1812
      %v2007 = vpop.f32.mrf.mxu0
      %v2008 = vadd.f32 0.0, %v2007
      %v2009 = vpop.f32.mrf.mxu0
      %2010 = vmatprep.mubr.f32.mxu0 0.0
      %2011 = vmatmul.mubr.f32.gmra.mxu0 %v1815
      %v2012 = vpop.f32.mrf.mxu0
      %v2013 = vadd.f32 0.0, %v2012
      %v2014 = vpop.f32.mrf.mxu0
      %2015 = vmatprep.mubr.f32.mxu0 0.0
      %2016 = vmatmul.mubr.f32.gmra.mxu0 %v1818
      %v2017 = vpop.f32.mrf.mxu0
      %v2018 = vadd.f32 0.0, %v2017
      %v2019 = vpop.f32.mrf.mxu0
      %2020 = vmatprep.mubr.f32.mxu0 0.0
      %2021 = vmatmul.mubr.f32.gmra.mxu0 %v1821
      %v2022 = vpop.f32.mrf.mxu0
      %v2023 = vadd.f32 0.0, %v2022
      %v2024 = vpop.f32.mrf.mxu0
      %2025 = vmatprep.mubr.f32.mxu0 0.0
      %2026 = vmatmul.mubr.f32.gmra.mxu0 %v1824
      %v2027 = vpop.f32.mrf.mxu0
      %v2028 = vadd.f32 0.0, %v2027
      %v2029 = vpop.f32.mrf.mxu0
      %2030 = vmatprep.mubr.f32.mxu0 0.0
      %2031 = vmatmul.mubr.f32.gmra.mxu0 %v1827
      %v2032 = vpop.f32.mrf.mxu0
      %v2033 = vadd.f32 0.0, %v2032
      %v2034 = vpop.f32.mrf.mxu0
      %2035 = vmatprep.mubr.f32.mxu0 0.0
      %2036 = vmatmul.mubr.f32.gmra.mxu0 %v1830
      %v2037 = vpop.f32.mrf.mxu0
      %v2038 = vadd.f32 0.0, %v2037
      %v2039 = vpop.f32.mrf.mxu0
      %2040 = vmatprep.mubr.f32.mxu0 0.0
      %2041 = vmatmul.mubr.f32.gmra.mxu0 %v1833
      %v2042 = vpop.f32.mrf.mxu0
      %v2043 = vadd.f32 0.0, %v2042
      %v2044 = vpop.f32.mrf.mxu0
      %2045 = vmatprep.mubr.f32.mxu0 0.0
      %2046 = vmatmul.mubr.f32.gmra.mxu0 %v1836
      %v2047 = vpop.f32.mrf.mxu0
      %v2048 = vadd.f32 0.0, %v2047
      %v2049 = vpop.f32.mrf.mxu0
      %2050 = vmatprep.mubr.f32.mxu0 0.0
      %2051 = vmatmul.mubr.f32.gmra.mxu0 %v1839
      %v2052 = vpop.f32.mrf.mxu0
      %v2053 = vadd.f32 0.0, %v2052
      %v2054 = vpop.f32.mrf.mxu0
      %2055 = vmatprep.mubr.f32.mxu0 0.0
      %2056 = vmatmul.mubr.f32.gmra.mxu0 %v1842
      %v2057 = vpop.f32.mrf.mxu0
      %v2058 = vadd.f32 0.0, %v2057
      %v2059 = vpop.f32.mrf.mxu0
      %2060 = vmatprep.mubr.f32.mxu0 0.0
      %2061 = vmatmul.mubr.f32.gmra.mxu0 %v1845
      %v2062 = vpop.f32.mrf.mxu0
      %v2063 = vadd.f32 0.0, %v2062
      %v2064 = vpop.f32.mrf.mxu0
      %2065 = vmatprep.mubr.f32.mxu0 0.0
      %2066 = vmatmul.mubr.f32.gmra.mxu0 %v1848
      %v2067 = vpop.f32.mrf.mxu0
      %v2068 = vadd.f32 0.0, %v2067
      %v2069 = vpop.f32.mrf.mxu0
      %2070 = vmatprep.mubr.f32.mxu0 0.0
      %2071 = vmatmul.mubr.f32.gmra.mxu0 %v1851
      %v2072 = vpop.f32.mrf.mxu0
      %v2073 = vadd.f32 0.0, %v2072
      %v2074 = vpop.f32.mrf.mxu0
      %2075 = vmatprep.mubr.f32.mxu0 0.0
      %2076 = vmatmul.mubr.f32.gmra.mxu0 %v1854
      %v2077 = vpop.f32.mrf.mxu0
      %v2078 = vadd.f32 0.0, %v2077
      %v2079 = vpop.f32.mrf.mxu0
      %2080 = vmatprep.mubr.f32.mxu0 0.0
      %2081 = vmatmul.mubr.f32.gmra.mxu0 %v1857
      %v2082 = vpop.f32.mrf.mxu0
      %v2083 = vadd.f32 0.0, %v2082
      %v2084 = vpop.f32.mrf.mxu0
      %2085 = vmatprep.mubr.f32.mxu0 0.0
      %2086 = vmatmul.mubr.f32.gmra.mxu0 %v1860
      %v2087 = vpop.f32.mrf.mxu0
      %v2088 = vadd.f32 0.0, %v2087
      %v2089 = vpop.f32.mrf.mxu0
      %2090 = vdwg.mxu0
      %2091 = vst.msk [vmem:[%s177] sm:$0xff] %vm1529, %v1933
      %2092 = vst.msk [vmem:[%s177 + $0x8] sm:$0xff] %vm1529, %v1938
      %2093 = vst.msk [vmem:[%s177 + $0x10] sm:$0xff] %vm1529, %v1943
      %2094 = vst.msk [vmem:[%s177 + $0x18] sm:$0xff] %vm1529, %v1948
      %2095 = vst.msk [vmem:[%s177 + $0x20] sm:$0xff] %vm1529, %v1953
      %2096 = vst.msk [vmem:[%s177 + $0x28] sm:$0xff] %vm1529, %v1958
      %2097 = vst.msk [vmem:[%s177 + $0x30] sm:$0xff] %vm1529, %v1963
      %2098 = vst.msk [vmem:[%s177 + $0x38] sm:$0xff] %vm1529, %v1968
      %2099 = vst.msk [vmem:[%s177 + $0x40] sm:$0xff] %vm1529, %v1973
      %2100 = vst.msk [vmem:[%s177 + $0x48] sm:$0xff] %vm1529, %v1978
      %2101 = vst.msk [vmem:[%s177 + $0x50] sm:$0xff] %vm1529, %v1983
      %2102 = vst.msk [vmem:[%s177 + $0x58] sm:$0xff] %vm1529, %v1988
      %2103 = vst.msk [vmem:[%s177 + $0x60] sm:$0xff] %vm1529, %v1993
      %2104 = vst.msk [vmem:[%s177 + $0x68] sm:$0xff] %vm1529, %v1998
      %2105 = vst.msk [vmem:[%s177 + $0x70] sm:$0xff] %vm1529, %v2003
      %2106 = vst.msk [vmem:[%s177 + $0x78] sm:$0xff] %vm1529, %v2008
      %2107 = vst.msk [vmem:[%s177 + $0x80] sm:$0xff] %vm1529, %v2013
      %2108 = vst.msk [vmem:[%s177 + $0x88] sm:$0xff] %vm1529, %v2018
      %2109 = vst.msk [vmem:[%s177 + $0x90] sm:$0xff] %vm1529, %v2023
      %2110 = vst.msk [vmem:[%s177 + $0x98] sm:$0xff] %vm1529, %v2028
      %2111 = vst.msk [vmem:[%s177 + $0xa0] sm:$0xff] %vm1529, %v2033
      %2112 = vst.msk [vmem:[%s177 + $0xa8] sm:$0xff] %vm1529, %v2038
      %2113 = vst.msk [vmem:[%s177 + $0xb0] sm:$0xff] %vm1529, %v2043
      %2114 = vst.msk [vmem:[%s177 + $0xb8] sm:$0xff] %vm1529, %v2048
      %2115 = vst.msk [vmem:[%s177 + $0xc0] sm:$0xff] %vm1529, %v2053
      %2116 = vst.msk [vmem:[%s177 + $0xc8] sm:$0xff] %vm1529, %v2058
      %2117 = vst.msk [vmem:[%s177 + $0xd0] sm:$0xff] %vm1529, %v2063
      %2118 = vst.msk [vmem:[%s177 + $0xd8] sm:$0xff] %vm1529, %v2068
      %2119 = vst.msk [vmem:[%s177 + $0xe0] sm:$0xff] %vm1529, %v2073
      %2120 = vst.msk [vmem:[%s177 + $0xe8] sm:$0xff] %vm1529, %v2078
      %2121 = vst.msk [vmem:[%s177 + $0xf0] sm:$0xff] %vm1529, %v2083
      %2122 = vst.msk [vmem:[%s177 + $0xf8] sm:$0xff] %vm1529, %v2088
      %v2123 = vsel %vm1529, %v1933, 0.0
      %v2124 = vsel %vm1529, %v1938, 0.0
      %v2125 = vadd.f32 %v2123, %v2124
      %v2126 = vsel %vm1529, %v1943, 0.0
      %v2127 = vadd.f32 %v2125, %v2126
      %v2128 = vsel %vm1529, %v1948, 0.0
      %v2129 = vadd.f32 %v2127, %v2128
      %v2130 = vsel %vm1529, %v1953, 0.0
      %v2131 = vadd.f32 %v2129, %v2130
      %v2132 = vsel %vm1529, %v1958, 0.0
      %v2133 = vadd.f32 %v2131, %v2132
      %v2134 = vsel %vm1529, %v1963, 0.0
      %v2135 = vadd.f32 %v2133, %v2134
      %v2136 = vsel %vm1529, %v1968, 0.0
      %v2137 = vadd.f32 %v2135, %v2136
      %v2138 = vsel %vm1529, %v1973, 0.0
      %v2139 = vadd.f32 %v2137, %v2138
      %v2140 = vsel %vm1529, %v1978, 0.0
      %v2141 = vadd.f32 %v2139, %v2140
      %v2142 = vsel %vm1529, %v1983, 0.0
      %v2143 = vadd.f32 %v2141, %v2142
      %v2144 = vsel %vm1529, %v1988, 0.0
      %v2145 = vadd.f32 %v2143, %v2144
      %v2146 = vsel %vm1529, %v1993, 0.0
      %v2147 = vadd.f32 %v2145, %v2146
      %v2148 = vsel %vm1529, %v1998, 0.0
      %v2149 = vadd.f32 %v2147, %v2148
      %v2150 = vsel %vm1529, %v2003, 0.0
      %v2151 = vadd.f32 %v2149, %v2150
      %v2152 = vsel %vm1529, %v2008, 0.0
      %v2153 = vadd.f32 %v2151, %v2152
      %v2154 = vsel %vm1529, %v2013, 0.0
      %v2155 = vadd.f32 %v2153, %v2154
      %v2156 = vsel %vm1529, %v2018, 0.0
      %v2157 = vadd.f32 %v2155, %v2156
      %v2158 = vsel %vm1529, %v2023, 0.0
      %v2159 = vadd.f32 %v2157, %v2158
      %v2160 = vsel %vm1529, %v2028, 0.0
      %v2161 = vadd.f32 %v2159, %v2160
      %v2162 = vsel %vm1529, %v2033, 0.0
      %v2163 = vadd.f32 %v2161, %v2162
      %v2164 = vsel %vm1529, %v2038, 0.0
      %v2165 = vadd.f32 %v2163, %v2164
      %v2166 = vsel %vm1529, %v2043, 0.0
      %v2167 = vadd.f32 %v2165, %v2166
      %v2168 = vsel %vm1529, %v2048, 0.0
      %v2169 = vadd.f32 %v2167, %v2168
      %v2170 = vsel %vm1529, %v2053, 0.0
      %v2171 = vadd.f32 %v2169, %v2170
      %v2172 = vsel %vm1529, %v2058, 0.0
      %v2173 = vadd.f32 %v2171, %v2172
      %v2174 = vsel %vm1529, %v2063, 0.0
      %v2175 = vadd.f32 %v2173, %v2174
      %v2176 = vsel %vm1529, %v2068, 0.0
      %v2177 = vadd.f32 %v2175, %v2176
      %v2178 = vsel %vm1529, %v2073, 0.0
      %v2179 = vadd.f32 %v2177, %v2178
      %v2180 = vsel %vm1529, %v2078, 0.0
      %v2181 = vadd.f32 %v2179, %v2180
      %v2182 = vsel %vm1529, %v2083, 0.0
      %v2183 = vadd.f32 %v2181, %v2182
      %v2184 = vsel %vm1529, %v2088, 0.0
      %v2185 = vadd.f32 %v2183, %v2184
      %v2186 = vrot.slane %v2185, 4
      %v2187 = vadd.f32 %v2185, %v2186
      %v2188 = vrot.slane %v2187, 2
      %v2189 = vadd.f32 %v2187, %v2188
      %v2190 = vrot.slane %v2189, 1
      %v2191 = vadd.f32 %v2189, %v2190
      %vm2192 = vcmask 57344
      %2193 = vst.msk [vmem:[%s181] sm:$0x1] %vm2192, %v2191
      %v2194 = vmul.f32 %v1933, %v1933
      %v2195 = vmul.f32 %v1938, %v1938
      %v2196 = vmul.f32 %v1943, %v1943
      %v2197 = vmul.f32 %v1948, %v1948
      %v2198 = vmul.f32 %v1953, %v1953
      %v2199 = vmul.f32 %v1958, %v1958
      %v2200 = vmul.f32 %v1963, %v1963
      %v2201 = vmul.f32 %v1968, %v1968
      %v2202 = vmul.f32 %v1973, %v1973
      %v2203 = vmul.f32 %v1978, %v1978
      %v2204 = vmul.f32 %v1983, %v1983
      %v2205 = vmul.f32 %v1988, %v1988
      %v2206 = vmul.f32 %v1993, %v1993
      %v2207 = vmul.f32 %v1998, %v1998
      %v2208 = vmul.f32 %v2003, %v2003
      %v2209 = vmul.f32 %v2008, %v2008
      %v2210 = vmul.f32 %v2013, %v2013
      %v2211 = vmul.f32 %v2018, %v2018
      %v2212 = vmul.f32 %v2023, %v2023
      %v2213 = vmul.f32 %v2028, %v2028
      %v2214 = vmul.f32 %v2033, %v2033
      %v2215 = vmul.f32 %v2038, %v2038
      %v2216 = vmul.f32 %v2043, %v2043
      %v2217 = vmul.f32 %v2048, %v2048
      %v2218 = vmul.f32 %v2053, %v2053
      %v2219 = vmul.f32 %v2058, %v2058
      %v2220 = vmul.f32 %v2063, %v2063
      %v2221 = vmul.f32 %v2068, %v2068
      %v2222 = vmul.f32 %v2073, %v2073
      %v2223 = vmul.f32 %v2078, %v2078
      %v2224 = vmul.f32 %v2083, %v2083
      %v2225 = vmul.f32 %v2088, %v2088
      %v2226 = vsel %vm1529, %v2194, 0.0
      %v2227 = vsel %vm1529, %v2195, 0.0
      %v2228 = vadd.f32 %v2226, %v2227
      %v2229 = vsel %vm1529, %v2196, 0.0
      %v2230 = vadd.f32 %v2228, %v2229
      %v2231 = vsel %vm1529, %v2197, 0.0
      %v2232 = vadd.f32 %v2230, %v2231
      %v2233 = vsel %vm1529, %v2198, 0.0
      %v2234 = vadd.f32 %v2232, %v2233
      %v2235 = vsel %vm1529, %v2199, 0.0
      %v2236 = vadd.f32 %v2234, %v2235
      %v2237 = vsel %vm1529, %v2200, 0.0
      %v2238 = vadd.f32 %v2236, %v2237
      %v2239 = vsel %vm1529, %v2201, 0.0
      %v2240 = vadd.f32 %v2238, %v2239
      %v2241 = vsel %vm1529, %v2202, 0.0
      %v2242 = vadd.f32 %v2240, %v2241
      %v2243 = vsel %vm1529, %v2203, 0.0
      %v2244 = vadd.f32 %v2242, %v2243
      %v2245 = vsel %vm1529, %v2204, 0.0
      %v2246 = vadd.f32 %v2244, %v2245
      %v2247 = vsel %vm1529, %v2205, 0.0
      %v2248 = vadd.f32 %v2246, %v2247
      %v2249 = vsel %vm1529, %v2206, 0.0
      %v2250 = vadd.f32 %v2248, %v2249
      %v2251 = vsel %vm1529, %v2207, 0.0
      %v2252 = vadd.f32 %v2250, %v2251
      %v2253 = vsel %vm1529, %v2208, 0.0
      %v2254 = vadd.f32 %v2252, %v2253
      %v2255 = vsel %vm1529, %v2209, 0.0
      %v2256 = vadd.f32 %v2254, %v2255
      %v2257 = vsel %vm1529, %v2210, 0.0
      %v2258 = vadd.f32 %v2256, %v2257
      %v2259 = vsel %vm1529, %v2211, 0.0
      %v2260 = vadd.f32 %v2258, %v2259
      %v2261 = vsel %vm1529, %v2212, 0.0
      %v2262 = vadd.f32 %v2260, %v2261
      %v2263 = vsel %vm1529, %v2213, 0.0
      %v2264 = vadd.f32 %v2262, %v2263
      %v2265 = vsel %vm1529, %v2214, 0.0
      %v2266 = vadd.f32 %v2264, %v2265
      %v2267 = vsel %vm1529, %v2215, 0.0
      %v2268 = vadd.f32 %v2266, %v2267
      %v2269 = vsel %vm1529, %v2216, 0.0
      %v2270 = vadd.f32 %v2268, %v2269
      %v2271 = vsel %vm1529, %v2217, 0.0
      %v2272 = vadd.f32 %v2270, %v2271
      %v2273 = vsel %vm1529, %v2218, 0.0
      %v2274 = vadd.f32 %v2272, %v2273
      %v2275 = vsel %vm1529, %v2219, 0.0
      %v2276 = vadd.f32 %v2274, %v2275
      %v2277 = vsel %vm1529, %v2220, 0.0
      %v2278 = vadd.f32 %v2276, %v2277
      %v2279 = vsel %vm1529, %v2221, 0.0
      %v2280 = vadd.f32 %v2278, %v2279
      %v2281 = vsel %vm1529, %v2222, 0.0
      %v2282 = vadd.f32 %v2280, %v2281
      %v2283 = vsel %vm1529, %v2223, 0.0
      %v2284 = vadd.f32 %v2282, %v2283
      %v2285 = vsel %vm1529, %v2224, 0.0
      %v2286 = vadd.f32 %v2284, %v2285
      %v2287 = vsel %vm1529, %v2225, 0.0
      %v2288 = vadd.f32 %v2286, %v2287
      %v2289 = vrot.slane %v2288, 4
      %v2290 = vadd.f32 %v2288, %v2289
      %v2291 = vrot.slane %v2290, 2
      %v2292 = vadd.f32 %v2290, %v2291
      %v2293 = vrot.slane %v2292, 1
      %v2294 = vadd.f32 %v2292, %v2293
      %2295 = vst.msk [vmem:[%s181 + $0x1] sm:$0x1] %vm2192, %v2294
      %p2296 = scmp.lt.s32.totalorder %s15, 1
      %s2297 = scalar_select %p2296, %s15, 1
      %s2298 = smul.addr %s2297, 32
      %s2299 = smul.addr %s2298, 8
      %s2300 = scalar_lea.vmem %s2, %s2299
      %p2301 = scmp.lt.s32.totalorder %s15, 1
      %s2302 = scalar_select %p2301, %s15, 1
      %s2303 = smul.addr %s2302, 2
      %s2304 = scalar_lea.vmem %s3, %s2303
      // Predicated region
      $region29: #{convolution_forward.3} parent=27 // pred_check
        %p2305 = pneg %p80
      $region30: #{convolution_forward.3} parent=27 // pred_check_branch
        %2307 = sbr.rel (%p2305) target = $region32
      $region31: #{convolution_forward.3} parent=27 // pred_region
        _
      $region32: #{convolution_forward.3} parent=27 // pred_fallthru
        _
      // Predicated region
      $region33: #{convolution_forward.3} parent=27 // pred_check
        %p2308 = pneg %p106
      $region34: #{convolution_forward.3} parent=27 // pred_check_branch
        %2310 = sbr.rel (%p2308) target = $region36
      $region35: #{convolution_forward.3} parent=27 // pred_region
        _
      $region36: #{convolution_forward.3} parent=27 // pred_fallthru
        _
    $region28: #{convolution_forward.3} parent=5 // pred_fallthru
      _
    %p2311 = scmp.le.s32.totalorder 2, %s10
    // Predicated region
    $region37: #{convolution_forward.3} parent=5 // pred_check
      %p2312 = pneg %p2311
    $region38: #{convolution_forward.3} parent=5 // pred_check_branch
      %2314 = sbr.rel (%p2312) target = $region40
    $region39: #{convolution_forward.3} parent=5 // pred_region
      %s2315 = ssub.s32 %s10, 2
      // Predicated region
      $region41: #{convolution_forward.3} parent=39 // pred_check
        %p2316 = pneg %p86
      $region42: #{convolution_forward.3} parent=39 // pred_check_branch
        %2318 = sbr.rel (%p2316) target = $region44
      $region43: #{convolution_forward.3} parent=39 // pred_region
        %p2319 = scmp.lt.s32.totalorder %s16, 1
        %s2320 = scalar_select %p2319, %s16, 1
        %s2321 = smul.addr %s2320, 32
        %s2322 = smul.addr %s2321, 8
        %s2323 = scalar_lea.vmem %s2, %s2322
      $region44: #{convolution_forward.3} parent=39 // pred_fallthru
        _
      // Predicated region
      $region45: #{convolution_forward.3} parent=39 // pred_check
        %p2324 = pneg %p112
      $region46: #{convolution_forward.3} parent=39 // pred_check_branch
        %2326 = sbr.rel (%p2324) target = $region48
      $region47: #{convolution_forward.3} parent=39 // pred_region
        %p2327 = scmp.lt.s32.totalorder %s16, 1
        %s2328 = scalar_select %p2327, %s16, 1
        %s2329 = smul.addr %s2328, 2
        %s2330 = scalar_lea.vmem %s3, %s2329
      $region48: #{convolution_forward.3} parent=39 // pred_fallthru
        _
    $region40: #{convolution_forward.3} parent=5 // pred_fallthru
      _
  $region6: #{convolution_forward.3} parent=0 // loop_footer
    %s14 = sadd.s32 1, %s10
  $region7: #{convolution_forward.3} parent=0 // loop_footer_branch
    %9 = sbr.rel target = $region3
  $region8: #{convolution_forward.3} parent=0 // loop_exit
    _

// kernel: convolution_forward.4
$region0: #{convolution_forward.4}
  #allocation0 [shape = 'u32[]', space=smem, size = 0x4, offset = 0x4, fixed_abs, tag = 'smem constant byte address 0x4 - core index']
  #allocation1 [shape = 'u32[144,128]{1,0:T(1,128)}', space=vmem, size = 0x12000, scoped, tag = 'internal scratch']
  #allocation2 [shape = 'f32[18,18,8]{2,1,0:T(8,128)}', space=vmem, size = 0x36000, scoped, tag = 'scratch operand']
  %s0 = inlined_call_operand.vmem [shape: f32[2,256,8], index: 0, kind: input, shape index: {}]
  %s1 = inlined_call_operand.vmem [shape: f32[1,8], index: 1, kind: input, shape index: {}]
  %s2 = inlined_call_operand.vmem [shape: f32[1,8], index: 2, kind: input, shape index: {}]
  %s3 = inlined_call_operand.vmem [shape: f32[72,8], index: 3, kind: input, shape index: {}]
  %s4 = inlined_call_operand.vmem [shape: f32[2,256,8], index: 4, kind: output, shape index: {0}]
  %s5 = inlined_call_operand.vmem [shape: f32[2,2,8], index: 5, kind: output, shape index: {1}]
  %6 = xla_tuple %s4, %s5
  %s7 = sld [smem:[#allocation0]]
  $region57: #{convolution_forward.4} parent=0
    _
  %s9 = ssub.s32 1, %s7
  %s10 = scalar_select 0, %s9, %s7
  loop: start=0, step=1, limit=4
  $region2: #{convolution_forward.4} parent=0 // loop_pre_header
    _
  $region3: #{convolution_forward.4} parent=0 // loop_header
    %s12 = sphi 0, %s16
    %p13 = scmp.ge.s32.totalorder %s12, 4
    %s22 = sphi 0, %s24
    %s25 = sphi 0, %s22
    %s26 = sphi 0, %s25
    %s42 = sphi 0, %s26
    %s46 = sphi 0, %s46
    %s48 = sphi 0, %s46
    %s49 = sphi 0, %s48
    %s63 = sphi 0, %s49
    %s67 = sphi 0, %s67
    %s69 = sphi 0, %s67
    %s70 = sphi 0, %s69
    %s84 = sphi 0, %s70
    %s88 = sphi 0, %s88
    %s90 = sphi 0, %s88
    %s91 = sphi 0, %s90
    %s105 = sphi 0, %s91
    %s111 = sphi 0, %s113
    %s114 = sphi 0, %s111
    %s115 = sphi 0, %s114
    %s131 = sphi 0, %s115
    %s137 = sphi 0, %s139
    %s140 = sphi 0, %s137
    %s141 = sphi 0, %s140
    %s157 = sphi 0, %s141
  $region4: #{convolution_forward.4} parent=0 // loop_header_branch
    %15 = sbr.rel (%p13) target = $region8
  $region5: #{convolution_forward.4} parent=0 // loop_body
    %s17 = ssub.s32 %s12, 1
    %s18 = ssub.s32 %s12, 2
    %s19 = sadd.s32 %s12, 1
    %s20 = ssub.s32 %s12, %s19
    %p21 = scmp.eq.s32.totalorder %s20, 0
    %s23 = sadd.s32 %s22, 1
    %s24 = scalar_select %p21, %s22, %s23
    %p27 = pneg %p21
    %p28 = scmp.eq.s32.totalorder %s12, 1
    %p29 = por %p27, %p28
    %p30 = scmp.ne.s32.totalorder %s22, %s25
    %p31 = scmp.eq.s32.totalorder %s12, 0
    %p32 = por %p30, %p31
    %p33 = scmp.ne.s32.totalorder %s22, %s25
    %p34 = scmp.eq.s32.totalorder %s17, 1
    %p35 = por %p33, %p34
    %p36 = scmp.ne.s32.totalorder %s25, %s26
    %p37 = scmp.eq.s32.totalorder %s17, 0
    %p38 = por %p36, %p37
    %p39 = scmp.ne.s32.totalorder %s25, %s26
    %p40 = scmp.eq.s32.totalorder %s18, 1
    %p41 = por %p39, %p40
    %p43 = scmp.ne.s32.totalorder %s26, %s42
    %p44 = scmp.eq.s32.totalorder %s18, 0
    %p45 = por %p43, %p44
    %s47 = sadd.s32 %s46, 1
    %p50 = scmp.eq.s32.totalorder %s12, 1
    %p51 = scmp.ne.s32.totalorder %s46, %s48
    %p52 = scmp.eq.s32.totalorder %s12, 0
    %p53 = por %p51, %p52
    %p54 = scmp.ne.s32.totalorder %s46, %s48
    %p55 = scmp.eq.s32.totalorder %s17, 1
    %p56 = por %p54, %p55
    %p57 = scmp.ne.s32.totalorder %s48, %s49
    %p58 = scmp.eq.s32.totalorder %s17, 0
    %p59 = por %p57, %p58
    %p60 = scmp.ne.s32.totalorder %s48, %s49
    %p61 = scmp.eq.s32.totalorder %s18, 1
    %p62 = por %p60, %p61
    %p64 = scmp.ne.s32.totalorder %s49, %s63
    %p65 = scmp.eq.s32.totalorder %s18, 0
    %p66 = por %p64, %p65
    %s68 = sadd.s32 %s67, 1
    %p71 = scmp.eq.s32.totalorder %s12, 1
    %p72 = scmp.ne.s32.totalorder %s67, %s69
    %p73 = scmp.eq.s32.totalorder %s12, 0
    %p74 = por %p72, %p73
    %p75 = scmp.ne.s32.totalorder %s67, %s69
    %p76 = scmp.eq.s32.totalorder %s17, 1
    %p77 = por %p75, %p76
    %p78 = scmp.ne.s32.totalorder %s69, %s70
    %p79 = scmp.eq.s32.totalorder %s17, 0
    %p80 = por %p78, %p79
    %p81 = scmp.ne.s32.totalorder %s69, %s70
    %p82 = scmp.eq.s32.totalorder %s18, 1
    %p83 = por %p81, %p82
    %p85 = scmp.ne.s32.totalorder %s70, %s84
    %p86 = scmp.eq.s32.totalorder %s18, 0
    %p87 = por %p85, %p86
    %s89 = sadd.s32 %s88, 1
    %p92 = scmp.eq.s32.totalorder %s12, 1
    %p93 = scmp.ne.s32.totalorder %s88, %s90
    %p94 = scmp.eq.s32.totalorder %s12, 0
    %p95 = por %p93, %p94
    %p96 = scmp.ne.s32.totalorder %s88, %s90
    %p97 = scmp.eq.s32.totalorder %s17, 1
    %p98 = por %p96, %p97
    %p99 = scmp.ne.s32.totalorder %s90, %s91
    %p100 = scmp.eq.s32.totalorder %s17, 0
    %p101 = por %p99, %p100
    %p102 = scmp.ne.s32.totalorder %s90, %s91
    %p103 = scmp.eq.s32.totalorder %s18, 1
    %p104 = por %p102, %p103
    %p106 = scmp.ne.s32.totalorder %s91, %s105
    %p107 = scmp.eq.s32.totalorder %s18, 0
    %p108 = por %p106, %p107
    %s109 = ssub.s32 %s12, %s19
    %p110 = scmp.eq.s32.totalorder %s109, 0
    %s112 = sadd.s32 %s111, 1
    %s113 = scalar_select %p110, %s111, %s112
    %p116 = pneg %p110
    %p117 = scmp.eq.s32.totalorder %s12, 1
    %p118 = por %p116, %p117
    %p119 = scmp.ne.s32.totalorder %s111, %s114
    %p120 = scmp.eq.s32.totalorder %s12, 0
    %p121 = por %p119, %p120
    %p122 = scmp.ne.s32.totalorder %s111, %s114
    %p123 = scmp.eq.s32.totalorder %s17, 1
    %p124 = por %p122, %p123
    %p125 = scmp.ne.s32.totalorder %s114, %s115
    %p126 = scmp.eq.s32.totalorder %s17, 0
    %p127 = por %p125, %p126
    %p128 = scmp.ne.s32.totalorder %s114, %s115
    %p129 = scmp.eq.s32.totalorder %s18, 1
    %p130 = por %p128, %p129
    %p132 = scmp.ne.s32.totalorder %s115, %s131
    %p133 = scmp.eq.s32.totalorder %s18, 0
    %p134 = por %p132, %p133
    %s135 = ssub.s32 %s12, %s19
    %p136 = scmp.eq.s32.totalorder %s135, 0
    %s138 = sadd.s32 %s137, 1
    %s139 = scalar_select %p136, %s137, %s138
    %p142 = pneg %p136
    %p143 = scmp.eq.s32.totalorder %s12, 1
    %p144 = por %p142, %p143
    %p145 = scmp.ne.s32.totalorder %s137, %s140
    %p146 = scmp.eq.s32.totalorder %s12, 0
    %p147 = por %p145, %p146
    %p148 = scmp.ne.s32.totalorder %s137, %s140
    %p149 = scmp.eq.s32.totalorder %s17, 1
    %p150 = por %p148, %p149
    %p151 = scmp.ne.s32.totalorder %s140, %s141
    %p152 = scmp.eq.s32.totalorder %s17, 0
    %p153 = por %p151, %p152
    %p154 = scmp.ne.s32.totalorder %s140, %s141
    %p155 = scmp.eq.s32.totalorder %s18, 1
    %p156 = por %p154, %p155
    %p158 = scmp.ne.s32.totalorder %s141, %s157
    %p159 = scmp.eq.s32.totalorder %s18, 0
    %p160 = por %p158, %p159
    %p161 = scmp.le.s32.totalorder 1, %s12
    %p162 = scmp.lt.s32.totalorder %s12, 3
    %p163 = pnand %p161, %p162
    %p164 = pneg %p163
    // Predicated region
    $region9: #{convolution_forward.4} parent=5 // pred_check
      _
    $region10: #{convolution_forward.4} parent=5 // pred_check_branch
      %166 = sbr.rel (%p163) target = $region12
    $region11: #{convolution_forward.4} parent=5 // pred_region
      %s167 = ssub.s32 %s12, 1
      // Predicated region
      $region13: #{convolution_forward.4} parent=11 // pred_check
        %p168 = pneg %p59
      $region14: #{convolution_forward.4} parent=11 // pred_check_branch
        %170 = sbr.rel (%p168) target = $region16
      $region15: #{convolution_forward.4} parent=11 // pred_region
        _
      $region16: #{convolution_forward.4} parent=11 // pred_fallthru
        _
      // Predicated region
      $region17: #{convolution_forward.4} parent=11 // pred_check
        %p171 = pneg %p80
      $region18: #{convolution_forward.4} parent=11 // pred_check_branch
        %173 = sbr.rel (%p171) target = $region20
      $region19: #{convolution_forward.4} parent=11 // pred_region
        _
      $region20: #{convolution_forward.4} parent=11 // pred_fallthru
        _
      // Predicated region
      $region21: #{convolution_forward.4} parent=11 // pred_check
        %p174 = pneg %p101
      $region22: #{convolution_forward.4} parent=11 // pred_check_branch
        %176 = sbr.rel (%p174) target = $region24
      $region23: #{convolution_forward.4} parent=11 // pred_region
        _
      $region24: #{convolution_forward.4} parent=11 // pred_fallthru
        _
    $region12: #{convolution_forward.4} parent=5 // pred_fallthru
      _
    %p177 = scmp.lt.s32.totalorder %s12, 2
    // Predicated region
    $region25: #{convolution_forward.4} parent=5 // pred_check
      %p178 = pneg %p177
    $region26: #{convolution_forward.4} parent=5 // pred_check_branch
      %180 = sbr.rel (%p178) target = $region28
    $region27: #{convolution_forward.4} parent=5 // pred_region
      // Predicated region
      $region29: #{convolution_forward.4} parent=27 // pred_check
        %p181 = pneg %p32
      $region30: #{convolution_forward.4} parent=27 // pred_check_branch
        %183 = sbr.rel (%p181) target = $region32
      $region31: #{convolution_forward.4} parent=27 // pred_region
        %p184 = scmp.lt.s32.totalorder %s12, 1
        %s185 = scalar_select %p184, %s12, 1
        %s186 = smul.addr %s185, 32
        %s187 = smul.addr %s186, 8
        %s188 = scalar_lea.vmem %s0, %s187
      $region32: #{convolution_forward.4} parent=27 // pred_fallthru
        _
    $region28: #{convolution_forward.4} parent=5 // pred_fallthru
      _
    %p189 = scmp.le.s32.totalorder 1, %s12
    %p190 = scmp.lt.s32.totalorder %s12, 3
    %p191 = pnand %p189, %p190
    %p192 = pneg %p191
    // Predicated region
    $region33: #{convolution_forward.4} parent=5 // pred_check
      _
    $region34: #{convolution_forward.4} parent=5 // pred_check_branch
      %194 = sbr.rel (%p191) target = $region36
    $region35: #{convolution_forward.4} parent=5 // pred_region
      %s195 = ssub.s32 %s12, 1
      %p196 = scmp.lt.s32.totalorder %s17, 1
      %s197 = scalar_select %p196, %s17, 1
      %s198 = smul.addr %s197, 32
      %s199 = smul.addr %s198, 8
      %s200 = scalar_lea.vmem %s0, %s199
      %p201 = pneg %p38
      %p202 = pneg %p35
      %p203 = pneg %p59
      %p204 = pneg %p56
      %p205 = pneg %p80
      %p206 = pneg %p77
      %p207 = pneg %p101
      %p208 = pneg %p98
      %p209 = pneg %p127
      %p210 = pneg %p124
      %p211 = scmp.lt.s32.totalorder %s17, 1
      %s212 = scalar_select %p211, %s17, 1
      %s213 = smul.addr %s212, 32
      %s214 = smul.addr %s213, 8
      %s215 = scalar_lea.vmem %s4, %s214
      %p216 = pneg %p153
      %p217 = pneg %p150
      %p218 = scmp.lt.s32.totalorder %s17, 1
      %s219 = scalar_select %p218, %s17, 1
      %s220 = smul.addr %s219, 2
      %s221 = scalar_lea.vmem %s5, %s220
      %p222 = scmp.lt.s32.totalorder %s17, 1
      %s223 = scalar_select %p222, %s17, 1
      %s224 = smul.addr %s223, 32
      %s225 = smul.addr %s224, 8
      %s226 = scalar_lea.vmem %s0, %s225
      %p227 = scmp.lt.s32.totalorder %s17, 1
      %s228 = scalar_select %p227, %s17, 1
      %s229 = smul.addr %s228, 32
      %s230 = smul.addr %s229, 8
      %s231 = scalar_lea.vmem %s4, %s230
      %p232 = scmp.lt.s32.totalorder %s17, 1
      %s233 = scalar_select %p232, %s17, 1
      %s234 = smul.addr %s233, 2
      %s235 = scalar_lea.vmem %s5, %s234
      %v236 = vld [vmem:[%s226] sm:$0xff]
      %v237 = vld [vmem:[%s226 + $0x8] sm:$0xff]
      %v238 = vld [vmem:[%s226 + $0x10] sm:$0xff]
      %v239 = vld [vmem:[%s226 + $0x18] sm:$0xff]
      %v240 = vld [vmem:[%s226 + $0x20] sm:$0xff]
      %v241 = vld [vmem:[%s226 + $0x28] sm:$0xff]
      %v242 = vld [vmem:[%s226 + $0x30] sm:$0xff]
      %v243 = vld [vmem:[%s226 + $0x38] sm:$0xff]
      %v244 = vld [vmem:[%s226 + $0x40] sm:$0xff]
      %v245 = vld [vmem:[%s226 + $0x48] sm:$0xff]
      %v246 = vld [vmem:[%s226 + $0x50] sm:$0xff]
      %v247 = vld [vmem:[%s226 + $0x58] sm:$0xff]
      %v248 = vld [vmem:[%s226 + $0x60] sm:$0xff]
      %v249 = vld [vmem:[%s226 + $0x68] sm:$0xff]
      %v250 = vld [vmem:[%s226 + $0x70] sm:$0xff]
      %v251 = vld [vmem:[%s226 + $0x78] sm:$0xff]
      %v252 = vld [vmem:[%s226 + $0x80] sm:$0xff]
      %v253 = vld [vmem:[%s226 + $0x88] sm:$0xff]
      %v254 = vld [vmem:[%s226 + $0x90] sm:$0xff]
      %v255 = vld [vmem:[%s226 + $0x98] sm:$0xff]
      %v256 = vld [vmem:[%s226 + $0xa0] sm:$0xff]
      %v257 = vld [vmem:[%s226 + $0xa8] sm:$0xff]
      %v258 = vld [vmem:[%s226 + $0xb0] sm:$0xff]
      %v259 = vld [vmem:[%s226 + $0xb8] sm:$0xff]
      %v260 = vld [vmem:[%s226 + $0xc0] sm:$0xff]
      %v261 = vld [vmem:[%s226 + $0xc8] sm:$0xff]
      %v262 = vld [vmem:[%s226 + $0xd0] sm:$0xff]
      %v263 = vld [vmem:[%s226 + $0xd8] sm:$0xff]
      %v264 = vld [vmem:[%s226 + $0xe0] sm:$0xff]
      %v265 = vld [vmem:[%s226 + $0xe8] sm:$0xff]
      %v266 = vld [vmem:[%s226 + $0xf0] sm:$0xff]
      %v267 = vld [vmem:[%s226 + $0xf8] sm:$0xff]
      %v268 = vld [vmem:[%s1] sm:$0x1]
      %v270 = vlaneseq
      %v271 = vshrl.u32 %v270, 7
      %v272 = vsub.s32 0, %v271
      %v273 = vrot.slane %v268, %v272
      %v275 = vmul.f32 %v236, %v273
      %v276 = vmul.f32 %v237, %v273
      %v277 = vmul.f32 %v238, %v273
      %v278 = vmul.f32 %v239, %v273
      %v279 = vmul.f32 %v240, %v273
      %v280 = vmul.f32 %v241, %v273
      %v281 = vmul.f32 %v242, %v273
      %v282 = vmul.f32 %v243, %v273
      %v283 = vmul.f32 %v244, %v273
      %v284 = vmul.f32 %v245, %v273
      %v285 = vmul.f32 %v246, %v273
      %v286 = vmul.f32 %v247, %v273
      %v287 = vmul.f32 %v248, %v273
      %v288 = vmul.f32 %v249, %v273
      %v289 = vmul.f32 %v250, %v273
      %v290 = vmul.f32 %v251, %v273
      %v291 = vmul.f32 %v252, %v273
      %v292 = vmul.f32 %v253, %v273
      %v293 = vmul.f32 %v254, %v273
      %v294 = vmul.f32 %v255, %v273
      %v295 = vmul.f32 %v256, %v273
      %v296 = vmul.f32 %v257, %v273
      %v297 = vmul.f32 %v258, %v273
      %v298 = vmul.f32 %v259, %v273
      %v299 = vmul.f32 %v260, %v273
      %v300 = vmul.f32 %v261, %v273
      %v301 = vmul.f32 %v262, %v273
      %v302 = vmul.f32 %v263, %v273
      %v303 = vmul.f32 %v264, %v273
      %v304 = vmul.f32 %v265, %v273
      %v305 = vmul.f32 %v266, %v273
      %v306 = vmul.f32 %v267, %v273
      %v307 = vld [vmem:[%s2] sm:$0x1]
      %v309 = vlaneseq
      %v310 = vshrl.u32 %v309, 7
      %v311 = vsub.s32 0, %v310
      %v312 = vrot.slane %v307, %v311
      %v314 = vadd.f32 %v275, %v312
      %v315 = vadd.f32 %v276, %v312
      %v316 = vadd.f32 %v277, %v312
      %v317 = vadd.f32 %v278, %v312
      %v318 = vadd.f32 %v279, %v312
      %v319 = vadd.f32 %v280, %v312
      %v320 = vadd.f32 %v281, %v312
      %v321 = vadd.f32 %v282, %v312
      %v322 = vadd.f32 %v283, %v312
      %v323 = vadd.f32 %v284, %v312
      %v324 = vadd.f32 %v285, %v312
      %v325 = vadd.f32 %v286, %v312
      %v326 = vadd.f32 %v287, %v312
      %v327 = vadd.f32 %v288, %v312
      %v328 = vadd.f32 %v289, %v312
      %v329 = vadd.f32 %v290, %v312
      %v330 = vadd.f32 %v291, %v312
      %v331 = vadd.f32 %v292, %v312
      %v332 = vadd.f32 %v293, %v312
      %v333 = vadd.f32 %v294, %v312
      %v334 = vadd.f32 %v295, %v312
      %v335 = vadd.f32 %v296, %v312
      %v336 = vadd.f32 %v297, %v312
      %v337 = vadd.f32 %v298, %v312
      %v338 = vadd.f32 %v299, %v312
      %v339 = vadd.f32 %v300, %v312
      %v340 = vadd.f32 %v301, %v312
      %v341 = vadd.f32 %v302, %v312
      %v342 = vadd.f32 %v303, %v312
      %v343 = vadd.f32 %v304, %v312
      %v344 = vadd.f32 %v305, %v312
      %v345 = vadd.f32 %v306, %v312
      %v346 = vmax.f32 %v314, 0.0
      %v347 = vmax.f32 %v315, 0.0
      %v348 = vmax.f32 %v316, 0.0
      %v349 = vmax.f32 %v317, 0.0
      %v350 = vmax.f32 %v318, 0.0
      %v351 = vmax.f32 %v319, 0.0
      %v352 = vmax.f32 %v320, 0.0
      %v353 = vmax.f32 %v321, 0.0
      %v354 = vmax.f32 %v322, 0.0
      %v355 = vmax.f32 %v323, 0.0
      %v356 = vmax.f32 %v324, 0.0
      %v357 = vmax.f32 %v325, 0.0
      %v358 = vmax.f32 %v326, 0.0
      %v359 = vmax.f32 %v327, 0.0
      %v360 = vmax.f32 %v328, 0.0
      %v361 = vmax.f32 %v329, 0.0
      %v362 = vmax.f32 %v330, 0.0
      %v363 = vmax.f32 %v331, 0.0
      %v364 = vmax.f32 %v332, 0.0
      %v365 = vmax.f32 %v333, 0.0
      %v366 = vmax.f32 %v334, 0.0
      %v367 = vmax.f32 %v335, 0.0
      %v368 = vmax.f32 %v336, 0.0
      %v369 = vmax.f32 %v337, 0.0
      %v370 = vmax.f32 %v338, 0.0
      %v371 = vmax.f32 %v339, 0.0
      %v372 = vmax.f32 %v340, 0.0
      %v373 = vmax.f32 %v341, 0.0
      %v374 = vmax.f32 %v342, 0.0
      %v375 = vmax.f32 %v343, 0.0
      %v376 = vmax.f32 %v344, 0.0
      %v377 = vmax.f32 %v345, 0.0
      %vm378 = vcmask 64512
      %379 = vst.msk [vmem:[#allocation2] sm:$0xff] %vm378, 0.0
      %380 = vst.msk [vmem:[#allocation2 + $0x8] sm:$0xff] %vm378, 0.0
      %vm381 = vcmask 58368
      %382 = vst.msk [vmem:[#allocation2 + $0x10] sm:$0x3] %vm381, 0.0
      %s383 = scalar_lea.vmem [#allocation2], 408
      %384 = vst.msk [vmem:[%s383] sm:$0xff] %vm378, 0.0
      %385 = vst.msk [vmem:[%s383 + $0x8] sm:$0xff] %vm378, 0.0
      %386 = vst.msk [vmem:[%s383 + $0x10] sm:$0x3] %vm381, 0.0
      %vm387 = vcmask 57344
      %388 = vst.msk [vmem:[#allocation2] sm:$0x1] %vm387, 0.0
      %389 = vst.msk [vmem:[#allocation2 + $0x18] sm:$0x1] %vm387, 0.0
      %390 = vst.msk [vmem:[#allocation2 + $0x30] sm:$0x1] %vm387, 0.0
      %391 = vst.msk [vmem:[#allocation2 + $0x48] sm:$0x1] %vm387, 0.0
      %392 = vst.msk [vmem:[#allocation2 + $0x60] sm:$0x1] %vm387, 0.0
      %393 = vst.msk [vmem:[#allocation2 + $0x78] sm:$0x1] %vm387, 0.0
      %394 = vst.msk [vmem:[#allocation2 + $0x90] sm:$0x1] %vm387, 0.0
      %395 = vst.msk [vmem:[#allocation2 + $0xa8] sm:$0x1] %vm387, 0.0
      %396 = vst.msk [vmem:[#allocation2 + $0xc0] sm:$0x1] %vm387, 0.0
      %397 = vst.msk [vmem:[#allocation2 + $0xd8] sm:$0x1] %vm387, 0.0
      %398 = vst.msk [vmem:[#allocation2 + $0xf0] sm:$0x1] %vm387, 0.0
      %399 = vst.msk [vmem:[#allocation2 + $0x108] sm:$0x1] %vm387, 0.0
      %400 = vst.msk [vmem:[#allocation2 + $0x120] sm:$0x1] %vm387, 0.0
      %401 = vst.msk [vmem:[#allocation2 + $0x138] sm:$0x1] %vm387, 0.0
      %402 = vst.msk [vmem:[#allocation2 + $0x150] sm:$0x1] %vm387, 0.0
      %403 = vst.msk [vmem:[#allocation2 + $0x168] sm:$0x1] %vm387, 0.0
      %404 = vst.msk [vmem:[#allocation2 + $0x180] sm:$0x1] %vm387, 0.0
      %405 = vst.msk [vmem:[#allocation2 + $0x198] sm:$0x1] %vm387, 0.0
      %406 = vst.msk [vmem:[#allocation2 + $0x11] sm:$0x1] %vm387, 0.0
      %407 = vst.msk [vmem:[#allocation2 + $0x29] sm:$0x1] %vm387, 0.0
      %408 = vst.msk [vmem:[#allocation2 + $0x41] sm:$0x1] %vm387, 0.0
      %409 = vst.msk [vmem:[#allocation2 + $0x59] sm:$0x1] %vm387, 0.0
      %410 = vst.msk [vmem:[#allocation2 + $0x71] sm:$0x1] %vm387, 0.0
      %411 = vst.msk [vmem:[#allocation2 + $0x89] sm:$0x1] %vm387, 0.0
      %412 = vst.msk [vmem:[#allocation2 + $0xa1] sm:$0x1] %vm387, 0.0
      %413 = vst.msk [vmem:[#allocation2 + $0xb9] sm:$0x1] %vm387, 0.0
      %414 = vst.msk [vmem:[#allocation2 + $0xd1] sm:$0x1] %vm387, 0.0
      %415 = vst.msk [vmem:[#allocation2 + $0xe9] sm:$0x1] %vm387, 0.0
      %416 = vst.msk [vmem:[#allocation2 + $0x101] sm:$0x1] %vm387, 0.0
      %417 = vst.msk [vmem:[#allocation2 + $0x119] sm:$0x1] %vm387, 0.0
      %418 = vst.msk [vmem:[#allocation2 + $0x131] sm:$0x1] %vm387, 0.0
      %419 = vst.msk [vmem:[#allocation2 + $0x149] sm:$0x1] %vm387, 0.0
      %420 = vst.msk [vmem:[#allocation2 + $0x161] sm:$0x1] %vm387, 0.0
      %421 = vst.msk [vmem:[#allocation2 + $0x179] sm:$0x1] %vm387, 0.0
      %422 = vst.msk [vmem:[#allocation2 + $0x191] sm:$0x1] %vm387, 0.0
      %423 = vst.msk [vmem:[#allocation2 + $0x1a9] sm:$0x1] %vm387, 0.0
      %s424 = scalar_lea.vmem [#allocation2], 24
      %425 = vst.msk [vmem:[%s424 + $0x1] sm:$0xff] %vm378, %v346
      %426 = vst.msk [vmem:[%s424 + $0x9] sm:$0xff] %vm378, %v347
      %427 = vst.msk [vmem:[%s424 + $0x19] sm:$0xff] %vm378, %v348
      %428 = vst.msk [vmem:[%s424 + $0x21] sm:$0xff] %vm378, %v349
      %429 = vst.msk [vmem:[%s424 + $0x31] sm:$0xff] %vm378, %v350
      %430 = vst.msk [vmem:[%s424 + $0x39] sm:$0xff] %vm378, %v351
      %431 = vst.msk [vmem:[%s424 + $0x49] sm:$0xff] %vm378, %v352
      %432 = vst.msk [vmem:[%s424 + $0x51] sm:$0xff] %vm378, %v353
      %433 = vst.msk [vmem:[%s424 + $0x61] sm:$0xff] %vm378, %v354
      %434 = vst.msk [vmem:[%s424 + $0x69] sm:$0xff] %vm378, %v355
      %435 = vst.msk [vmem:[%s424 + $0x79] sm:$0xff] %vm378, %v356
      %436 = vst.msk [vmem:[%s424 + $0x81] sm:$0xff] %vm378, %v357
      %437 = vst.msk [vmem:[%s424 + $0x91] sm:$0xff] %vm378, %v358
      %438 = vst.msk [vmem:[%s424 + $0x99] sm:$0xff] %vm378, %v359
      %439 = vst.msk [vmem:[%s424 + $0xa9] sm:$0xff] %vm378, %v360
      %440 = vst.msk [vmem:[%s424 + $0xb1] sm:$0xff] %vm378, %v361
      %441 = vst.msk [vmem:[%s424 + $0xc1] sm:$0xff] %vm378, %v362
      %442 = vst.msk [vmem:[%s424 + $0xc9] sm:$0xff] %vm378, %v363
      %443 = vst.msk [vmem:[%s424 + $0xd9] sm:$0xff] %vm378, %v364
      %444 = vst.msk [vmem:[%s424 + $0xe1] sm:$0xff] %vm378, %v365
      %445 = vst.msk [vmem:[%s424 + $0xf1] sm:$0xff] %vm378, %v366
      %446 = vst.msk [vmem:[%s424 + $0xf9] sm:$0xff] %vm378, %v367
      %447 = vst.msk [vmem:[%s424 + $0x109] sm:$0xff] %vm378, %v368
      %448 = vst.msk [vmem:[%s424 + $0x111] sm:$0xff] %vm378, %v369
      %449 = vst.msk [vmem:[%s424 + $0x121] sm:$0xff] %vm378, %v370
      %450 = vst.msk [vmem:[%s424 + $0x129] sm:$0xff] %vm378, %v371
      %451 = vst.msk [vmem:[%s424 + $0x139] sm:$0xff] %vm378, %v372
      %452 = vst.msk [vmem:[%s424 + $0x141] sm:$0xff] %vm378, %v373
      %453 = vst.msk [vmem:[%s424 + $0x151] sm:$0xff] %vm378, %v374
      %454 = vst.msk [vmem:[%s424 + $0x159] sm:$0xff] %vm378, %v375
      %455 = vst.msk [vmem:[%s424 + $0x169] sm:$0xff] %vm378, %v376
      %456 = vst.msk [vmem:[%s424 + $0x171] sm:$0xff] %vm378, %v377
      %v457 = vld [vmem:[#allocation2] sm:$0xff]
      %v458 = vld [vmem:[#allocation2 + $0x8] sm:$0xff]
      %v459 = vld [vmem:[#allocation2 + $0x18] sm:$0xff]
      %v460 = vld [vmem:[#allocation2 + $0x20] sm:$0xff]
      %v461 = vld [vmem:[#allocation2 + $0x30] sm:$0xff]
      %v462 = vld [vmem:[#allocation2 + $0x38] sm:$0xff]
      %v463 = vld [vmem:[#allocation2 + $0x48] sm:$0xff]
      %v464 = vld [vmem:[#allocation2 + $0x50] sm:$0xff]
      %v465 = vld [vmem:[#allocation2 + $0x60] sm:$0xff]
      %v466 = vld [vmem:[#allocation2 + $0x68] sm:$0xff]
      %v467 = vld [vmem:[#allocation2 + $0x78] sm:$0xff]
      %v468 = vld [vmem:[#allocation2 + $0x80] sm:$0xff]
      %v469 = vld [vmem:[#allocation2 + $0x90] sm:$0xff]
      %v470 = vld [vmem:[#allocation2 + $0x98] sm:$0xff]
      %v471 = vld [vmem:[#allocation2 + $0xa8] sm:$0xff]
      %v472 = vld [vmem:[#allocation2 + $0xb0] sm:$0xff]
      %v473 = vld [vmem:[#allocation2 + $0xc0] sm:$0xff]
      %v474 = vld [vmem:[#allocation2 + $0xc8] sm:$0xff]
      %v475 = vld [vmem:[#allocation2 + $0xd8] sm:$0xff]
      %v476 = vld [vmem:[#allocation2 + $0xe0] sm:$0xff]
      %v477 = vld [vmem:[#allocation2 + $0xf0] sm:$0xff]
      %v478 = vld [vmem:[#allocation2 + $0xf8] sm:$0xff]
      %v479 = vld [vmem:[#allocation2 + $0x108] sm:$0xff]
      %v480 = vld [vmem:[#allocation2 + $0x110] sm:$0xff]
      %v481 = vld [vmem:[#allocation2 + $0x120] sm:$0xff]
      %v482 = vld [vmem:[#allocation2 + $0x128] sm:$0xff]
      %v483 = vld [vmem:[#allocation2 + $0x138] sm:$0xff]
      %v484 = vld [vmem:[#allocation2 + $0x140] sm:$0xff]
      %v485 = vld [vmem:[#allocation2 + $0x150] sm:$0xff]
      %v486 = vld [vmem:[#allocation2 + $0x158] sm:$0xff]
      %v487 = vld [vmem:[#allocation2 + $0x168] sm:$0xff]
      %v488 = vld [vmem:[#allocation2 + $0x170] sm:$0xff]
      %v489 = vld [vmem:[#allocation2 + $0x1] sm:$0xff]
      %v490 = vld [vmem:[#allocation2 + $0x9] sm:$0xff]
      %v491 = vld [vmem:[#allocation2 + $0x19] sm:$0xff]
      %v492 = vld [vmem:[#allocation2 + $0x21] sm:$0xff]
      %v493 = vld [vmem:[#allocation2 + $0x31] sm:$0xff]
      %v494 = vld [vmem:[#allocation2 + $0x39] sm:$0xff]
      %v495 = vld [vmem:[#allocation2 + $0x49] sm:$0xff]
      %v496 = vld [vmem:[#allocation2 + $0x51] sm:$0xff]
      %v497 = vld [vmem:[#allocation2 + $0x61] sm:$0xff]
      %v498 = vld [vmem:[#allocation2 + $0x69] sm:$0xff]
      %v499 = vld [vmem:[#allocation2 + $0x79] sm:$0xff]
      %v500 = vld [vmem:[#allocation2 + $0x81] sm:$0xff]
      %v501 = vld [vmem:[#allocation2 + $0x91] sm:$0xff]
      %v502 = vld [vmem:[#allocation2 + $0x99] sm:$0xff]
      %v503 = vld [vmem:[#allocation2 + $0xa9] sm:$0xff]
      %v504 = vld [vmem:[#allocation2 + $0xb1] sm:$0xff]
      %v505 = vld [vmem:[#allocation2 + $0xc1] sm:$0xff]
      %v506 = vld [vmem:[#allocation2 + $0xc9] sm:$0xff]
      %v507 = vld [vmem:[#allocation2 + $0xd9] sm:$0xff]
      %v508 = vld [vmem:[#allocation2 + $0xe1] sm:$0xff]
      %v509 = vld [vmem:[#allocation2 + $0xf1] sm:$0xff]
      %v510 = vld [vmem:[#allocation2 + $0xf9] sm:$0xff]
      %v511 = vld [vmem:[#allocation2 + $0x109] sm:$0xff]
      %v512 = vld [vmem:[#allocation2 + $0x111] sm:$0xff]
      %v513 = vld [vmem:[#allocation2 + $0x121] sm:$0xff]
      %v514 = vld [vmem:[#allocation2 + $0x129] sm:$0xff]
      %v515 = vld [vmem:[#allocation2 + $0x139] sm:$0xff]
      %v516 = vld [vmem:[#allocation2 + $0x141] sm:$0xff]
      %v517 = vld [vmem:[#allocation2 + $0x151] sm:$0xff]
      %v518 = vld [vmem:[#allocation2 + $0x159] sm:$0xff]
      %v519 = vld [vmem:[#allocation2 + $0x169] sm:$0xff]
      %v520 = vld [vmem:[#allocation2 + $0x171] sm:$0xff]
      %v521 = vld [vmem:[#allocation2 + $0x2] sm:$0xff]
      %v522 = vld [vmem:[#allocation2 + $0xa] sm:$0xff]
      %v523 = vld [vmem:[#allocation2 + $0x1a] sm:$0xff]
      %v524 = vld [vmem:[#allocation2 + $0x22] sm:$0xff]
      %v525 = vld [vmem:[#allocation2 + $0x32] sm:$0xff]
      %v526 = vld [vmem:[#allocation2 + $0x3a] sm:$0xff]
      %v527 = vld [vmem:[#allocation2 + $0x4a] sm:$0xff]
      %v528 = vld [vmem:[#allocation2 + $0x52] sm:$0xff]
      %v529 = vld [vmem:[#allocation2 + $0x62] sm:$0xff]
      %v530 = vld [vmem:[#allocation2 + $0x6a] sm:$0xff]
      %v531 = vld [vmem:[#allocation2 + $0x7a] sm:$0xff]
      %v532 = vld [vmem:[#allocation2 + $0x82] sm:$0xff]
      %v533 = vld [vmem:[#allocation2 + $0x92] sm:$0xff]
      %v534 = vld [vmem:[#allocation2 + $0x9a] sm:$0xff]
      %v535 = vld [vmem:[#allocation2 + $0xaa] sm:$0xff]
      %v536 = vld [vmem:[#allocation2 + $0xb2] sm:$0xff]
      %v537 = vld [vmem:[#allocation2 + $0xc2] sm:$0xff]
      %v538 = vld [vmem:[#allocation2 + $0xca] sm:$0xff]
      %v539 = vld [vmem:[#allocation2 + $0xda] sm:$0xff]
      %v540 = vld [vmem:[#allocation2 + $0xe2] sm:$0xff]
      %v541 = vld [vmem:[#allocation2 + $0xf2] sm:$0xff]
      %v542 = vld [vmem:[#allocation2 + $0xfa] sm:$0xff]
      %v543 = vld [vmem:[#allocation2 + $0x10a] sm:$0xff]
      %v544 = vld [vmem:[#allocation2 + $0x112] sm:$0xff]
      %v545 = vld [vmem:[#allocation2 + $0x122] sm:$0xff]
      %v546 = vld [vmem:[#allocation2 + $0x12a] sm:$0xff]
      %v547 = vld [vmem:[#allocation2 + $0x13a] sm:$0xff]
      %v548 = vld [vmem:[#allocation2 + $0x142] sm:$0xff]
      %v549 = vld [vmem:[#allocation2 + $0x152] sm:$0xff]
      %v550 = vld [vmem:[#allocation2 + $0x15a] sm:$0xff]
      %v551 = vld [vmem:[#allocation2 + $0x16a] sm:$0xff]
      %v552 = vld [vmem:[#allocation2 + $0x172] sm:$0xff]
      %v553 = vld [vmem:[%s424] sm:$0xff]
      %v554 = vld [vmem:[%s424 + $0x8] sm:$0xff]
      %v555 = vld [vmem:[%s424 + $0x18] sm:$0xff]
      %v556 = vld [vmem:[%s424 + $0x20] sm:$0xff]
      %v557 = vld [vmem:[%s424 + $0x30] sm:$0xff]
      %v558 = vld [vmem:[%s424 + $0x38] sm:$0xff]
      %v559 = vld [vmem:[%s424 + $0x48] sm:$0xff]
      %v560 = vld [vmem:[%s424 + $0x50] sm:$0xff]
      %v561 = vld [vmem:[%s424 + $0x60] sm:$0xff]
      %v562 = vld [vmem:[%s424 + $0x68] sm:$0xff]
      %v563 = vld [vmem:[%s424 + $0x78] sm:$0xff]
      %v564 = vld [vmem:[%s424 + $0x80] sm:$0xff]
      %v565 = vld [vmem:[%s424 + $0x90] sm:$0xff]
      %v566 = vld [vmem:[%s424 + $0x98] sm:$0xff]
      %v567 = vld [vmem:[%s424 + $0xa8] sm:$0xff]
      %v568 = vld [vmem:[%s424 + $0xb0] sm:$0xff]
      %v569 = vld [vmem:[%s424 + $0xc0] sm:$0xff]
      %v570 = vld [vmem:[%s424 + $0xc8] sm:$0xff]
      %v571 = vld [vmem:[%s424 + $0xd8] sm:$0xff]
      %v572 = vld [vmem:[%s424 + $0xe0] sm:$0xff]
      %v573 = vld [vmem:[%s424 + $0xf0] sm:$0xff]
      %v574 = vld [vmem:[%s424 + $0xf8] sm:$0xff]
      %v575 = vld [vmem:[%s424 + $0x108] sm:$0xff]
      %v576 = vld [vmem:[%s424 + $0x110] sm:$0xff]
      %v577 = vld [vmem:[%s424 + $0x120] sm:$0xff]
      %v578 = vld [vmem:[%s424 + $0x128] sm:$0xff]
      %v579 = vld [vmem:[%s424 + $0x138] sm:$0xff]
      %v580 = vld [vmem:[%s424 + $0x140] sm:$0xff]
      %v581 = vld [vmem:[%s424 + $0x150] sm:$0xff]
      %v582 = vld [vmem:[%s424 + $0x158] sm:$0xff]
      %v583 = vld [vmem:[%s424 + $0x168] sm:$0xff]
      %v584 = vld [vmem:[%s424 + $0x170] sm:$0xff]
      %v585 = vld [vmem:[%s424 + $0x1] sm:$0xff]
      %v586 = vld [vmem:[%s424 + $0x9] sm:$0xff]
      %v587 = vld [vmem:[%s424 + $0x19] sm:$0xff]
      %v588 = vld [vmem:[%s424 + $0x21] sm:$0xff]
      %v589 = vld [vmem:[%s424 + $0x31] sm:$0xff]
      %v590 = vld [vmem:[%s424 + $0x39] sm:$0xff]
      %v591 = vld [vmem:[%s424 + $0x49] sm:$0xff]
      %v592 = vld [vmem:[%s424 + $0x51] sm:$0xff]
      %v593 = vld [vmem:[%s424 + $0x61] sm:$0xff]
      %v594 = vld [vmem:[%s424 + $0x69] sm:$0xff]
      %v595 = vld [vmem:[%s424 + $0x79] sm:$0xff]
      %v596 = vld [vmem:[%s424 + $0x81] sm:$0xff]
      %v597 = vld [vmem:[%s424 + $0x91] sm:$0xff]
      %v598 = vld [vmem:[%s424 + $0x99] sm:$0xff]
      %v599 = vld [vmem:[%s424 + $0xa9] sm:$0xff]
      %v600 = vld [vmem:[%s424 + $0xb1] sm:$0xff]
      %v601 = vld [vmem:[%s424 + $0xc1] sm:$0xff]
      %v602 = vld [vmem:[%s424 + $0xc9] sm:$0xff]
      %v603 = vld [vmem:[%s424 + $0xd9] sm:$0xff]
      %v604 = vld [vmem:[%s424 + $0xe1] sm:$0xff]
      %v605 = vld [vmem:[%s424 + $0xf1] sm:$0xff]
      %v606 = vld [vmem:[%s424 + $0xf9] sm:$0xff]
      %v607 = vld [vmem:[%s424 + $0x109] sm:$0xff]
      %v608 = vld [vmem:[%s424 + $0x111] sm:$0xff]
      %v609 = vld [vmem:[%s424 + $0x121] sm:$0xff]
      %v610 = vld [vmem:[%s424 + $0x129] sm:$0xff]
      %v611 = vld [vmem:[%s424 + $0x139] sm:$0xff]
      %v612 = vld [vmem:[%s424 + $0x141] sm:$0xff]
      %v613 = vld [vmem:[%s424 + $0x151] sm:$0xff]
      %v614 = vld [vmem:[%s424 + $0x159] sm:$0xff]
      %v615 = vld [vmem:[%s424 + $0x169] sm:$0xff]
      %v616 = vld [vmem:[%s424 + $0x171] sm:$0xff]
      %v617 = vld [vmem:[%s424 + $0x2] sm:$0xff]
      %v618 = vld [vmem:[%s424 + $0xa] sm:$0xff]
      %v619 = vld [vmem:[%s424 + $0x1a] sm:$0xff]
      %v620 = vld [vmem:[%s424 + $0x22] sm:$0xff]
      %v621 = vld [vmem:[%s424 + $0x32] sm:$0xff]
      %v622 = vld [vmem:[%s424 + $0x3a] sm:$0xff]
      %v623 = vld [vmem:[%s424 + $0x4a] sm:$0xff]
      %v624 = vld [vmem:[%s424 + $0x52] sm:$0xff]
      %v625 = vld [vmem:[%s424 + $0x62] sm:$0xff]
      %v626 = vld [vmem:[%s424 + $0x6a] sm:$0xff]
      %v627 = vld [vmem:[%s424 + $0x7a] sm:$0xff]
      %v628 = vld [vmem:[%s424 + $0x82] sm:$0xff]
      %v629 = vld [vmem:[%s424 + $0x92] sm:$0xff]
      %v630 = vld [vmem:[%s424 + $0x9a] sm:$0xff]
      %v631 = vld [vmem:[%s424 + $0xaa] sm:$0xff]
      %v632 = vld [vmem:[%s424 + $0xb2] sm:$0xff]
      %v633 = vld [vmem:[%s424 + $0xc2] sm:$0xff]
      %v634 = vld [vmem:[%s424 + $0xca] sm:$0xff]
      %v635 = vld [vmem:[%s424 + $0xda] sm:$0xff]
      %v636 = vld [vmem:[%s424 + $0xe2] sm:$0xff]
      %v637 = vld [vmem:[%s424 + $0xf2] sm:$0xff]
      %v638 = vld [vmem:[%s424 + $0xfa] sm:$0xff]
      %v639 = vld [vmem:[%s424 + $0x10a] sm:$0xff]
      %v640 = vld [vmem:[%s424 + $0x112] sm:$0xff]
      %v641 = vld [vmem:[%s424 + $0x122] sm:$0xff]
      %v642 = vld [vmem:[%s424 + $0x12a] sm:$0xff]
      %v643 = vld [vmem:[%s424 + $0x13a] sm:$0xff]
      %v644 = vld [vmem:[%s424 + $0x142] sm:$0xff]
      %v645 = vld [vmem:[%s424 + $0x152] sm:$0xff]
      %v646 = vld [vmem:[%s424 + $0x15a] sm:$0xff]
      %v647 = vld [vmem:[%s424 + $0x16a] sm:$0xff]
      %v648 = vld [vmem:[%s424 + $0x172] sm:$0xff]
      %s649 = scalar_lea.vmem [#allocation2], 48
      %v650 = vld [vmem:[%s649] sm:$0xff]
      %v651 = vld [vmem:[%s649 + $0x8] sm:$0xff]
      %v652 = vld [vmem:[%s649 + $0x18] sm:$0xff]
      %v653 = vld [vmem:[%s649 + $0x20] sm:$0xff]
      %v654 = vld [vmem:[%s649 + $0x30] sm:$0xff]
      %v655 = vld [vmem:[%s649 + $0x38] sm:$0xff]
      %v656 = vld [vmem:[%s649 + $0x48] sm:$0xff]
      %v657 = vld [vmem:[%s649 + $0x50] sm:$0xff]
      %v658 = vld [vmem:[%s649 + $0x60] sm:$0xff]
      %v659 = vld [vmem:[%s649 + $0x68] sm:$0xff]
      %v660 = vld [vmem:[%s649 + $0x78] sm:$0xff]
      %v661 = vld [vmem:[%s649 + $0x80] sm:$0xff]
      %v662 = vld [vmem:[%s649 + $0x90] sm:$0xff]
      %v663 = vld [vmem:[%s649 + $0x98] sm:$0xff]
      %v664 = vld [vmem:[%s649 + $0xa8] sm:$0xff]
      %v665 = vld [vmem:[%s649 + $0xb0] sm:$0xff]
      %v666 = vld [vmem:[%s649 + $0xc0] sm:$0xff]
      %v667 = vld [vmem:[%s649 + $0xc8] sm:$0xff]
      %v668 = vld [vmem:[%s649 + $0xd8] sm:$0xff]
      %v669 = vld [vmem:[%s649 + $0xe0] sm:$0xff]
      %v670 = vld [vmem:[%s649 + $0xf0] sm:$0xff]
      %v671 = vld [vmem:[%s649 + $0xf8] sm:$0xff]
      %v672 = vld [vmem:[%s649 + $0x108] sm:$0xff]
      %v673 = vld [vmem:[%s649 + $0x110] sm:$0xff]
      %v674 = vld [vmem:[%s649 + $0x120] sm:$0xff]
      %v675 = vld [vmem:[%s649 + $0x128] sm:$0xff]
      %v676 = vld [vmem:[%s649 + $0x138] sm:$0xff]
      %v677 = vld [vmem:[%s649 + $0x140] sm:$0xff]
      %v678 = vld [vmem:[%s649 + $0x150] sm:$0xff]
      %v679 = vld [vmem:[%s649 + $0x158] sm:$0xff]
      %v680 = vld [vmem:[%s649 + $0x168] sm:$0xff]
      %v681 = vld [vmem:[%s649 + $0x170] sm:$0xff]
      %v682 = vld [vmem:[%s649 + $0x1] sm:$0xff]
      %v683 = vld [vmem:[%s649 + $0x9] sm:$0xff]
      %v684 = vld [vmem:[%s649 + $0x19] sm:$0xff]
      %v685 = vld [vmem:[%s649 + $0x21] sm:$0xff]
      %v686 = vld [vmem:[%s649 + $0x31] sm:$0xff]
      %v687 = vld [vmem:[%s649 + $0x39] sm:$0xff]
      %v688 = vld [vmem:[%s649 + $0x49] sm:$0xff]
      %v689 = vld [vmem:[%s649 + $0x51] sm:$0xff]
      %v690 = vld [vmem:[%s649 + $0x61] sm:$0xff]
      %v691 = vld [vmem:[%s649 + $0x69] sm:$0xff]
      %v692 = vld [vmem:[%s649 + $0x79] sm:$0xff]
      %v693 = vld [vmem:[%s649 + $0x81] sm:$0xff]
      %v694 = vld [vmem:[%s649 + $0x91] sm:$0xff]
      %v695 = vld [vmem:[%s649 + $0x99] sm:$0xff]
      %v696 = vld [vmem:[%s649 + $0xa9] sm:$0xff]
      %v697 = vld [vmem:[%s649 + $0xb1] sm:$0xff]
      %v698 = vld [vmem:[%s649 + $0xc1] sm:$0xff]
      %v699 = vld [vmem:[%s649 + $0xc9] sm:$0xff]
      %v700 = vld [vmem:[%s649 + $0xd9] sm:$0xff]
      %v701 = vld [vmem:[%s649 + $0xe1] sm:$0xff]
      %v702 = vld [vmem:[%s649 + $0xf1] sm:$0xff]
      %v703 = vld [vmem:[%s649 + $0xf9] sm:$0xff]
      %v704 = vld [vmem:[%s649 + $0x109] sm:$0xff]
      %v705 = vld [vmem:[%s649 + $0x111] sm:$0xff]
      %v706 = vld [vmem:[%s649 + $0x121] sm:$0xff]
      %v707 = vld [vmem:[%s649 + $0x129] sm:$0xff]
      %v708 = vld [vmem:[%s649 + $0x139] sm:$0xff]
      %v709 = vld [vmem:[%s649 + $0x141] sm:$0xff]
      %v710 = vld [vmem:[%s649 + $0x151] sm:$0xff]
      %v711 = vld [vmem:[%s649 + $0x159] sm:$0xff]
      %v712 = vld [vmem:[%s649 + $0x169] sm:$0xff]
      %v713 = vld [vmem:[%s649 + $0x171] sm:$0xff]
      %v714 = vld [vmem:[%s649 + $0x2] sm:$0xff]
      %v715 = vld [vmem:[%s649 + $0xa] sm:$0xff]
      %v716 = vld [vmem:[%s649 + $0x1a] sm:$0xff]
      %v717 = vld [vmem:[%s649 + $0x22] sm:$0xff]
      %v718 = vld [vmem:[%s649 + $0x32] sm:$0xff]
      %v719 = vld [vmem:[%s649 + $0x3a] sm:$0xff]
      %v720 = vld [vmem:[%s649 + $0x4a] sm:$0xff]
      %v721 = vld [vmem:[%s649 + $0x52] sm:$0xff]
      %v722 = vld [vmem:[%s649 + $0x62] sm:$0xff]
      %v723 = vld [vmem:[%s649 + $0x6a] sm:$0xff]
      %v724 = vld [vmem:[%s649 + $0x7a] sm:$0xff]
      %v725 = vld [vmem:[%s649 + $0x82] sm:$0xff]
      %v726 = vld [vmem:[%s649 + $0x92] sm:$0xff]
      %v727 = vld [vmem:[%s649 + $0x9a] sm:$0xff]
      %v728 = vld [vmem:[%s649 + $0xaa] sm:$0xff]
      %v729 = vld [vmem:[%s649 + $0xb2] sm:$0xff]
      %v730 = vld [vmem:[%s649 + $0xc2] sm:$0xff]
      %v731 = vld [vmem:[%s649 + $0xca] sm:$0xff]
      %v732 = vld [vmem:[%s649 + $0xda] sm:$0xff]
      %v733 = vld [vmem:[%s649 + $0xe2] sm:$0xff]
      %v734 = vld [vmem:[%s649 + $0xf2] sm:$0xff]
      %v735 = vld [vmem:[%s649 + $0xfa] sm:$0xff]
      %v736 = vld [vmem:[%s649 + $0x10a] sm:$0xff]
      %v737 = vld [vmem:[%s649 + $0x112] sm:$0xff]
      %v738 = vld [vmem:[%s649 + $0x122] sm:$0xff]
      %v739 = vld [vmem:[%s649 + $0x12a] sm:$0xff]
      %v740 = vld [vmem:[%s649 + $0x13a] sm:$0xff]
      %v741 = vld [vmem:[%s649 + $0x142] sm:$0xff]
      %v742 = vld [vmem:[%s649 + $0x152] sm:$0xff]
      %v743 = vld [vmem:[%s649 + $0x15a] sm:$0xff]
      %v744 = vld [vmem:[%s649 + $0x16a] sm:$0xff]
      %v745 = vld [vmem:[%s649 + $0x172] sm:$0xff]
      %778 = vrot.lane.b32.xlu0 %v489, 8
      %v779 = vpop.permute.xlu0 %778
      %780 = vrot.lane.b32.xlu0 %v490, 8
      %v781 = vpop.permute.xlu0 %780
      %782 = vrot.lane.b32.xlu0 %v491, 8
      %v783 = vpop.permute.xlu0 %782
      %784 = vrot.lane.b32.xlu0 %v492, 8
      %v785 = vpop.permute.xlu0 %784
      %786 = vrot.lane.b32.xlu0 %v493, 8
      %v787 = vpop.permute.xlu0 %786
      %788 = vrot.lane.b32.xlu0 %v494, 8
      %v789 = vpop.permute.xlu0 %788
      %790 = vrot.lane.b32.xlu0 %v495, 8
      %v791 = vpop.permute.xlu0 %790
      %792 = vrot.lane.b32.xlu0 %v496, 8
      %v793 = vpop.permute.xlu0 %792
      %794 = vrot.lane.b32.xlu0 %v497, 8
      %v795 = vpop.permute.xlu0 %794
      %796 = vrot.lane.b32.xlu0 %v498, 8
      %v797 = vpop.permute.xlu0 %796
      %798 = vrot.lane.b32.xlu0 %v499, 8
      %v799 = vpop.permute.xlu0 %798
      %800 = vrot.lane.b32.xlu0 %v500, 8
      %v801 = vpop.permute.xlu0 %800
      %802 = vrot.lane.b32.xlu0 %v501, 8
      %v803 = vpop.permute.xlu0 %802
      %804 = vrot.lane.b32.xlu0 %v502, 8
      %v805 = vpop.permute.xlu0 %804
      %806 = vrot.lane.b32.xlu0 %v503, 8
      %v807 = vpop.permute.xlu0 %806
      %808 = vrot.lane.b32.xlu0 %v504, 8
      %v809 = vpop.permute.xlu0 %808
      %810 = vrot.lane.b32.xlu0 %v505, 8
      %v811 = vpop.permute.xlu0 %810
      %812 = vrot.lane.b32.xlu0 %v506, 8
      %v813 = vpop.permute.xlu0 %812
      %814 = vrot.lane.b32.xlu0 %v507, 8
      %v815 = vpop.permute.xlu0 %814
      %816 = vrot.lane.b32.xlu0 %v508, 8
      %v817 = vpop.permute.xlu0 %816
      %818 = vrot.lane.b32.xlu0 %v509, 8
      %v819 = vpop.permute.xlu0 %818
      %820 = vrot.lane.b32.xlu0 %v510, 8
      %v821 = vpop.permute.xlu0 %820
      %822 = vrot.lane.b32.xlu0 %v511, 8
      %v823 = vpop.permute.xlu0 %822
      %824 = vrot.lane.b32.xlu0 %v512, 8
      %v825 = vpop.permute.xlu0 %824
      %826 = vrot.lane.b32.xlu0 %v513, 8
      %v827 = vpop.permute.xlu0 %826
      %828 = vrot.lane.b32.xlu0 %v514, 8
      %v829 = vpop.permute.xlu0 %828
      %830 = vrot.lane.b32.xlu0 %v515, 8
      %v831 = vpop.permute.xlu0 %830
      %832 = vrot.lane.b32.xlu0 %v516, 8
      %v833 = vpop.permute.xlu0 %832
      %834 = vrot.lane.b32.xlu0 %v517, 8
      %v835 = vpop.permute.xlu0 %834
      %836 = vrot.lane.b32.xlu0 %v518, 8
      %v837 = vpop.permute.xlu0 %836
      %838 = vrot.lane.b32.xlu0 %v519, 8
      %v839 = vpop.permute.xlu0 %838
      %840 = vrot.lane.b32.xlu0 %v520, 8
      %v841 = vpop.permute.xlu0 %840
      %906 = vrot.lane.b32.xlu0 %v521, 16
      %v907 = vpop.permute.xlu0 %906
      %908 = vrot.lane.b32.xlu0 %v522, 16
      %v909 = vpop.permute.xlu0 %908
      %910 = vrot.lane.b32.xlu0 %v523, 16
      %v911 = vpop.permute.xlu0 %910
      %912 = vrot.lane.b32.xlu0 %v524, 16
      %v913 = vpop.permute.xlu0 %912
      %914 = vrot.lane.b32.xlu0 %v525, 16
      %v915 = vpop.permute.xlu0 %914
      %916 = vrot.lane.b32.xlu0 %v526, 16
      %v917 = vpop.permute.xlu0 %916
      %918 = vrot.lane.b32.xlu0 %v527, 16
      %v919 = vpop.permute.xlu0 %918
      %920 = vrot.lane.b32.xlu0 %v528, 16
      %v921 = vpop.permute.xlu0 %920
      %922 = vrot.lane.b32.xlu0 %v529, 16
      %v923 = vpop.permute.xlu0 %922
      %924 = vrot.lane.b32.xlu0 %v530, 16
      %v925 = vpop.permute.xlu0 %924
      %926 = vrot.lane.b32.xlu0 %v531, 16
      %v927 = vpop.permute.xlu0 %926
      %928 = vrot.lane.b32.xlu0 %v532, 16
      %v929 = vpop.permute.xlu0 %928
      %930 = vrot.lane.b32.xlu0 %v533, 16
      %v931 = vpop.permute.xlu0 %930
      %932 = vrot.lane.b32.xlu0 %v534, 16
      %v933 = vpop.permute.xlu0 %932
      %934 = vrot.lane.b32.xlu0 %v535, 16
      %v935 = vpop.permute.xlu0 %934
      %936 = vrot.lane.b32.xlu0 %v536, 16
      %v937 = vpop.permute.xlu0 %936
      %938 = vrot.lane.b32.xlu0 %v537, 16
      %v939 = vpop.permute.xlu0 %938
      %940 = vrot.lane.b32.xlu0 %v538, 16
      %v941 = vpop.permute.xlu0 %940
      %942 = vrot.lane.b32.xlu0 %v539, 16
      %v943 = vpop.permute.xlu0 %942
      %944 = vrot.lane.b32.xlu0 %v540, 16
      %v945 = vpop.permute.xlu0 %944
      %946 = vrot.lane.b32.xlu0 %v541, 16
      %v947 = vpop.permute.xlu0 %946
      %948 = vrot.lane.b32.xlu0 %v542, 16
      %v949 = vpop.permute.xlu0 %948
      %950 = vrot.lane.b32.xlu0 %v543, 16
      %v951 = vpop.permute.xlu0 %950
      %952 = vrot.lane.b32.xlu0 %v544, 16
      %v953 = vpop.permute.xlu0 %952
      %954 = vrot.lane.b32.xlu0 %v545, 16
      %v955 = vpop.permute.xlu0 %954
      %956 = vrot.lane.b32.xlu0 %v546, 16
      %v957 = vpop.permute.xlu0 %956
      %958 = vrot.lane.b32.xlu0 %v547, 16
      %v959 = vpop.permute.xlu0 %958
      %960 = vrot.lane.b32.xlu0 %v548, 16
      %v961 = vpop.permute.xlu0 %960
      %962 = vrot.lane.b32.xlu0 %v549, 16
      %v963 = vpop.permute.xlu0 %962
      %964 = vrot.lane.b32.xlu0 %v550, 16
      %v965 = vpop.permute.xlu0 %964
      %966 = vrot.lane.b32.xlu0 %v551, 16
      %v967 = vpop.permute.xlu0 %966
      %968 = vrot.lane.b32.xlu0 %v552, 16
      %v969 = vpop.permute.xlu0 %968
      %1034 = vrot.lane.b32.xlu0 %v553, 24
      %v1035 = vpop.permute.xlu0 %1034
      %1036 = vrot.lane.b32.xlu0 %v554, 24
      %v1037 = vpop.permute.xlu0 %1036
      %1038 = vrot.lane.b32.xlu0 %v555, 24
      %v1039 = vpop.permute.xlu0 %1038
      %1040 = vrot.lane.b32.xlu0 %v556, 24
      %v1041 = vpop.permute.xlu0 %1040
      %1042 = vrot.lane.b32.xlu0 %v557, 24
      %v1043 = vpop.permute.xlu0 %1042
      %1044 = vrot.lane.b32.xlu0 %v558, 24
      %v1045 = vpop.permute.xlu0 %1044
      %1046 = vrot.lane.b32.xlu0 %v559, 24
      %v1047 = vpop.permute.xlu0 %1046
      %1048 = vrot.lane.b32.xlu0 %v560, 24
      %v1049 = vpop.permute.xlu0 %1048
      %1050 = vrot.lane.b32.xlu0 %v561, 24
      %v1051 = vpop.permute.xlu0 %1050
      %1052 = vrot.lane.b32.xlu0 %v562, 24
      %v1053 = vpop.permute.xlu0 %1052
      %1054 = vrot.lane.b32.xlu0 %v563, 24
      %v1055 = vpop.permute.xlu0 %1054
      %1056 = vrot.lane.b32.xlu0 %v564, 24
      %v1057 = vpop.permute.xlu0 %1056
      %1058 = vrot.lane.b32.xlu0 %v565, 24
      %v1059 = vpop.permute.xlu0 %1058
      %1060 = vrot.lane.b32.xlu0 %v566, 24
      %v1061 = vpop.permute.xlu0 %1060
      %1062 = vrot.lane.b32.xlu0 %v567, 24
      %v1063 = vpop.permute.xlu0 %1062
      %1064 = vrot.lane.b32.xlu0 %v568, 24
      %v1065 = vpop.permute.xlu0 %1064
      %1066 = vrot.lane.b32.xlu0 %v569, 24
      %v1067 = vpop.permute.xlu0 %1066
      %1068 = vrot.lane.b32.xlu0 %v570, 24
      %v1069 = vpop.permute.xlu0 %1068
      %1070 = vrot.lane.b32.xlu0 %v571, 24
      %v1071 = vpop.permute.xlu0 %1070
      %1072 = vrot.lane.b32.xlu0 %v572, 24
      %v1073 = vpop.permute.xlu0 %1072
      %1074 = vrot.lane.b32.xlu0 %v573, 24
      %v1075 = vpop.permute.xlu0 %1074
      %1076 = vrot.lane.b32.xlu0 %v574, 24
      %v1077 = vpop.permute.xlu0 %1076
      %1078 = vrot.lane.b32.xlu0 %v575, 24
      %v1079 = vpop.permute.xlu0 %1078
      %1080 = vrot.lane.b32.xlu0 %v576, 24
      %v1081 = vpop.permute.xlu0 %1080
      %1082 = vrot.lane.b32.xlu0 %v577, 24
      %v1083 = vpop.permute.xlu0 %1082
      %1084 = vrot.lane.b32.xlu0 %v578, 24
      %v1085 = vpop.permute.xlu0 %1084
      %1086 = vrot.lane.b32.xlu0 %v579, 24
      %v1087 = vpop.permute.xlu0 %1086
      %1088 = vrot.lane.b32.xlu0 %v580, 24
      %v1089 = vpop.permute.xlu0 %1088
      %1090 = vrot.lane.b32.xlu0 %v581, 24
      %v1091 = vpop.permute.xlu0 %1090
      %1092 = vrot.lane.b32.xlu0 %v582, 24
      %v1093 = vpop.permute.xlu0 %1092
      %1094 = vrot.lane.b32.xlu0 %v583, 24
      %v1095 = vpop.permute.xlu0 %1094
      %1096 = vrot.lane.b32.xlu0 %v584, 24
      %v1097 = vpop.permute.xlu0 %1096
      %1162 = vrot.lane.b32.xlu0 %v585, 32
      %v1163 = vpop.permute.xlu0 %1162
      %1164 = vrot.lane.b32.xlu0 %v586, 32
      %v1165 = vpop.permute.xlu0 %1164
      %1166 = vrot.lane.b32.xlu0 %v587, 32
      %v1167 = vpop.permute.xlu0 %1166
      %1168 = vrot.lane.b32.xlu0 %v588, 32
      %v1169 = vpop.permute.xlu0 %1168
      %1170 = vrot.lane.b32.xlu0 %v589, 32
      %v1171 = vpop.permute.xlu0 %1170
      %1172 = vrot.lane.b32.xlu0 %v590, 32
      %v1173 = vpop.permute.xlu0 %1172
      %1174 = vrot.lane.b32.xlu0 %v591, 32
      %v1175 = vpop.permute.xlu0 %1174
      %1176 = vrot.lane.b32.xlu0 %v592, 32
      %v1177 = vpop.permute.xlu0 %1176
      %1178 = vrot.lane.b32.xlu0 %v593, 32
      %v1179 = vpop.permute.xlu0 %1178
      %1180 = vrot.lane.b32.xlu0 %v594, 32
      %v1181 = vpop.permute.xlu0 %1180
      %1182 = vrot.lane.b32.xlu0 %v595, 32
      %v1183 = vpop.permute.xlu0 %1182
      %1184 = vrot.lane.b32.xlu0 %v596, 32
      %v1185 = vpop.permute.xlu0 %1184
      %1186 = vrot.lane.b32.xlu0 %v597, 32
      %v1187 = vpop.permute.xlu0 %1186
      %1188 = vrot.lane.b32.xlu0 %v598, 32
      %v1189 = vpop.permute.xlu0 %1188
      %1190 = vrot.lane.b32.xlu0 %v599, 32
      %v1191 = vpop.permute.xlu0 %1190
      %1192 = vrot.lane.b32.xlu0 %v600, 32
      %v1193 = vpop.permute.xlu0 %1192
      %1194 = vrot.lane.b32.xlu0 %v601, 32
      %v1195 = vpop.permute.xlu0 %1194
      %1196 = vrot.lane.b32.xlu0 %v602, 32
      %v1197 = vpop.permute.xlu0 %1196
      %1198 = vrot.lane.b32.xlu0 %v603, 32
      %v1199 = vpop.permute.xlu0 %1198
      %1200 = vrot.lane.b32.xlu0 %v604, 32
      %v1201 = vpop.permute.xlu0 %1200
      %1202 = vrot.lane.b32.xlu0 %v605, 32
      %v1203 = vpop.permute.xlu0 %1202
      %1204 = vrot.lane.b32.xlu0 %v606, 32
      %v1205 = vpop.permute.xlu0 %1204
      %1206 = vrot.lane.b32.xlu0 %v607, 32
      %v1207 = vpop.permute.xlu0 %1206
      %1208 = vrot.lane.b32.xlu0 %v608, 32
      %v1209 = vpop.permute.xlu0 %1208
      %1210 = vrot.lane.b32.xlu0 %v609, 32
      %v1211 = vpop.permute.xlu0 %1210
      %1212 = vrot.lane.b32.xlu0 %v610, 32
      %v1213 = vpop.permute.xlu0 %1212
      %1214 = vrot.lane.b32.xlu0 %v611, 32
      %v1215 = vpop.permute.xlu0 %1214
      %1216 = vrot.lane.b32.xlu0 %v612, 32
      %v1217 = vpop.permute.xlu0 %1216
      %1218 = vrot.lane.b32.xlu0 %v613, 32
      %v1219 = vpop.permute.xlu0 %1218
      %1220 = vrot.lane.b32.xlu0 %v614, 32
      %v1221 = vpop.permute.xlu0 %1220
      %1222 = vrot.lane.b32.xlu0 %v615, 32
      %v1223 = vpop.permute.xlu0 %1222
      %1224 = vrot.lane.b32.xlu0 %v616, 32
      %v1225 = vpop.permute.xlu0 %1224
      %1290 = vrot.lane.b32.xlu0 %v617, 40
      %v1291 = vpop.permute.xlu0 %1290
      %1292 = vrot.lane.b32.xlu0 %v618, 40
      %v1293 = vpop.permute.xlu0 %1292
      %1294 = vrot.lane.b32.xlu0 %v619, 40
      %v1295 = vpop.permute.xlu0 %1294
      %1296 = vrot.lane.b32.xlu0 %v620, 40
      %v1297 = vpop.permute.xlu0 %1296
      %1298 = vrot.lane.b32.xlu0 %v621, 40
      %v1299 = vpop.permute.xlu0 %1298
      %1300 = vrot.lane.b32.xlu0 %v622, 40
      %v1301 = vpop.permute.xlu0 %1300
      %1302 = vrot.lane.b32.xlu0 %v623, 40
      %v1303 = vpop.permute.xlu0 %1302
      %1304 = vrot.lane.b32.xlu0 %v624, 40
      %v1305 = vpop.permute.xlu0 %1304
      %1306 = vrot.lane.b32.xlu0 %v625, 40
      %v1307 = vpop.permute.xlu0 %1306
      %1308 = vrot.lane.b32.xlu0 %v626, 40
      %v1309 = vpop.permute.xlu0 %1308
      %1310 = vrot.lane.b32.xlu0 %v627, 40
      %v1311 = vpop.permute.xlu0 %1310
      %1312 = vrot.lane.b32.xlu0 %v628, 40
      %v1313 = vpop.permute.xlu0 %1312
      %1314 = vrot.lane.b32.xlu0 %v629, 40
      %v1315 = vpop.permute.xlu0 %1314
      %1316 = vrot.lane.b32.xlu0 %v630, 40
      %v1317 = vpop.permute.xlu0 %1316
      %1318 = vrot.lane.b32.xlu0 %v631, 40
      %v1319 = vpop.permute.xlu0 %1318
      %1320 = vrot.lane.b32.xlu0 %v632, 40
      %v1321 = vpop.permute.xlu0 %1320
      %1322 = vrot.lane.b32.xlu0 %v633, 40
      %v1323 = vpop.permute.xlu0 %1322
      %1324 = vrot.lane.b32.xlu0 %v634, 40
      %v1325 = vpop.permute.xlu0 %1324
      %1326 = vrot.lane.b32.xlu0 %v635, 40
      %v1327 = vpop.permute.xlu0 %1326
      %1328 = vrot.lane.b32.xlu0 %v636, 40
      %v1329 = vpop.permute.xlu0 %1328
      %1330 = vrot.lane.b32.xlu0 %v637, 40
      %v1331 = vpop.permute.xlu0 %1330
      %1332 = vrot.lane.b32.xlu0 %v638, 40
      %v1333 = vpop.permute.xlu0 %1332
      %1334 = vrot.lane.b32.xlu0 %v639, 40
      %v1335 = vpop.permute.xlu0 %1334
      %1336 = vrot.lane.b32.xlu0 %v640, 40
      %v1337 = vpop.permute.xlu0 %1336
      %1338 = vrot.lane.b32.xlu0 %v641, 40
      %v1339 = vpop.permute.xlu0 %1338
      %1340 = vrot.lane.b32.xlu0 %v642, 40
      %v1341 = vpop.permute.xlu0 %1340
      %1342 = vrot.lane.b32.xlu0 %v643, 40
      %v1343 = vpop.permute.xlu0 %1342
      %1344 = vrot.lane.b32.xlu0 %v644, 40
      %v1345 = vpop.permute.xlu0 %1344
      %1346 = vrot.lane.b32.xlu0 %v645, 40
      %v1347 = vpop.permute.xlu0 %1346
      %1348 = vrot.lane.b32.xlu0 %v646, 40
      %v1349 = vpop.permute.xlu0 %1348
      %1350 = vrot.lane.b32.xlu0 %v647, 40
      %v1351 = vpop.permute.xlu0 %1350
      %1352 = vrot.lane.b32.xlu0 %v648, 40
      %v1353 = vpop.permute.xlu0 %1352
      %1418 = vrot.lane.b32.xlu0 %v650, 48
      %v1419 = vpop.permute.xlu0 %1418
      %1420 = vrot.lane.b32.xlu0 %v651, 48
      %v1421 = vpop.permute.xlu0 %1420
      %1422 = vrot.lane.b32.xlu0 %v652, 48
      %v1423 = vpop.permute.xlu0 %1422
      %1424 = vrot.lane.b32.xlu0 %v653, 48
      %v1425 = vpop.permute.xlu0 %1424
      %1426 = vrot.lane.b32.xlu0 %v654, 48
      %v1427 = vpop.permute.xlu0 %1426
      %1428 = vrot.lane.b32.xlu0 %v655, 48
      %v1429 = vpop.permute.xlu0 %1428
      %1430 = vrot.lane.b32.xlu0 %v656, 48
      %v1431 = vpop.permute.xlu0 %1430
      %1432 = vrot.lane.b32.xlu0 %v657, 48
      %v1433 = vpop.permute.xlu0 %1432
      %1434 = vrot.lane.b32.xlu0 %v658, 48
      %v1435 = vpop.permute.xlu0 %1434
      %1436 = vrot.lane.b32.xlu0 %v659, 48
      %v1437 = vpop.permute.xlu0 %1436
      %1438 = vrot.lane.b32.xlu0 %v660, 48
      %v1439 = vpop.permute.xlu0 %1438
      %1440 = vrot.lane.b32.xlu0 %v661, 48
      %v1441 = vpop.permute.xlu0 %1440
      %1442 = vrot.lane.b32.xlu0 %v662, 48
      %v1443 = vpop.permute.xlu0 %1442
      %1444 = vrot.lane.b32.xlu0 %v663, 48
      %v1445 = vpop.permute.xlu0 %1444
      %1446 = vrot.lane.b32.xlu0 %v664, 48
      %v1447 = vpop.permute.xlu0 %1446
      %1448 = vrot.lane.b32.xlu0 %v665, 48
      %v1449 = vpop.permute.xlu0 %1448
      %1450 = vrot.lane.b32.xlu0 %v666, 48
      %v1451 = vpop.permute.xlu0 %1450
      %1452 = vrot.lane.b32.xlu0 %v667, 48
      %v1453 = vpop.permute.xlu0 %1452
      %1454 = vrot.lane.b32.xlu0 %v668, 48
      %v1455 = vpop.permute.xlu0 %1454
      %1456 = vrot.lane.b32.xlu0 %v669, 48
      %v1457 = vpop.permute.xlu0 %1456
      %1458 = vrot.lane.b32.xlu0 %v670, 48
      %v1459 = vpop.permute.xlu0 %1458
      %1460 = vrot.lane.b32.xlu0 %v671, 48
      %v1461 = vpop.permute.xlu0 %1460
      %1462 = vrot.lane.b32.xlu0 %v672, 48
      %v1463 = vpop.permute.xlu0 %1462
      %1464 = vrot.lane.b32.xlu0 %v673, 48
      %v1465 = vpop.permute.xlu0 %1464
      %1466 = vrot.lane.b32.xlu0 %v674, 48
      %v1467 = vpop.permute.xlu0 %1466
      %1468 = vrot.lane.b32.xlu0 %v675, 48
      %v1469 = vpop.permute.xlu0 %1468
      %1470 = vrot.lane.b32.xlu0 %v676, 48
      %v1471 = vpop.permute.xlu0 %1470
      %1472 = vrot.lane.b32.xlu0 %v677, 48
      %v1473 = vpop.permute.xlu0 %1472
      %1474 = vrot.lane.b32.xlu0 %v678, 48
      %v1475 = vpop.permute.xlu0 %1474
      %1476 = vrot.lane.b32.xlu0 %v679, 48
      %v1477 = vpop.permute.xlu0 %1476
      %1478 = vrot.lane.b32.xlu0 %v680, 48
      %v1479 = vpop.permute.xlu0 %1478
      %1480 = vrot.lane.b32.xlu0 %v681, 48
      %v1481 = vpop.permute.xlu0 %1480
      %1546 = vrot.lane.b32.xlu0 %v682, 56
      %v1547 = vpop.permute.xlu0 %1546
      %1548 = vrot.lane.b32.xlu0 %v683, 56
      %v1549 = vpop.permute.xlu0 %1548
      %1550 = vrot.lane.b32.xlu0 %v684, 56
      %v1551 = vpop.permute.xlu0 %1550
      %1552 = vrot.lane.b32.xlu0 %v685, 56
      %v1553 = vpop.permute.xlu0 %1552
      %1554 = vrot.lane.b32.xlu0 %v686, 56
      %v1555 = vpop.permute.xlu0 %1554
      %1556 = vrot.lane.b32.xlu0 %v687, 56
      %v1557 = vpop.permute.xlu0 %1556
      %1558 = vrot.lane.b32.xlu0 %v688, 56
      %v1559 = vpop.permute.xlu0 %1558
      %1560 = vrot.lane.b32.xlu0 %v689, 56
      %v1561 = vpop.permute.xlu0 %1560
      %1562 = vrot.lane.b32.xlu0 %v690, 56
      %v1563 = vpop.permute.xlu0 %1562
      %1564 = vrot.lane.b32.xlu0 %v691, 56
      %v1565 = vpop.permute.xlu0 %1564
      %1566 = vrot.lane.b32.xlu0 %v692, 56
      %v1567 = vpop.permute.xlu0 %1566
      %1568 = vrot.lane.b32.xlu0 %v693, 56
      %v1569 = vpop.permute.xlu0 %1568
      %1570 = vrot.lane.b32.xlu0 %v694, 56
      %v1571 = vpop.permute.xlu0 %1570
      %1572 = vrot.lane.b32.xlu0 %v695, 56
      %v1573 = vpop.permute.xlu0 %1572
      %1574 = vrot.lane.b32.xlu0 %v696, 56
      %v1575 = vpop.permute.xlu0 %1574
      %1576 = vrot.lane.b32.xlu0 %v697, 56
      %v1577 = vpop.permute.xlu0 %1576
      %1578 = vrot.lane.b32.xlu0 %v698, 56
      %v1579 = vpop.permute.xlu0 %1578
      %1580 = vrot.lane.b32.xlu0 %v699, 56
      %v1581 = vpop.permute.xlu0 %1580
      %1582 = vrot.lane.b32.xlu0 %v700, 56
      %v1583 = vpop.permute.xlu0 %1582
      %1584 = vrot.lane.b32.xlu0 %v701, 56
      %v1585 = vpop.permute.xlu0 %1584
      %1586 = vrot.lane.b32.xlu0 %v702, 56
      %v1587 = vpop.permute.xlu0 %1586
      %1588 = vrot.lane.b32.xlu0 %v703, 56
      %v1589 = vpop.permute.xlu0 %1588
      %1590 = vrot.lane.b32.xlu0 %v704, 56
      %v1591 = vpop.permute.xlu0 %1590
      %1592 = vrot.lane.b32.xlu0 %v705, 56
      %v1593 = vpop.permute.xlu0 %1592
      %1594 = vrot.lane.b32.xlu0 %v706, 56
      %v1595 = vpop.permute.xlu0 %1594
      %1596 = vrot.lane.b32.xlu0 %v707, 56
      %v1597 = vpop.permute.xlu0 %1596
      %1598 = vrot.lane.b32.xlu0 %v708, 56
      %v1599 = vpop.permute.xlu0 %1598
      %1600 = vrot.lane.b32.xlu0 %v709, 56
      %v1601 = vpop.permute.xlu0 %1600
      %1602 = vrot.lane.b32.xlu0 %v710, 56
      %v1603 = vpop.permute.xlu0 %1602
      %1604 = vrot.lane.b32.xlu0 %v711, 56
      %v1605 = vpop.permute.xlu0 %1604
      %1606 = vrot.lane.b32.xlu0 %v712, 56
      %v1607 = vpop.permute.xlu0 %1606
      %1608 = vrot.lane.b32.xlu0 %v713, 56
      %v1609 = vpop.permute.xlu0 %1608
      %1674 = vrot.lane.b32.xlu0 %v714, 64
      %v1675 = vpop.permute.xlu0 %1674
      %1676 = vrot.lane.b32.xlu0 %v715, 64
      %v1677 = vpop.permute.xlu0 %1676
      %1678 = vrot.lane.b32.xlu0 %v716, 64
      %v1679 = vpop.permute.xlu0 %1678
      %1680 = vrot.lane.b32.xlu0 %v717, 64
      %v1681 = vpop.permute.xlu0 %1680
      %1682 = vrot.lane.b32.xlu0 %v718, 64
      %v1683 = vpop.permute.xlu0 %1682
      %1684 = vrot.lane.b32.xlu0 %v719, 64
      %v1685 = vpop.permute.xlu0 %1684
      %1686 = vrot.lane.b32.xlu0 %v720, 64
      %v1687 = vpop.permute.xlu0 %1686
      %1688 = vrot.lane.b32.xlu0 %v721, 64
      %v1689 = vpop.permute.xlu0 %1688
      %1690 = vrot.lane.b32.xlu0 %v722, 64
      %v1691 = vpop.permute.xlu0 %1690
      %1692 = vrot.lane.b32.xlu0 %v723, 64
      %v1693 = vpop.permute.xlu0 %1692
      %1694 = vrot.lane.b32.xlu0 %v724, 64
      %v1695 = vpop.permute.xlu0 %1694
      %1696 = vrot.lane.b32.xlu0 %v725, 64
      %v1697 = vpop.permute.xlu0 %1696
      %1698 = vrot.lane.b32.xlu0 %v726, 64
      %v1699 = vpop.permute.xlu0 %1698
      %1700 = vrot.lane.b32.xlu0 %v727, 64
      %v1701 = vpop.permute.xlu0 %1700
      %1702 = vrot.lane.b32.xlu0 %v728, 64
      %v1703 = vpop.permute.xlu0 %1702
      %1704 = vrot.lane.b32.xlu0 %v729, 64
      %v1705 = vpop.permute.xlu0 %1704
      %1706 = vrot.lane.b32.xlu0 %v730, 64
      %v1707 = vpop.permute.xlu0 %1706
      %1708 = vrot.lane.b32.xlu0 %v731, 64
      %v1709 = vpop.permute.xlu0 %1708
      %1710 = vrot.lane.b32.xlu0 %v732, 64
      %v1711 = vpop.permute.xlu0 %1710
      %1712 = vrot.lane.b32.xlu0 %v733, 64
      %v1713 = vpop.permute.xlu0 %1712
      %1714 = vrot.lane.b32.xlu0 %v734, 64
      %v1715 = vpop.permute.xlu0 %1714
      %1716 = vrot.lane.b32.xlu0 %v735, 64
      %v1717 = vpop.permute.xlu0 %1716
      %1718 = vrot.lane.b32.xlu0 %v736, 64
      %v1719 = vpop.permute.xlu0 %1718
      %1720 = vrot.lane.b32.xlu0 %v737, 64
      %v1721 = vpop.permute.xlu0 %1720
      %1722 = vrot.lane.b32.xlu0 %v738, 64
      %v1723 = vpop.permute.xlu0 %1722
      %1724 = vrot.lane.b32.xlu0 %v739, 64
      %v1725 = vpop.permute.xlu0 %1724
      %1726 = vrot.lane.b32.xlu0 %v740, 64
      %v1727 = vpop.permute.xlu0 %1726
      %1728 = vrot.lane.b32.xlu0 %v741, 64
      %v1729 = vpop.permute.xlu0 %1728
      %1730 = vrot.lane.b32.xlu0 %v742, 64
      %v1731 = vpop.permute.xlu0 %1730
      %1732 = vrot.lane.b32.xlu0 %v743, 64
      %v1733 = vpop.permute.xlu0 %1732
      %1734 = vrot.lane.b32.xlu0 %v744, 64
      %v1735 = vpop.permute.xlu0 %1734
      %1736 = vrot.lane.b32.xlu0 %v745, 64
      %v1737 = vpop.permute.xlu0 %1736
      %v1770 = vsel %vm378, %v457, %v779
      %v1771 = vsel %vm378, %v458, %v781
      %v1772 = vsel %vm378, %v459, %v783
      %v1773 = vsel %vm378, %v460, %v785
      %v1774 = vsel %vm378, %v461, %v787
      %v1775 = vsel %vm378, %v462, %v789
      %v1776 = vsel %vm378, %v463, %v791
      %v1777 = vsel %vm378, %v464, %v793
      %v1778 = vsel %vm378, %v465, %v795
      %v1779 = vsel %vm378, %v466, %v797
      %v1780 = vsel %vm378, %v467, %v799
      %v1781 = vsel %vm378, %v468, %v801
      %v1782 = vsel %vm378, %v469, %v803
      %v1783 = vsel %vm378, %v470, %v805
      %v1784 = vsel %vm378, %v471, %v807
      %v1785 = vsel %vm378, %v472, %v809
      %v1786 = vsel %vm378, %v473, %v811
      %v1787 = vsel %vm378, %v474, %v813
      %v1788 = vsel %vm378, %v475, %v815
      %v1789 = vsel %vm378, %v476, %v817
      %v1790 = vsel %vm378, %v477, %v819
      %v1791 = vsel %vm378, %v478, %v821
      %v1792 = vsel %vm378, %v479, %v823
      %v1793 = vsel %vm378, %v480, %v825
      %v1794 = vsel %vm378, %v481, %v827
      %v1795 = vsel %vm378, %v482, %v829
      %v1796 = vsel %vm378, %v483, %v831
      %v1797 = vsel %vm378, %v484, %v833
      %v1798 = vsel %vm378, %v485, %v835
      %v1799 = vsel %vm378, %v486, %v837
      %v1800 = vsel %vm378, %v487, %v839
      %v1801 = vsel %vm378, %v488, %v841
      %vm1802 = vcmask 130048
      %v1803 = vsel %vm1802, %v1770, %v907
      %v1804 = vsel %vm1802, %v1771, %v909
      %v1805 = vsel %vm1802, %v1772, %v911
      %v1806 = vsel %vm1802, %v1773, %v913
      %v1807 = vsel %vm1802, %v1774, %v915
      %v1808 = vsel %vm1802, %v1775, %v917
      %v1809 = vsel %vm1802, %v1776, %v919
      %v1810 = vsel %vm1802, %v1777, %v921
      %v1811 = vsel %vm1802, %v1778, %v923
      %v1812 = vsel %vm1802, %v1779, %v925
      %v1813 = vsel %vm1802, %v1780, %v927
      %v1814 = vsel %vm1802, %v1781, %v929
      %v1815 = vsel %vm1802, %v1782, %v931
      %v1816 = vsel %vm1802, %v1783, %v933
      %v1817 = vsel %vm1802, %v1784, %v935
      %v1818 = vsel %vm1802, %v1785, %v937
      %v1819 = vsel %vm1802, %v1786, %v939
      %v1820 = vsel %vm1802, %v1787, %v941
      %v1821 = vsel %vm1802, %v1788, %v943
      %v1822 = vsel %vm1802, %v1789, %v945
      %v1823 = vsel %vm1802, %v1790, %v947
      %v1824 = vsel %vm1802, %v1791, %v949
      %v1825 = vsel %vm1802, %v1792, %v951
      %v1826 = vsel %vm1802, %v1793, %v953
      %v1827 = vsel %vm1802, %v1794, %v955
      %v1828 = vsel %vm1802, %v1795, %v957
      %v1829 = vsel %vm1802, %v1796, %v959
      %v1830 = vsel %vm1802, %v1797, %v961
      %v1831 = vsel %vm1802, %v1798, %v963
      %v1832 = vsel %vm1802, %v1799, %v965
      %v1833 = vsel %vm1802, %v1800, %v967
      %v1834 = vsel %vm1802, %v1801, %v969
      %vm1835 = vcmask 195584
      %v1836 = vsel %vm1835, %v1803, %v1035
      %v1837 = vsel %vm1835, %v1804, %v1037
      %v1838 = vsel %vm1835, %v1805, %v1039
      %v1839 = vsel %vm1835, %v1806, %v1041
      %v1840 = vsel %vm1835, %v1807, %v1043
      %v1841 = vsel %vm1835, %v1808, %v1045
      %v1842 = vsel %vm1835, %v1809, %v1047
      %v1843 = vsel %vm1835, %v1810, %v1049
      %v1844 = vsel %vm1835, %v1811, %v1051
      %v1845 = vsel %vm1835, %v1812, %v1053
      %v1846 = vsel %vm1835, %v1813, %v1055
      %v1847 = vsel %vm1835, %v1814, %v1057
      %v1848 = vsel %vm1835, %v1815, %v1059
      %v1849 = vsel %vm1835, %v1816, %v1061
      %v1850 = vsel %vm1835, %v1817, %v1063
      %v1851 = vsel %vm1835, %v1818, %v1065
      %v1852 = vsel %vm1835, %v1819, %v1067
      %v1853 = vsel %vm1835, %v1820, %v1069
      %v1854 = vsel %vm1835, %v1821, %v1071
      %v1855 = vsel %vm1835, %v1822, %v1073
      %v1856 = vsel %vm1835, %v1823, %v1075
      %v1857 = vsel %vm1835, %v1824, %v1077
      %v1858 = vsel %vm1835, %v1825, %v1079
      %v1859 = vsel %vm1835, %v1826, %v1081
      %v1860 = vsel %vm1835, %v1827, %v1083
      %v1861 = vsel %vm1835, %v1828, %v1085
      %v1862 = vsel %vm1835, %v1829, %v1087
      %v1863 = vsel %vm1835, %v1830, %v1089
      %v1864 = vsel %vm1835, %v1831, %v1091
      %v1865 = vsel %vm1835, %v1832, %v1093
      %v1866 = vsel %vm1835, %v1833, %v1095
      %v1867 = vsel %vm1835, %v1834, %v1097
      %vm1868 = vcmask 261120
      %v1869 = vsel %vm1868, %v1836, %v1163
      %v1870 = vsel %vm1868, %v1837, %v1165
      %v1871 = vsel %vm1868, %v1838, %v1167
      %v1872 = vsel %vm1868, %v1839, %v1169
      %v1873 = vsel %vm1868, %v1840, %v1171
      %v1874 = vsel %vm1868, %v1841, %v1173
      %v1875 = vsel %vm1868, %v1842, %v1175
      %v1876 = vsel %vm1868, %v1843, %v1177
      %v1877 = vsel %vm1868, %v1844, %v1179
      %v1878 = vsel %vm1868, %v1845, %v1181
      %v1879 = vsel %vm1868, %v1846, %v1183
      %v1880 = vsel %vm1868, %v1847, %v1185
      %v1881 = vsel %vm1868, %v1848, %v1187
      %v1882 = vsel %vm1868, %v1849, %v1189
      %v1883 = vsel %vm1868, %v1850, %v1191
      %v1884 = vsel %vm1868, %v1851, %v1193
      %v1885 = vsel %vm1868, %v1852, %v1195
      %v1886 = vsel %vm1868, %v1853, %v1197
      %v1887 = vsel %vm1868, %v1854, %v1199
      %v1888 = vsel %vm1868, %v1855, %v1201
      %v1889 = vsel %vm1868, %v1856, %v1203
      %v1890 = vsel %vm1868, %v1857, %v1205
      %v1891 = vsel %vm1868, %v1858, %v1207
      %v1892 = vsel %vm1868, %v1859, %v1209
      %v1893 = vsel %vm1868, %v1860, %v1211
      %v1894 = vsel %vm1868, %v1861, %v1213
      %v1895 = vsel %vm1868, %v1862, %v1215
      %v1896 = vsel %vm1868, %v1863, %v1217
      %v1897 = vsel %vm1868, %v1864, %v1219
      %v1898 = vsel %vm1868, %v1865, %v1221
      %v1899 = vsel %vm1868, %v1866, %v1223
      %v1900 = vsel %vm1868, %v1867, %v1225
      %vm1901 = vcmask 326656
      %v1902 = vsel %vm1901, %v1869, %v1291
      %v1903 = vsel %vm1901, %v1870, %v1293
      %v1904 = vsel %vm1901, %v1871, %v1295
      %v1905 = vsel %vm1901, %v1872, %v1297
      %v1906 = vsel %vm1901, %v1873, %v1299
      %v1907 = vsel %vm1901, %v1874, %v1301
      %v1908 = vsel %vm1901, %v1875, %v1303
      %v1909 = vsel %vm1901, %v1876, %v1305
      %v1910 = vsel %vm1901, %v1877, %v1307
      %v1911 = vsel %vm1901, %v1878, %v1309
      %v1912 = vsel %vm1901, %v1879, %v1311
      %v1913 = vsel %vm1901, %v1880, %v1313
      %v1914 = vsel %vm1901, %v1881, %v1315
      %v1915 = vsel %vm1901, %v1882, %v1317
      %v1916 = vsel %vm1901, %v1883, %v1319
      %v1917 = vsel %vm1901, %v1884, %v1321
      %v1918 = vsel %vm1901, %v1885, %v1323
      %v1919 = vsel %vm1901, %v1886, %v1325
      %v1920 = vsel %vm1901, %v1887, %v1327
      %v1921 = vsel %vm1901, %v1888, %v1329
      %v1922 = vsel %vm1901, %v1889, %v1331
      %v1923 = vsel %vm1901, %v1890, %v1333
      %v1924 = vsel %vm1901, %v1891, %v1335
      %v1925 = vsel %vm1901, %v1892, %v1337
      %v1926 = vsel %vm1901, %v1893, %v1339
      %v1927 = vsel %vm1901, %v1894, %v1341
      %v1928 = vsel %vm1901, %v1895, %v1343
      %v1929 = vsel %vm1901, %v1896, %v1345
      %v1930 = vsel %vm1901, %v1897, %v1347
      %v1931 = vsel %vm1901, %v1898, %v1349
      %v1932 = vsel %vm1901, %v1899, %v1351
      %v1933 = vsel %vm1901, %v1900, %v1353
      %vm1934 = vcmask 392192
      %v1935 = vsel %vm1934, %v1902, %v1419
      %v1936 = vsel %vm1934, %v1903, %v1421
      %v1937 = vsel %vm1934, %v1904, %v1423
      %v1938 = vsel %vm1934, %v1905, %v1425
      %v1939 = vsel %vm1934, %v1906, %v1427
      %v1940 = vsel %vm1934, %v1907, %v1429
      %v1941 = vsel %vm1934, %v1908, %v1431
      %v1942 = vsel %vm1934, %v1909, %v1433
      %v1943 = vsel %vm1934, %v1910, %v1435
      %v1944 = vsel %vm1934, %v1911, %v1437
      %v1945 = vsel %vm1934, %v1912, %v1439
      %v1946 = vsel %vm1934, %v1913, %v1441
      %v1947 = vsel %vm1934, %v1914, %v1443
      %v1948 = vsel %vm1934, %v1915, %v1445
      %v1949 = vsel %vm1934, %v1916, %v1447
      %v1950 = vsel %vm1934, %v1917, %v1449
      %v1951 = vsel %vm1934, %v1918, %v1451
      %v1952 = vsel %vm1934, %v1919, %v1453
      %v1953 = vsel %vm1934, %v1920, %v1455
      %v1954 = vsel %vm1934, %v1921, %v1457
      %v1955 = vsel %vm1934, %v1922, %v1459
      %v1956 = vsel %vm1934, %v1923, %v1461
      %v1957 = vsel %vm1934, %v1924, %v1463
      %v1958 = vsel %vm1934, %v1925, %v1465
      %v1959 = vsel %vm1934, %v1926, %v1467
      %v1960 = vsel %vm1934, %v1927, %v1469
      %v1961 = vsel %vm1934, %v1928, %v1471
      %v1962 = vsel %vm1934, %v1929, %v1473
      %v1963 = vsel %vm1934, %v1930, %v1475
      %v1964 = vsel %vm1934, %v1931, %v1477
      %v1965 = vsel %vm1934, %v1932, %v1479
      %v1966 = vsel %vm1934, %v1933, %v1481
      %vm1967 = vcmask 457728
      %v1968 = vsel %vm1967, %v1935, %v1547
      %v1969 = vsel %vm1967, %v1936, %v1549
      %v1970 = vsel %vm1967, %v1937, %v1551
      %v1971 = vsel %vm1967, %v1938, %v1553
      %v1972 = vsel %vm1967, %v1939, %v1555
      %v1973 = vsel %vm1967, %v1940, %v1557
      %v1974 = vsel %vm1967, %v1941, %v1559
      %v1975 = vsel %vm1967, %v1942, %v1561
      %v1976 = vsel %vm1967, %v1943, %v1563
      %v1977 = vsel %vm1967, %v1944, %v1565
      %v1978 = vsel %vm1967, %v1945, %v1567
      %v1979 = vsel %vm1967, %v1946, %v1569
      %v1980 = vsel %vm1967, %v1947, %v1571
      %v1981 = vsel %vm1967, %v1948, %v1573
      %v1982 = vsel %vm1967, %v1949, %v1575
      %v1983 = vsel %vm1967, %v1950, %v1577
      %v1984 = vsel %vm1967, %v1951, %v1579
      %v1985 = vsel %vm1967, %v1952, %v1581
      %v1986 = vsel %vm1967, %v1953, %v1583
      %v1987 = vsel %vm1967, %v1954, %v1585
      %v1988 = vsel %vm1967, %v1955, %v1587
      %v1989 = vsel %vm1967, %v1956, %v1589
      %v1990 = vsel %vm1967, %v1957, %v1591
      %v1991 = vsel %vm1967, %v1958, %v1593
      %v1992 = vsel %vm1967, %v1959, %v1595
      %v1993 = vsel %vm1967, %v1960, %v1597
      %v1994 = vsel %vm1967, %v1961, %v1599
      %v1995 = vsel %vm1967, %v1962, %v1601
      %v1996 = vsel %vm1967, %v1963, %v1603
      %v1997 = vsel %vm1967, %v1964, %v1605
      %v1998 = vsel %vm1967, %v1965, %v1607
      %v1999 = vsel %vm1967, %v1966, %v1609
      %vm2000 = vcmask 523264
      %v2001 = vsel %vm2000, %v1968, %v1675
      %v2002 = vsel %vm2000, %v1969, %v1677
      %v2003 = vsel %vm2000, %v1970, %v1679
      %v2004 = vsel %vm2000, %v1971, %v1681
      %v2005 = vsel %vm2000, %v1972, %v1683
      %v2006 = vsel %vm2000, %v1973, %v1685
      %v2007 = vsel %vm2000, %v1974, %v1687
      %v2008 = vsel %vm2000, %v1975, %v1689
      %v2009 = vsel %vm2000, %v1976, %v1691
      %v2010 = vsel %vm2000, %v1977, %v1693
      %v2011 = vsel %vm2000, %v1978, %v1695
      %v2012 = vsel %vm2000, %v1979, %v1697
      %v2013 = vsel %vm2000, %v1980, %v1699
      %v2014 = vsel %vm2000, %v1981, %v1701
      %v2015 = vsel %vm2000, %v1982, %v1703
      %v2016 = vsel %vm2000, %v1983, %v1705
      %v2017 = vsel %vm2000, %v1984, %v1707
      %v2018 = vsel %vm2000, %v1985, %v1709
      %v2019 = vsel %vm2000, %v1986, %v1711
      %v2020 = vsel %vm2000, %v1987, %v1713
      %v2021 = vsel %vm2000, %v1988, %v1715
      %v2022 = vsel %vm2000, %v1989, %v1717
      %v2023 = vsel %vm2000, %v1990, %v1719
      %v2024 = vsel %vm2000, %v1991, %v1721
      %v2025 = vsel %vm2000, %v1992, %v1723
      %v2026 = vsel %vm2000, %v1993, %v1725
      %v2027 = vsel %vm2000, %v1994, %v1727
      %v2028 = vsel %vm2000, %v1995, %v1729
      %v2029 = vsel %vm2000, %v1996, %v1731
      %v2030 = vsel %vm2000, %v1997, %v1733
      %v2031 = vsel %vm2000, %v1998, %v1735
      %v2032 = vsel %vm2000, %v1999, %v1737
      %v2033 = vld [vmem:[%s3] sm:$0xff]
      %v2034 = vld [vmem:[%s3 + $0x8] sm:$0xff]
      %v2035 = vld [vmem:[%s3 + $0x10] sm:$0xff]
      %v2036 = vld [vmem:[%s3 + $0x18] sm:$0xff]
      %v2037 = vld [vmem:[%s3 + $0x20] sm:$0xff]
      %v2038 = vld [vmem:[%s3 + $0x28] sm:$0xff]
      %v2039 = vld [vmem:[%s3 + $0x30] sm:$0xff]
      %v2040 = vld [vmem:[%s3 + $0x38] sm:$0xff]
      %v2041 = vld [vmem:[%s3 + $0x40] sm:$0xff]
      %vm2042 = vcmask 588800
      %v2044 = vsel %vm2042, %v2001, 0
      %v2047 = vsel %vm2042, %v2002, 0
      %v2050 = vsel %vm2042, %v2003, 0
      %v2053 = vsel %vm2042, %v2004, 0
      %v2056 = vsel %vm2042, %v2005, 0
      %v2059 = vsel %vm2042, %v2006, 0
      %v2062 = vsel %vm2042, %v2007, 0
      %v2065 = vsel %vm2042, %v2008, 0
      %v2068 = vsel %vm2042, %v2009, 0
      %v2071 = vsel %vm2042, %v2010, 0
      %v2074 = vsel %vm2042, %v2011, 0
      %v2077 = vsel %vm2042, %v2012, 0
      %v2080 = vsel %vm2042, %v2013, 0
      %v2083 = vsel %vm2042, %v2014, 0
      %v2086 = vsel %vm2042, %v2015, 0
      %v2089 = vsel %vm2042, %v2016, 0
      %v2092 = vsel %vm2042, %v2017, 0
      %v2095 = vsel %vm2042, %v2018, 0
      %v2098 = vsel %vm2042, %v2019, 0
      %v2101 = vsel %vm2042, %v2020, 0
      %v2104 = vsel %vm2042, %v2021, 0
      %v2107 = vsel %vm2042, %v2022, 0
      %v2110 = vsel %vm2042, %v2023, 0
      %v2113 = vsel %vm2042, %v2024, 0
      %v2116 = vsel %vm2042, %v2025, 0
      %v2119 = vsel %vm2042, %v2026, 0
      %v2122 = vsel %vm2042, %v2027, 0
      %v2125 = vsel %vm2042, %v2028, 0
      %v2128 = vsel %vm2042, %v2029, 0
      %v2131 = vsel %vm2042, %v2030, 0
      %v2134 = vsel %vm2042, %v2031, 0
      %v2137 = vsel %vm2042, %v2032, 0
      %2139 = vmatprep.subr.mxu0 0.0
      %2140 = vmatpush1.msra.mxu0 0.0
      %2141 = vmatprep.subr.mxu0 0.0
      %2142 = vmatpush1.msra.mxu0 0.0
      %2143 = vmatprep.subr.mxu0 0.0
      %2144 = vmatpush1.msra.mxu0 0.0
      %2145 = vmatprep.subr.mxu0 0.0
      %2146 = vmatpush1.msra.mxu0 0.0
      %2147 = vmatprep.subr.mxu0 0.0
      %2148 = vmatpush1.msra.mxu0 0.0
      %2149 = vmatprep.subr.mxu0 0.0
      %2150 = vmatpush1.msra.mxu0 0.0
      %2151 = vmatprep.subr.mxu0 0.0
      %2152 = vmatpush1.msra.mxu0 0.0
      %2153 = vmatprep.subr.mxu0 0.0
      %2154 = vmatpush1.msra.mxu0 %v2041
      %2155 = vmatprep.subr.mxu0 0.0
      %2156 = vmatpush1.msra.mxu0 %v2040
      %2157 = vmatprep.subr.mxu0 0.0
      %2158 = vmatpush1.msra.mxu0 %v2039
      %2159 = vmatprep.subr.mxu0 0.0
      %2160 = vmatpush1.msra.mxu0 %v2038
      %2161 = vmatprep.subr.mxu0 0.0
      %2162 = vmatpush1.msra.mxu0 %v2037
      %2163 = vmatprep.subr.mxu0 0.0
      %2164 = vmatpush1.msra.mxu0 %v2036
      %2165 = vmatprep.subr.mxu0 0.0
      %2166 = vmatpush1.msra.mxu0 %v2035
      %2167 = vmatprep.subr.mxu0 0.0
      %2168 = vmatpush1.msra.mxu0 %v2034
      %2169 = vmatprep.subr.mxu0 0.0
      %2170 = vmatpush1.msra.mxu0 %v2033
      %2171 = vmatprep.subr.mxu0 0.0
      %2172 = vmatpush2.msra.mxu0 0.0
      %2173 = vmatprep.subr.mxu0 0.0
      %2174 = vmatpush2.msra.mxu0 0.0
      %2175 = vmatprep.subr.mxu0 0.0
      %2176 = vmatpush2.msra.mxu0 0.0
      %2177 = vmatprep.subr.mxu0 0.0
      %2178 = vmatpush2.msra.mxu0 0.0
      %2179 = vmatprep.subr.mxu0 0.0
      %2180 = vmatpush2.msra.mxu0 0.0
      %2181 = vmatprep.subr.mxu0 0.0
      %2182 = vmatpush2.msra.mxu0 0.0
      %2183 = vmatprep.subr.mxu0 0.0
      %2184 = vmatpush2.msra.mxu0 0.0
      %2185 = vmatprep.subr.mxu0 0.0
      %2186 = vmatpush2.msra.mxu0 0.0
      %2187 = vmatprep.subr.mxu0 0.0
      %2188 = vmatpush2.msra.mxu0 0.0
      %2189 = vmatprep.subr.mxu0 0.0
      %2190 = vmatpush2.msra.mxu0 0.0
      %2191 = vmatprep.subr.mxu0 0.0
      %2192 = vmatpush2.msra.mxu0 0.0
      %2193 = vmatprep.subr.mxu0 0.0
      %2194 = vmatpush2.msra.mxu0 0.0
      %2195 = vmatprep.subr.mxu0 0.0
      %2196 = vmatpush2.msra.mxu0 0.0
      %2197 = vmatprep.subr.mxu0 0.0
      %2198 = vmatpush2.msra.mxu0 0.0
      %2199 = vmatprep.subr.mxu0 0.0
      %2200 = vmatpush2.msra.mxu0 0.0
      %2201 = vmatprep.subr.mxu0 0.0
      %2202 = vmatpush2.msra.mxu0 0.0
      %2203 = vmatprep.mubr.f32.mxu0 0.0
      %2204 = vmatmul.mubr.f32.gmra.mxu0 %v2044
      %v2205 = vpop.f32.mrf.mxu0
      %v2206 = vadd.f32 0.0, %v2205
      %v2207 = vpop.f32.mrf.mxu0
      %2208 = vmatprep.mubr.f32.mxu0 0.0
      %2209 = vmatmul.mubr.f32.gmra.mxu0 %v2047
      %v2210 = vpop.f32.mrf.mxu0
      %v2211 = vadd.f32 0.0, %v2210
      %v2212 = vpop.f32.mrf.mxu0
      %2213 = vmatprep.mubr.f32.mxu0 0.0
      %2214 = vmatmul.mubr.f32.gmra.mxu0 %v2050
      %v2215 = vpop.f32.mrf.mxu0
      %v2216 = vadd.f32 0.0, %v2215
      %v2217 = vpop.f32.mrf.mxu0
      %2218 = vmatprep.mubr.f32.mxu0 0.0
      %2219 = vmatmul.mubr.f32.gmra.mxu0 %v2053
      %v2220 = vpop.f32.mrf.mxu0
      %v2221 = vadd.f32 0.0, %v2220
      %v2222 = vpop.f32.mrf.mxu0
      %2223 = vmatprep.mubr.f32.mxu0 0.0
      %2224 = vmatmul.mubr.f32.gmra.mxu0 %v2056
      %v2225 = vpop.f32.mrf.mxu0
      %v2226 = vadd.f32 0.0, %v2225
      %v2227 = vpop.f32.mrf.mxu0
      %2228 = vmatprep.mubr.f32.mxu0 0.0
      %2229 = vmatmul.mubr.f32.gmra.mxu0 %v2059
      %v2230 = vpop.f32.mrf.mxu0
      %v2231 = vadd.f32 0.0, %v2230
      %v2232 = vpop.f32.mrf.mxu0
      %2233 = vmatprep.mubr.f32.mxu0 0.0
      %2234 = vmatmul.mubr.f32.gmra.mxu0 %v2062
      %v2235 = vpop.f32.mrf.mxu0
      %v2236 = vadd.f32 0.0, %v2235
      %v2237 = vpop.f32.mrf.mxu0
      %2238 = vmatprep.mubr.f32.mxu0 0.0
      %2239 = vmatmul.mubr.f32.gmra.mxu0 %v2065
      %v2240 = vpop.f32.mrf.mxu0
      %v2241 = vadd.f32 0.0, %v2240
      %v2242 = vpop.f32.mrf.mxu0
      %2243 = vmatprep.mubr.f32.mxu0 0.0
      %2244 = vmatmul.mubr.f32.gmra.mxu0 %v2068
      %v2245 = vpop.f32.mrf.mxu0
      %v2246 = vadd.f32 0.0, %v2245
      %v2247 = vpop.f32.mrf.mxu0
      %2248 = vmatprep.mubr.f32.mxu0 0.0
      %2249 = vmatmul.mubr.f32.gmra.mxu0 %v2071
      %v2250 = vpop.f32.mrf.mxu0
      %v2251 = vadd.f32 0.0, %v2250
      %v2252 = vpop.f32.mrf.mxu0
      %2253 = vmatprep.mubr.f32.mxu0 0.0
      %2254 = vmatmul.mubr.f32.gmra.mxu0 %v2074
      %v2255 = vpop.f32.mrf.mxu0
      %v2256 = vadd.f32 0.0, %v2255
      %v2257 = vpop.f32.mrf.mxu0
      %2258 = vmatprep.mubr.f32.mxu0 0.0
      %2259 = vmatmul.mubr.f32.gmra.mxu0 %v2077
      %v2260 = vpop.f32.mrf.mxu0
      %v2261 = vadd.f32 0.0, %v2260
      %v2262 = vpop.f32.mrf.mxu0
      %2263 = vmatprep.mubr.f32.mxu0 0.0
      %2264 = vmatmul.mubr.f32.gmra.mxu0 %v2080
      %v2265 = vpop.f32.mrf.mxu0
      %v2266 = vadd.f32 0.0, %v2265
      %v2267 = vpop.f32.mrf.mxu0
      %2268 = vmatprep.mubr.f32.mxu0 0.0
      %2269 = vmatmul.mubr.f32.gmra.mxu0 %v2083
      %v2270 = vpop.f32.mrf.mxu0
      %v2271 = vadd.f32 0.0, %v2270
      %v2272 = vpop.f32.mrf.mxu0
      %2273 = vmatprep.mubr.f32.mxu0 0.0
      %2274 = vmatmul.mubr.f32.gmra.mxu0 %v2086
      %v2275 = vpop.f32.mrf.mxu0
      %v2276 = vadd.f32 0.0, %v2275
      %v2277 = vpop.f32.mrf.mxu0
      %2278 = vmatprep.mubr.f32.mxu0 0.0
      %2279 = vmatmul.mubr.f32.gmra.mxu0 %v2089
      %v2280 = vpop.f32.mrf.mxu0
      %v2281 = vadd.f32 0.0, %v2280
      %v2282 = vpop.f32.mrf.mxu0
      %2283 = vmatprep.mubr.f32.mxu0 0.0
      %2284 = vmatmul.mubr.f32.gmra.mxu0 %v2092
      %v2285 = vpop.f32.mrf.mxu0
      %v2286 = vadd.f32 0.0, %v2285
      %v2287 = vpop.f32.mrf.mxu0
      %2288 = vmatprep.mubr.f32.mxu0 0.0
      %2289 = vmatmul.mubr.f32.gmra.mxu0 %v2095
      %v2290 = vpop.f32.mrf.mxu0
      %v2291 = vadd.f32 0.0, %v2290
      %v2292 = vpop.f32.mrf.mxu0
      %2293 = vmatprep.mubr.f32.mxu0 0.0
      %2294 = vmatmul.mubr.f32.gmra.mxu0 %v2098
      %v2295 = vpop.f32.mrf.mxu0
      %v2296 = vadd.f32 0.0, %v2295
      %v2297 = vpop.f32.mrf.mxu0
      %2298 = vmatprep.mubr.f32.mxu0 0.0
      %2299 = vmatmul.mubr.f32.gmra.mxu0 %v2101
      %v2300 = vpop.f32.mrf.mxu0
      %v2301 = vadd.f32 0.0, %v2300
      %v2302 = vpop.f32.mrf.mxu0
      %2303 = vmatprep.mubr.f32.mxu0 0.0
      %2304 = vmatmul.mubr.f32.gmra.mxu0 %v2104
      %v2305 = vpop.f32.mrf.mxu0
      %v2306 = vadd.f32 0.0, %v2305
      %v2307 = vpop.f32.mrf.mxu0
      %2308 = vmatprep.mubr.f32.mxu0 0.0
      %2309 = vmatmul.mubr.f32.gmra.mxu0 %v2107
      %v2310 = vpop.f32.mrf.mxu0
      %v2311 = vadd.f32 0.0, %v2310
      %v2312 = vpop.f32.mrf.mxu0
      %2313 = vmatprep.mubr.f32.mxu0 0.0
      %2314 = vmatmul.mubr.f32.gmra.mxu0 %v2110
      %v2315 = vpop.f32.mrf.mxu0
      %v2316 = vadd.f32 0.0, %v2315
      %v2317 = vpop.f32.mrf.mxu0
      %2318 = vmatprep.mubr.f32.mxu0 0.0
      %2319 = vmatmul.mubr.f32.gmra.mxu0 %v2113
      %v2320 = vpop.f32.mrf.mxu0
      %v2321 = vadd.f32 0.0, %v2320
      %v2322 = vpop.f32.mrf.mxu0
      %2323 = vmatprep.mubr.f32.mxu0 0.0
      %2324 = vmatmul.mubr.f32.gmra.mxu0 %v2116
      %v2325 = vpop.f32.mrf.mxu0
      %v2326 = vadd.f32 0.0, %v2325
      %v2327 = vpop.f32.mrf.mxu0
      %2328 = vmatprep.mubr.f32.mxu0 0.0
      %2329 = vmatmul.mubr.f32.gmra.mxu0 %v2119
      %v2330 = vpop.f32.mrf.mxu0
      %v2331 = vadd.f32 0.0, %v2330
      %v2332 = vpop.f32.mrf.mxu0
      %2333 = vmatprep.mubr.f32.mxu0 0.0
      %2334 = vmatmul.mubr.f32.gmra.mxu0 %v2122
      %v2335 = vpop.f32.mrf.mxu0
      %v2336 = vadd.f32 0.0, %v2335
      %v2337 = vpop.f32.mrf.mxu0
      %2338 = vmatprep.mubr.f32.mxu0 0.0
      %2339 = vmatmul.mubr.f32.gmra.mxu0 %v2125
      %v2340 = vpop.f32.mrf.mxu0
      %v2341 = vadd.f32 0.0, %v2340
      %v2342 = vpop.f32.mrf.mxu0
      %2343 = vmatprep.mubr.f32.mxu0 0.0
      %2344 = vmatmul.mubr.f32.gmra.mxu0 %v2128
      %v2345 = vpop.f32.mrf.mxu0
      %v2346 = vadd.f32 0.0, %v2345
      %v2347 = vpop.f32.mrf.mxu0
      %2348 = vmatprep.mubr.f32.mxu0 0.0
      %2349 = vmatmul.mubr.f32.gmra.mxu0 %v2131
      %v2350 = vpop.f32.mrf.mxu0
      %v2351 = vadd.f32 0.0, %v2350
      %v2352 = vpop.f32.mrf.mxu0
      %2353 = vmatprep.mubr.f32.mxu0 0.0
      %2354 = vmatmul.mubr.f32.gmra.mxu0 %v2134
      %v2355 = vpop.f32.mrf.mxu0
      %v2356 = vadd.f32 0.0, %v2355
      %v2357 = vpop.f32.mrf.mxu0
      %2358 = vmatprep.mubr.f32.mxu0 0.0
      %2359 = vmatmul.mubr.f32.gmra.mxu0 %v2137
      %v2360 = vpop.f32.mrf.mxu0
      %v2361 = vadd.f32 0.0, %v2360
      %v2362 = vpop.f32.mrf.mxu0
      %2363 = vdwg.mxu0
      %2364 = vst.msk [vmem:[%s231] sm:$0xff] %vm378, %v2206
      %2365 = vst.msk [vmem:[%s231 + $0x8] sm:$0xff] %vm378, %v2211
      %2366 = vst.msk [vmem:[%s231 + $0x10] sm:$0xff] %vm378, %v2216
      %2367 = vst.msk [vmem:[%s231 + $0x18] sm:$0xff] %vm378, %v2221
      %2368 = vst.msk [vmem:[%s231 + $0x20] sm:$0xff] %vm378, %v2226
      %2369 = vst.msk [vmem:[%s231 + $0x28] sm:$0xff] %vm378, %v2231
      %2370 = vst.msk [vmem:[%s231 + $0x30] sm:$0xff] %vm378, %v2236
      %2371 = vst.msk [vmem:[%s231 + $0x38] sm:$0xff] %vm378, %v2241
      %2372 = vst.msk [vmem:[%s231 + $0x40] sm:$0xff] %vm378, %v2246
      %2373 = vst.msk [vmem:[%s231 + $0x48] sm:$0xff] %vm378, %v2251
      %2374 = vst.msk [vmem:[%s231 + $0x50] sm:$0xff] %vm378, %v2256
      %2375 = vst.msk [vmem:[%s231 + $0x58] sm:$0xff] %vm378, %v2261
      %2376 = vst.msk [vmem:[%s231 + $0x60] sm:$0xff] %vm378, %v2266
      %2377 = vst.msk [vmem:[%s231 + $0x68] sm:$0xff] %vm378, %v2271
      %2378 = vst.msk [vmem:[%s231 + $0x70] sm:$0xff] %vm378, %v2276
      %2379 = vst.msk [vmem:[%s231 + $0x78] sm:$0xff] %vm378, %v2281
      %2380 = vst.msk [vmem:[%s231 + $0x80] sm:$0xff] %vm378, %v2286
      %2381 = vst.msk [vmem:[%s231 + $0x88] sm:$0xff] %vm378, %v2291
      %2382 = vst.msk [vmem:[%s231 + $0x90] sm:$0xff] %vm378, %v2296
      %2383 = vst.msk [vmem:[%s231 + $0x98] sm:$0xff] %vm378, %v2301
      %2384 = vst.msk [vmem:[%s231 + $0xa0] sm:$0xff] %vm378, %v2306
      %2385 = vst.msk [vmem:[%s231 + $0xa8] sm:$0xff] %vm378, %v2311
      %2386 = vst.msk [vmem:[%s231 + $0xb0] sm:$0xff] %vm378, %v2316
      %2387 = vst.msk [vmem:[%s231 + $0xb8] sm:$0xff] %vm378, %v2321
      %2388 = vst.msk [vmem:[%s231 + $0xc0] sm:$0xff] %vm378, %v2326
      %2389 = vst.msk [vmem:[%s231 + $0xc8] sm:$0xff] %vm378, %v2331
      %2390 = vst.msk [vmem:[%s231 + $0xd0] sm:$0xff] %vm378, %v2336
      %2391 = vst.msk [vmem:[%s231 + $0xd8] sm:$0xff] %vm378, %v2341
      %2392 = vst.msk [vmem:[%s231 + $0xe0] sm:$0xff] %vm378, %v2346
      %2393 = vst.msk [vmem:[%s231 + $0xe8] sm:$0xff] %vm378, %v2351
      %2394 = vst.msk [vmem:[%s231 + $0xf0] sm:$0xff] %vm378, %v2356
      %2395 = vst.msk [vmem:[%s231 + $0xf8] sm:$0xff] %vm378, %v2361
      %v2396 = vsel %vm378, %v2206, 0.0
      %v2397 = vsel %vm378, %v2211, 0.0
      %v2398 = vadd.f32 %v2396, %v2397
      %v2399 = vsel %vm378, %v2216, 0.0
      %v2400 = vadd.f32 %v2398, %v2399
      %v2401 = vsel %vm378, %v2221, 0.0
      %v2402 = vadd.f32 %v2400, %v2401
      %v2403 = vsel %vm378, %v2226, 0.0
      %v2404 = vadd.f32 %v2402, %v2403
      %v2405 = vsel %vm378, %v2231, 0.0
      %v2406 = vadd.f32 %v2404, %v2405
      %v2407 = vsel %vm378, %v2236, 0.0
      %v2408 = vadd.f32 %v2406, %v2407
      %v2409 = vsel %vm378, %v2241, 0.0
      %v2410 = vadd.f32 %v2408, %v2409
      %v2411 = vsel %vm378, %v2246, 0.0
      %v2412 = vadd.f32 %v2410, %v2411
      %v2413 = vsel %vm378, %v2251, 0.0
      %v2414 = vadd.f32 %v2412, %v2413
      %v2415 = vsel %vm378, %v2256, 0.0
      %v2416 = vadd.f32 %v2414, %v2415
      %v2417 = vsel %vm378, %v2261, 0.0
      %v2418 = vadd.f32 %v2416, %v2417
      %v2419 = vsel %vm378, %v2266, 0.0
      %v2420 = vadd.f32 %v2418, %v2419
      %v2421 = vsel %vm378, %v2271, 0.0
      %v2422 = vadd.f32 %v2420, %v2421
      %v2423 = vsel %vm378, %v2276, 0.0
      %v2424 = vadd.f32 %v2422, %v2423
      %v2425 = vsel %vm378, %v2281, 0.0
      %v2426 = vadd.f32 %v2424, %v2425
      %v2427 = vsel %vm378, %v2286, 0.0
      %v2428 = vadd.f32 %v2426, %v2427
      %v2429 = vsel %vm378, %v2291, 0.0
      %v2430 = vadd.f32 %v2428, %v2429
      %v2431 = vsel %vm378, %v2296, 0.0
      %v2432 = vadd.f32 %v2430, %v2431
      %v2433 = vsel %vm378, %v2301, 0.0
      %v2434 = vadd.f32 %v2432, %v2433
      %v2435 = vsel %vm378, %v2306, 0.0
      %v2436 = vadd.f32 %v2434, %v2435
      %v2437 = vsel %vm378, %v2311, 0.0
      %v2438 = vadd.f32 %v2436, %v2437
      %v2439 = vsel %vm378, %v2316, 0.0
      %v2440 = vadd.f32 %v2438, %v2439
      %v2441 = vsel %vm378, %v2321, 0.0
      %v2442 = vadd.f32 %v2440, %v2441
      %v2443 = vsel %vm378, %v2326, 0.0
      %v2444 = vadd.f32 %v2442, %v2443
      %v2445 = vsel %vm378, %v2331, 0.0
      %v2446 = vadd.f32 %v2444, %v2445
      %v2447 = vsel %vm378, %v2336, 0.0
      %v2448 = vadd.f32 %v2446, %v2447
      %v2449 = vsel %vm378, %v2341, 0.0
      %v2450 = vadd.f32 %v2448, %v2449
      %v2451 = vsel %vm378, %v2346, 0.0
      %v2452 = vadd.f32 %v2450, %v2451
      %v2453 = vsel %vm378, %v2351, 0.0
      %v2454 = vadd.f32 %v2452, %v2453
      %v2455 = vsel %vm378, %v2356, 0.0
      %v2456 = vadd.f32 %v2454, %v2455
      %v2457 = vsel %vm378, %v2361, 0.0
      %v2458 = vadd.f32 %v2456, %v2457
      %v2459 = vrot.slane %v2458, 4
      %v2460 = vadd.f32 %v2458, %v2459
      %v2461 = vrot.slane %v2460, 2
      %v2462 = vadd.f32 %v2460, %v2461
      %v2463 = vrot.slane %v2462, 1
      %v2464 = vadd.f32 %v2462, %v2463
      %2465 = vst.msk [vmem:[%s235] sm:$0x1] %vm387, %v2464
      %v2466 = vmul.f32 %v2206, %v2206
      %v2467 = vmul.f32 %v2211, %v2211
      %v2468 = vmul.f32 %v2216, %v2216
      %v2469 = vmul.f32 %v2221, %v2221
      %v2470 = vmul.f32 %v2226, %v2226
      %v2471 = vmul.f32 %v2231, %v2231
      %v2472 = vmul.f32 %v2236, %v2236
      %v2473 = vmul.f32 %v2241, %v2241
      %v2474 = vmul.f32 %v2246, %v2246
      %v2475 = vmul.f32 %v2251, %v2251
      %v2476 = vmul.f32 %v2256, %v2256
      %v2477 = vmul.f32 %v2261, %v2261
      %v2478 = vmul.f32 %v2266, %v2266
      %v2479 = vmul.f32 %v2271, %v2271
      %v2480 = vmul.f32 %v2276, %v2276
      %v2481 = vmul.f32 %v2281, %v2281
      %v2482 = vmul.f32 %v2286, %v2286
      %v2483 = vmul.f32 %v2291, %v2291
      %v2484 = vmul.f32 %v2296, %v2296
      %v2485 = vmul.f32 %v2301, %v2301
      %v2486 = vmul.f32 %v2306, %v2306
      %v2487 = vmul.f32 %v2311, %v2311
      %v2488 = vmul.f32 %v2316, %v2316
      %v2489 = vmul.f32 %v2321, %v2321
      %v2490 = vmul.f32 %v2326, %v2326
      %v2491 = vmul.f32 %v2331, %v2331
      %v2492 = vmul.f32 %v2336, %v2336
      %v2493 = vmul.f32 %v2341, %v2341
      %v2494 = vmul.f32 %v2346, %v2346
      %v2495 = vmul.f32 %v2351, %v2351
      %v2496 = vmul.f32 %v2356, %v2356
      %v2497 = vmul.f32 %v2361, %v2361
      %v2498 = vsel %vm378, %v2466, 0.0
      %v2499 = vsel %vm378, %v2467, 0.0
      %v2500 = vadd.f32 %v2498, %v2499
      %v2501 = vsel %vm378, %v2468, 0.0
      %v2502 = vadd.f32 %v2500, %v2501
      %v2503 = vsel %vm378, %v2469, 0.0
      %v2504 = vadd.f32 %v2502, %v2503
      %v2505 = vsel %vm378, %v2470, 0.0
      %v2506 = vadd.f32 %v2504, %v2505
      %v2507 = vsel %vm378, %v2471, 0.0
      %v2508 = vadd.f32 %v2506, %v2507
      %v2509 = vsel %vm378, %v2472, 0.0
      %v2510 = vadd.f32 %v2508, %v2509
      %v2511 = vsel %vm378, %v2473, 0.0
      %v2512 = vadd.f32 %v2510, %v2511
      %v2513 = vsel %vm378, %v2474, 0.0
      %v2514 = vadd.f32 %v2512, %v2513
      %v2515 = vsel %vm378, %v2475, 0.0
      %v2516 = vadd.f32 %v2514, %v2515
      %v2517 = vsel %vm378, %v2476, 0.0
      %v2518 = vadd.f32 %v2516, %v2517
      %v2519 = vsel %vm378, %v2477, 0.0
      %v2520 = vadd.f32 %v2518, %v2519
      %v2521 = vsel %vm378, %v2478, 0.0
      %v2522 = vadd.f32 %v2520, %v2521
      %v2523 = vsel %vm378, %v2479, 0.0
      %v2524 = vadd.f32 %v2522, %v2523
      %v2525 = vsel %vm378, %v2480, 0.0
      %v2526 = vadd.f32 %v2524, %v2525
      %v2527 = vsel %vm378, %v2481, 0.0
      %v2528 = vadd.f32 %v2526, %v2527
      %v2529 = vsel %vm378, %v2482, 0.0
      %v2530 = vadd.f32 %v2528, %v2529
      %v2531 = vsel %vm378, %v2483, 0.0
      %v2532 = vadd.f32 %v2530, %v2531
      %v2533 = vsel %vm378, %v2484, 0.0
      %v2534 = vadd.f32 %v2532, %v2533
      %v2535 = vsel %vm378, %v2485, 0.0
      %v2536 = vadd.f32 %v2534, %v2535
      %v2537 = vsel %vm378, %v2486, 0.0
      %v2538 = vadd.f32 %v2536, %v2537
      %v2539 = vsel %vm378, %v2487, 0.0
      %v2540 = vadd.f32 %v2538, %v2539
      %v2541 = vsel %vm378, %v2488, 0.0
      %v2542 = vadd.f32 %v2540, %v2541
      %v2543 = vsel %vm378, %v2489, 0.0
      %v2544 = vadd.f32 %v2542, %v2543
      %v2545 = vsel %vm378, %v2490, 0.0
      %v2546 = vadd.f32 %v2544, %v2545
      %v2547 = vsel %vm378, %v2491, 0.0
      %v2548 = vadd.f32 %v2546, %v2547
      %v2549 = vsel %vm378, %v2492, 0.0
      %v2550 = vadd.f32 %v2548, %v2549
      %v2551 = vsel %vm378, %v2493, 0.0
      %v2552 = vadd.f32 %v2550, %v2551
      %v2553 = vsel %vm378, %v2494, 0.0
      %v2554 = vadd.f32 %v2552, %v2553
      %v2555 = vsel %vm378, %v2495, 0.0
      %v2556 = vadd.f32 %v2554, %v2555
      %v2557 = vsel %vm378, %v2496, 0.0
      %v2558 = vadd.f32 %v2556, %v2557
      %v2559 = vsel %vm378, %v2497, 0.0
      %v2560 = vadd.f32 %v2558, %v2559
      %v2561 = vrot.slane %v2560, 4
      %v2562 = vadd.f32 %v2560, %v2561
      %v2563 = vrot.slane %v2562, 2
      %v2564 = vadd.f32 %v2562, %v2563
      %v2565 = vrot.slane %v2564, 1
      %v2566 = vadd.f32 %v2564, %v2565
      %2567 = vst.msk [vmem:[%s235 + $0x1] sm:$0x1] %vm387, %v2566
      %p2568 = scmp.lt.s32.totalorder %s17, 1
      %s2569 = scalar_select %p2568, %s17, 1
      %s2570 = smul.addr %s2569, 32
      %s2571 = smul.addr %s2570, 8
      %s2572 = scalar_lea.vmem %s4, %s2571
      %p2573 = scmp.lt.s32.totalorder %s17, 1
      %s2574 = scalar_select %p2573, %s17, 1
      %s2575 = smul.addr %s2574, 2
      %s2576 = scalar_lea.vmem %s5, %s2575
      // Predicated region
      $region37: #{convolution_forward.4} parent=35 // pred_check
        %p2577 = pneg %p124
      $region38: #{convolution_forward.4} parent=35 // pred_check_branch
        %2579 = sbr.rel (%p2577) target = $region40
      $region39: #{convolution_forward.4} parent=35 // pred_region
        _
      $region40: #{convolution_forward.4} parent=35 // pred_fallthru
        _
      // Predicated region
      $region41: #{convolution_forward.4} parent=35 // pred_check
        %p2580 = pneg %p150
      $region42: #{convolution_forward.4} parent=35 // pred_check_branch
        %2582 = sbr.rel (%p2580) target = $region44
      $region43: #{convolution_forward.4} parent=35 // pred_region
        _
      $region44: #{convolution_forward.4} parent=35 // pred_fallthru
        _
    $region36: #{convolution_forward.4} parent=5 // pred_fallthru
      _
    %p2583 = scmp.le.s32.totalorder 2, %s12
    // Predicated region
    $region45: #{convolution_forward.4} parent=5 // pred_check
      %p2584 = pneg %p2583
    $region46: #{convolution_forward.4} parent=5 // pred_check_branch
      %2586 = sbr.rel (%p2584) target = $region48
    $region47: #{convolution_forward.4} parent=5 // pred_region
      %s2587 = ssub.s32 %s12, 2
      // Predicated region
      $region49: #{convolution_forward.4} parent=47 // pred_check
        %p2588 = pneg %p130
      $region50: #{convolution_forward.4} parent=47 // pred_check_branch
        %2590 = sbr.rel (%p2588) target = $region52
      $region51: #{convolution_forward.4} parent=47 // pred_region
        %p2591 = scmp.lt.s32.totalorder %s18, 1
        %s2592 = scalar_select %p2591, %s18, 1
        %s2593 = smul.addr %s2592, 32
        %s2594 = smul.addr %s2593, 8
        %s2595 = scalar_lea.vmem %s4, %s2594
      $region52: #{convolution_forward.4} parent=47 // pred_fallthru
        _
      // Predicated region
      $region53: #{convolution_forward.4} parent=47 // pred_check
        %p2596 = pneg %p156
      $region54: #{convolution_forward.4} parent=47 // pred_check_branch
        %2598 = sbr.rel (%p2596) target = $region56
      $region55: #{convolution_forward.4} parent=47 // pred_region
        %p2599 = scmp.lt.s32.totalorder %s18, 1
        %s2600 = scalar_select %p2599, %s18, 1
        %s2601 = smul.addr %s2600, 2
        %s2602 = scalar_lea.vmem %s5, %s2601
      $region56: #{convolution_forward.4} parent=47 // pred_fallthru
        _
    $region48: #{convolution_forward.4} parent=5 // pred_fallthru
      _
  $region6: #{convolution_forward.4} parent=0 // loop_footer
    %s16 = sadd.s32 1, %s12
  $region7: #{convolution_forward.4} parent=0 // loop_footer_branch
    %11 = sbr.rel target = $region3
  $region8: #{convolution_forward.4} parent=0 // loop_exit
    _

</llo_original>
